<compile_context>
chip_gen: v7x
topology: tpu7x:2x2x1
jax: 0.10.0
libtpu: 0.0.40
codegen_flags: <defaults>
</compile_context>

<pallas_src>
import functools

import jax
import jax.numpy as jnp
from jax.experimental import pallas as pl
from jax.experimental.pallas import tpu as pltpu

NUM_CLASSES = 80
PAD_CLASSES = 128          # lane-dense padded class dim; sliced back to 80
D_TEXT = 512
D_HID = 1024
LN_EPS = 1e-5

# Loss-reduction tiling knobs.
LOSS_NCORES = 2                    # leading "parallel" grid axis (2 TCs on v7x)
LOSS_MAX_LANE_ELEMS = 16384        # cap on the collapsed trailing (lane) axis
LOSS_TARGET_BLOCK_ELEMS = 262144   # ~1 MiB of f32 per streamed block


def _round_up(x, m):
    return (x + m - 1) // m * m


# ----------------------------------------------------------------------------
# Kernel 1: text_projector MLP (gridded over the prompt axis)
# ----------------------------------------------------------------------------
def _layernorm(x, gamma, beta):
    # Single-pass LayerNorm: sum(x) and sum(x*x) issue back-to-back, dropping
    # one full elementwise pass vs. the two-pass form.  All math stays f32.
    n = x.shape[-1]
    s1 = jnp.sum(x, axis=-1, keepdims=True)
    s2 = jnp.sum(x * x, axis=-1, keepdims=True)
    mu = s1 * (1.0 / n)
    var = jnp.maximum(s2 * (1.0 / n) - mu * mu, 0.0)
    inv = jax.lax.rsqrt(var + LN_EPS)
    return (x - mu) * inv * gamma + beta


def text_projector_kernel(
    feat_ref,                          # (TN, 512) bf16   sequence-mean features
    w1_ref, b1_ref, g1_ref, be1_ref,   # Linear(512,1024) bf16 W + f32 b/LN(1024)
    w2_ref, b2_ref, g2_ref, be2_ref,   # Linear(1024,512) bf16 W + f32 b/LN(512)
    w3_ref, b3_ref,                    # Linear(512,128-padded) bf16 W + f32 b
    out_ref,                           # (TN, 128) f32
):
    # feat arrives already bf16 (cast in the wrapper -> half the activation
    # DMA bytes; bit-identical to casting in-kernel).  MXU matmuls take bf16
    # inputs with f32 accumulation; all elementwise math stays f32.
    h = jnp.dot(feat_ref[...], w1_ref[...],
                preferred_element_type=jnp.float32) + b1_ref[...]
    h = jnp.maximum(_layernorm(h, g1_ref[...], be1_ref[...]), 0.0)
    # Dropout(p=0.1): identity in eval mode (text_projector.eval()).

    h = jnp.dot(h.astype(jnp.bfloat16), w2_ref[...],
                preferred_element_type=jnp.float32) + b2_ref[...]
    h = jnp.maximum(_layernorm(h, g2_ref[...], be2_ref[...]), 0.0)

    o = jnp.dot(h.astype(jnp.bfloat16), w3_ref[...],
                preferred_element_type=jnp.float32) + b3_ref[...]
    out_ref[...] = o.astype(out_ref.dtype)


def _prompt_tile(n):
    """Prompt-axis tile: 256 on v6e (fills 256x256 MXU rows), else 128
    (v5e 128x128 MXU; v7x wants >=2 grid steps so both TCs get work)."""
    tile = 128
    try:
        kind = jax.devices()[0].device_kind.lower()
    except Exception:  # pragma: no cover - defensive
        kind = ""
    if "v6" in kind and n > 128:
        tile = 256
    return min(tile, _round_up(max(n, 1), 8))


def text_projector(last_hidden_state, kp):
    """last_hidden_state: f32[N, L, 512] -> f32[N, 80]."""
    n = last_hidden_state.shape[0]
    # Sequence mean hoisted out of the kernel (XLU cross-sublane reduce that
    # would otherwise serialize next to an idle MXU); cast to bf16 since the
    # first matmul consumes bf16 anyway.
    feat = jnp.mean(last_hidden_state.astype(jnp.float32), axis=1)
    feat = feat.astype(jnp.bfloat16)                          # (N, 512) bf16

    tn = _prompt_tile(n)
    npad = _round_up(n, tn)
    if npad != n:
        feat = jnp.pad(feat, ((0, npad - n), (0, 0)))

    def const(shape):
        return pl.BlockSpec(shape, lambda i: (0, 0))   # resident across grid

    out = pl.pallas_call(
        text_projector_kernel,
        out_shape=jax.ShapeDtypeStruct((npad, PAD_CLASSES), jnp.float32),
        grid=(npad // tn,),
        in_specs=[
            pl.BlockSpec((tn, D_TEXT), lambda i: (i, 0)),
            const((D_TEXT, D_HID)),
            const((1, D_HID)), const((1, D_HID)), const((1, D_HID)),
            const((D_HID, D_TEXT)),
            const((1, D_TEXT)), const((1, D_TEXT)), const((1, D_TEXT)),
            const((D_TEXT, PAD_CLASSES)),
            const((1, PAD_CLASSES)),
        ],
        out_specs=pl.BlockSpec((tn, PAD_CLASSES), lambda i: (i, 0)),
        compiler_params=pltpu.CompilerParams(
            dimension_semantics=("parallel",)),
    )(
        feat,
        kp["w1"], kp["b1"], kp["g1"], kp["be1"],
        kp["w2"], kp["b2"], kp["g2"], kp["be2"],
        kp["w3"], kp["b3"],
    )
    return out[:n, :NUM_CLASSES]


# ----------------------------------------------------------------------------
# Kernel 2: forward() fallback loss = abs(preds.mean()) + 1e-7  (tiled reduce)
# ----------------------------------------------------------------------------
def _partial_sum_kernel(x_ref, o_ref, acc_ref, *,
                        rows_total, block_rows, blocks_per_core):
    i = pl.program_id(1)

    @pl.when(i == 0)
    def _():
        acc_ref[...] = jnp.zeros_like(acc_ref)

    x = x_ref[...].astype(jnp.float32)                     # (TR, C)
    # Global row index of every element; a single compare+select masks both
    # the ragged final row-block and the clamped duplicate blocks introduced
    # by padding the per-core grid (no wrapper-side jnp.pad / HBM copies).
    blk = pl.program_id(0) * blocks_per_core + i
    row_ids = blk * block_rows + jax.lax.broadcasted_iota(jnp.int32, x.shape, 0)
    x = jnp.where(row_ids < rows_total, x, 0.0)
    acc_ref[...] += jnp.sum(x, axis=0, keepdims=True)      # (1, C) partial

    @pl.when(i == pl.num_programs(1) - 1)
    def _():
        o_ref[0] = jnp.sum(acc_ref[...])                   # per-core scalar


def mean_abs_loss(preds):
    """preds: f32/bf16[...] (any shape) -> f32 scalar = abs(mean(preds)) + 1e-7."""
    total = preds.size
    shape = preds.shape

    # Collapse trailing dims into a wide lane axis (a free reshape of
    # contiguous dims -- no padded copy of preds is ever materialized).
    lanes = 1
    for d in reversed(shape):
        if lanes * d > LOSS_MAX_LANE_ELEMS:
            break
        lanes *= d
    lanes = max(lanes, 1)
    rows = total // lanes                                   # exact: rows*lanes == total
    slab = preds.reshape(rows, lanes)

    # Row chunk targeting ~1 MiB per block (past the HBM-roofline knee),
    # accounting for VMEM lane padding; multiple of 8 or equal to full rows.
    padded_lanes = _round_up(lanes, 128)
    tr_target = max(8, (LOSS_TARGET_BLOCK_ELEMS // padded_lanes) // 8 * 8)
    tr = rows if rows <= tr_target else tr_target
    nblocks = pl.cdiv(rows, tr)
    per_core = pl.cdiv(nblocks, LOSS_NCORES)

    kernel = functools.partial(_partial_sum_kernel, rows_total=rows,
                               block_rows=tr, blocks_per_core=per_core)

    def slab_map(c, i):
        # Clamp so the padded per-core grid never indexes past the last block;
        # the in-kernel row mask zeroes any duplicated (clamped) block.
        return (jnp.minimum(c * per_core + i, nblocks - 1), 0)

    partials = pl.pallas_call(
        kernel,
        out_shape=jax.ShapeDtypeStruct((LOSS_NCORES,), jnp.float32),
        grid=(LOSS_NCORES, per_core),
        in_specs=[pl.BlockSpec((tr, lanes), slab_map)],
        out_specs=pl.BlockSpec((1,), lambda c, i: (c,),
                               memory_space=pltpu.MemorySpace.SMEM),
        scratch_shapes=[pltpu.VMEM((1, lanes), jnp.float32)],
        compiler_params=pltpu.CompilerParams(
            dimension_semantics=("parallel", "arbitrary")),
    )(slab)

    # Combine the two per-core partial sums (2 scalars) in the wrapper.
    return jnp.abs(jnp.sum(partials) * (1.0 / float(total))) + 1e-7


# ----------------------------------------------------------------------------
# Parameter construction (deterministic, synthetic)
# ----------------------------------------------------------------------------
def make_projector_params(key):
    ks = jax.random.split(key, 3)
    scale = 0.02
    return {
        "w1": scale * jax.random.normal(ks[0], (D_TEXT, D_HID), jnp.float32),
        "b1": jnp.zeros((1, D_HID), jnp.float32),
        "g1": jnp.ones((1, D_HID), jnp.float32),
        "be1": jnp.zeros((1, D_HID), jnp.float32),
        "w2": scale * jax.random.normal(ks[1], (D_HID, D_TEXT), jnp.float32),
        "b2": jnp.zeros((1, D_TEXT), jnp.float32),
        "g2": jnp.ones((1, D_TEXT), jnp.float32),
        "be2": jnp.zeros((1, D_TEXT), jnp.float32),
        "w3": scale * jax.random.normal(ks[2], (D_TEXT, NUM_CLASSES), jnp.float32),
        "b3": jnp.zeros((1, NUM_CLASSES), jnp.float32),
    }


def pack_kernel_params(p):
    """bf16 matmul weights (class dim padded to 128); f32 bias/gamma/beta."""
    pad = PAD_CLASSES - NUM_CLASSES
    w3p = jnp.pad(p["w3"], ((0, 0), (0, pad)))
    b3p = jnp.pad(p["b3"], ((0, 0), (0, pad)))
    return {
        "w1": p["w1"].astype(jnp.bfloat16),
        "b1": p["b1"], "g1": p["g1"], "be1": p["be1"],
        "w2": p["w2"].astype(jnp.bfloat16),
        "b2": p["b2"], "g2": p["g2"], "be2": p["be2"],
        "w3": w3p.astype(jnp.bfloat16),
        "b3": b3p,
    }


# ----------------------------------------------------------------------------
# YOLOWorld-equivalent wrapper (synthetic)
# ----------------------------------------------------------------------------
class YOLOWorldPallas:
    def __init__(self, key):
        self.params = make_projector_params(key)        # f32 masters
        self.kparams = pack_kernel_params(self.params)  # bf16 / padded copies
        self.training = False

    # encode_text: CLIP encoder is an external checkpoint; we take its
    # last_hidden_state as input and do the mean + projector via Pallas.
    # TODO(synk): CLIP text encoder + tokenizer have no Pallas equivalent here.
    def encode_text(self, last_hidden_state):
        return text_projector(last_hidden_state, self.kparams)

    # forward: the YOLO backbone is an external checkpoint; we take its raw
    # prediction tensor as input and reproduce the module's fallback return
    # value abs(preds.mean()) + 1e-7 in Pallas (training path, no criterion).
    # TODO(synk): ultralytics YOLO backbone / criterion have no Pallas equivalent.
    def forward(self, preds, labels=None):
        if self.training and labels is not None:
            return mean_abs_loss(preds)
        # eval path of the reference module (no detections)
        return {
            "loss": jnp.zeros((), jnp.float32),
            "pred": jnp.zeros((0, 6), jnp.float32),
        }


# ----------------------------------------------------------------------------
# Pure-JAX references for correctness checking (mirror the bf16 MXU inputs)
# ----------------------------------------------------------------------------
def _ref_layernorm(x, g, b):
    mu = jnp.mean(x, axis=-1, keepdims=True)
    var = jnp.mean((x - mu) ** 2, axis=-1, keepdims=True)
    return (x - mu) * jax.lax.rsqrt(var + LN_EPS) * g + b


def ref_text_projector(hs, p):
    bf = lambda a: a.astype(jnp.bfloat16).astype(jnp.float32)
    feat = jnp.mean(hs, axis=1)
    h = bf(feat) @ bf(p["w1"]) + p["b1"]
    h = jnp.maximum(_ref_layernorm(h, p["g1"], p["be1"]), 0.0)
    h = bf(h) @ bf(p["w2"]) + p["b2"]
    h = jnp.maximum(_ref_layernorm(h, p["g2"], p["be2"]), 0.0)
    return bf(h) @ bf(p["w3"]) + p["b3"]


def ref_mean_abs_loss(preds):
    return jnp.abs(jnp.mean(preds.astype(jnp.float32))) + 1e-7


if __name__ == "__main__":
    key = jax.random.PRNGKey(0)
    k_param, k_text, k_text2, k_pred, k_pred2, k_pred3 = jax.random.split(key, 6)

    model = YOLOWorldPallas(k_param)

    # --- Projector: 8 prompts, seq len 16, dim 512 (single tile) -----------
    hs = jax.random.normal(k_text, (8, 16, D_TEXT), jnp.float32)
    emb = jax.block_until_ready(model.encode_text(hs))
    assert emb.shape == (8, NUM_CLASSES)
    ref = ref_text_projector(hs, model.params)
    assert jnp.allclose(emb, ref, atol=5e-3, rtol=5e-3), "projector mismatch"

    # --- Projector: 200 prompts (multi-tile grid + row padding) ------------
    hs2 = jax.random.normal(k_text2, (200, 16, D_TEXT), jnp.float32)
    emb2 = jax.block_until_ready(model.encode_text(hs2))
    ref2 = ref_text_projector(hs2, model.params)
    assert emb2.shape == (200, NUM_CLASSES)
    assert jnp.allclose(emb2, ref2, atol=5e-3, rtol=5e-3), "projector mismatch (big)"

    model.training = True
    labels = [jnp.zeros((1, 5), jnp.float32)]

    # --- Training fallback loss: small NCHW preds (single block) -----------
    preds = jax.random.normal(k_pred, (2, 4, 16, 16), jnp.float32)
    loss = jax.block_until_ready(model.forward(preds, labels=labels))
    assert jnp.allclose(loss, ref_mean_abs_loss(preds), atol=1e-5), "loss mismatch"

    # --- Training fallback loss: wider lane collapse ------------------------
    preds2 = jax.random.normal(k_pred2, (2, 16, 64, 64), jnp.float32)
    loss2 = jax.block_until_ready(model.forward(preds2, labels=labels))
    assert jnp.allclose(loss2, ref_mean_abs_loss(preds2), atol=1e-5), "loss mismatch (big)"

    # --- Training fallback loss: multi-block + ragged tail + 2-core grid ----
    preds3 = jax.random.normal(k_pred3, (8, 48, 40, 40), jnp.float32)
    loss3 = jax.block_until_ready(model.forward(preds3, labels=labels))
    assert jnp.allclose(loss3, ref_mean_abs_loss(preds3), atol=1e-5), "loss mismatch (ragged)"

    # --- Training fallback loss: bf16 preds (halved HBM read bytes) ---------
    preds_bf = preds2.astype(jnp.bfloat16)
    loss_bf = jax.block_until_ready(model.forward(preds_bf, labels=labels))
    assert jnp.allclose(loss_bf, ref_mean_abs_loss(preds_bf), atol=1e-4), "loss mismatch (bf16)"

    # --- Eval path (matches reference module's no-detection return) --------
    model.training = False
    out = model.forward(preds)
    assert out["pred"].shape == (0, 6)

    print("KERNEL_OK")
</pallas_src>

<mosaic_0001>
module attributes {stable_mosaic.version = 11 : i64} {
  func.func @text_projector_kernel(%arg0: i32, %arg1: memref<8x512xbf16, #tpu.memory_space<vmem>>, %arg2: memref<512x1024xbf16, #tpu.memory_space<vmem>>, %arg3: memref<1x1024xf32, #tpu.memory_space<vmem>>, %arg4: memref<1x1024xf32, #tpu.memory_space<vmem>>, %arg5: memref<1x1024xf32, #tpu.memory_space<vmem>>, %arg6: memref<1024x512xbf16, #tpu.memory_space<vmem>>, %arg7: memref<1x512xf32, #tpu.memory_space<vmem>>, %arg8: memref<1x512xf32, #tpu.memory_space<vmem>>, %arg9: memref<1x512xf32, #tpu.memory_space<vmem>>, %arg10: memref<512x128xbf16, #tpu.memory_space<vmem>>, %arg11: memref<1x128xf32, #tpu.memory_space<vmem>>, %arg12: memref<8x128xf32, #tpu.memory_space<vmem>>) attributes {dimension_semantics = [#tpu.dimension_semantics<parallel>], iteration_bounds = array<i64: 1>, scalar_prefetch = 0 : i64, scratch_operands = 0 : i64, tpu.core_type = #tpu.core_type<tc>, window_params = [{transform_indices = @transform_0, window_bounds = array<i64: 8, 512>}, {pipeline_mode = #tpu.pipeline_mode<synchronous>, transform_indices = @transform_1, window_bounds = array<i64: 512, 1024>}, {pipeline_mode = #tpu.pipeline_mode<synchronous>, transform_indices = @transform_2, window_bounds = array<i64: 1, 1024>}, {pipeline_mode = #tpu.pipeline_mode<synchronous>, transform_indices = @transform_3, window_bounds = array<i64: 1, 1024>}, {pipeline_mode = #tpu.pipeline_mode<synchronous>, transform_indices = @transform_4, window_bounds = array<i64: 1, 1024>}, {pipeline_mode = #tpu.pipeline_mode<synchronous>, transform_indices = @transform_5, window_bounds = array<i64: 1024, 512>}, {pipeline_mode = #tpu.pipeline_mode<synchronous>, transform_indices = @transform_6, window_bounds = array<i64: 1, 512>}, {pipeline_mode = #tpu.pipeline_mode<synchronous>, transform_indices = @transform_7, window_bounds = array<i64: 1, 512>}, {pipeline_mode = #tpu.pipeline_mode<synchronous>, transform_indices = @transform_8, window_bounds = array<i64: 1, 512>}, {pipeline_mode = #tpu.pipeline_mode<synchronous>, transform_indices = @transform_9, window_bounds = array<i64: 512, 128>}, {pipeline_mode = #tpu.pipeline_mode<synchronous>, transform_indices = @transform_10, window_bounds = array<i64: 1, 128>}, {transform_indices = @transform_11, window_bounds = array<i64: 8, 128>}]} {
    %c0 = arith.constant 0 : index
    %c0_0 = arith.constant 0 : index
    %0 = vector.load %arg1[%c0, %c0_0] : memref<8x512xbf16, #tpu.memory_space<vmem>>, vector<8x512xbf16>
    %c0_1 = arith.constant 0 : index
    %c0_2 = arith.constant 0 : index
    %1 = vector.load %arg2[%c0_1, %c0_2] : memref<512x1024xbf16, #tpu.memory_space<vmem>>, vector<512x1024xbf16>
    %cst = arith.constant dense<0.000000e+00> : vector<8x1024xf32>
    %2 = tpu.matmul %0, %1, %cst {dimension_numbers = #tpu.dot_dimension_numbers<[1], [0], [0], [1], [0, 0, 1, 1], [], []>} : vector<8x512xbf16>, vector<512x1024xbf16>, vector<8x1024xf32> -> vector<8x1024xf32>
    %c0_3 = arith.constant 0 : index
    %c0_4 = arith.constant 0 : index
    %3 = vector.load %arg3[%c0_3, %c0_4] : memref<1x1024xf32, #tpu.memory_space<vmem>>, vector<1x1024xf32>
    %4 = vector.broadcast %3 : vector<1x1024xf32> to vector<8x1024xf32>
    %5 = arith.addf %2, %4 : vector<8x1024xf32>
    %c0_5 = arith.constant 0 : index
    %c0_6 = arith.constant 0 : index
    %6 = vector.load %arg4[%c0_5, %c0_6] : memref<1x1024xf32, #tpu.memory_space<vmem>>, vector<1x1024xf32>
    %c0_7 = arith.constant 0 : index
    %c0_8 = arith.constant 0 : index
    %7 = vector.load %arg5[%c0_7, %c0_8] : memref<1x1024xf32, #tpu.memory_space<vmem>>, vector<1x1024xf32>
    %cst_9 = arith.constant dense<0.000000e+00> : vector<8xf32>
    %8 = vector.multi_reduction <add>, %5, %cst_9 [1] : vector<8x1024xf32> to vector<8xf32>
    %9 = vector.shape_cast %8 : vector<8xf32> to vector<8x1xf32>
    %10 = arith.mulf %5, %5 : vector<8x1024xf32>
    %cst_10 = arith.constant dense<0.000000e+00> : vector<8xf32>
    %11 = vector.multi_reduction <add>, %10, %cst_10 [1] : vector<8x1024xf32> to vector<8xf32>
    %12 = vector.shape_cast %11 : vector<8xf32> to vector<8x1xf32>
    %cst_11 = arith.constant 9.765625E-4 : f32
    %13 = vector.broadcast %cst_11 : f32 to vector<8x1xf32>
    %14 = arith.mulf %9, %13 : vector<8x1xf32>
    %cst_12 = arith.constant 9.765625E-4 : f32
    %15 = vector.broadcast %cst_12 : f32 to vector<8x1xf32>
    %16 = arith.mulf %12, %15 : vector<8x1xf32>
    %17 = arith.mulf %14, %14 : vector<8x1xf32>
    %18 = arith.subf %16, %17 : vector<8x1xf32>
    %cst_13 = arith.constant 0.000000e+00 : f32
    %19 = vector.broadcast %cst_13 : f32 to vector<8x1xf32>
    %20 = arith.maximumf %18, %19 : vector<8x1xf32>
    %cst_14 = arith.constant 9.99999974E-6 : f32
    %21 = vector.broadcast %cst_14 : f32 to vector<8x1xf32>
    %22 = arith.addf %20, %21 : vector<8x1xf32>
    %23 = math.rsqrt %22 : vector<8x1xf32>
    %24 = vector.broadcast %14 : vector<8x1xf32> to vector<8x1024xf32>
    %25 = arith.subf %5, %24 : vector<8x1024xf32>
    %26 = vector.broadcast %23 : vector<8x1xf32> to vector<8x1024xf32>
    %27 = arith.mulf %25, %26 : vector<8x1024xf32>
    %28 = vector.broadcast %6 : vector<1x1024xf32> to vector<8x1024xf32>
    %29 = arith.mulf %27, %28 : vector<8x1024xf32>
    %30 = vector.broadcast %7 : vector<1x1024xf32> to vector<8x1024xf32>
    %31 = arith.addf %29, %30 : vector<8x1024xf32>
    %cst_15 = arith.constant 0.000000e+00 : f32
    %32 = vector.broadcast %cst_15 : f32 to vector<8x1024xf32>
    %33 = arith.maximumf %31, %32 : vector<8x1024xf32>
    %34 = arith.truncf %33 : vector<8x1024xf32> to vector<8x1024xbf16>
    %c0_16 = arith.constant 0 : index
    %c0_17 = arith.constant 0 : index
    %35 = vector.load %arg6[%c0_16, %c0_17] : memref<1024x512xbf16, #tpu.memory_space<vmem>>, vector<1024x512xbf16>
    %cst_18 = arith.constant dense<0.000000e+00> : vector<8x512xf32>
    %36 = tpu.matmul %34, %35, %cst_18 {dimension_numbers = #tpu.dot_dimension_numbers<[1], [0], [0], [1], [0, 0, 1, 1], [], []>} : vector<8x1024xbf16>, vector<1024x512xbf16>, vector<8x512xf32> -> vector<8x512xf32>
    %c0_19 = arith.constant 0 : index
    %c0_20 = arith.constant 0 : index
    %37 = vector.load %arg7[%c0_19, %c0_20] : memref<1x512xf32, #tpu.memory_space<vmem>>, vector<1x512xf32>
    %38 = vector.broadcast %37 : vector<1x512xf32> to vector<8x512xf32>
    %39 = arith.addf %36, %38 : vector<8x512xf32>
    %c0_21 = arith.constant 0 : index
    %c0_22 = arith.constant 0 : index
    %40 = vector.load %arg8[%c0_21, %c0_22] : memref<1x512xf32, #tpu.memory_space<vmem>>, vector<1x512xf32>
    %c0_23 = arith.constant 0 : index
    %c0_24 = arith.constant 0 : index
    %41 = vector.load %arg9[%c0_23, %c0_24] : memref<1x512xf32, #tpu.memory_space<vmem>>, vector<1x512xf32>
    %cst_25 = arith.constant dense<0.000000e+00> : vector<8xf32>
    %42 = vector.multi_reduction <add>, %39, %cst_25 [1] : vector<8x512xf32> to vector<8xf32>
    %43 = vector.shape_cast %42 : vector<8xf32> to vector<8x1xf32>
    %44 = arith.mulf %39, %39 : vector<8x512xf32>
    %cst_26 = arith.constant dense<0.000000e+00> : vector<8xf32>
    %45 = vector.multi_reduction <add>, %44, %cst_26 [1] : vector<8x512xf32> to vector<8xf32>
    %46 = vector.shape_cast %45 : vector<8xf32> to vector<8x1xf32>
    %cst_27 = arith.constant 0.001953125 : f32
    %47 = vector.broadcast %cst_27 : f32 to vector<8x1xf32>
    %48 = arith.mulf %43, %47 : vector<8x1xf32>
    %cst_28 = arith.constant 0.001953125 : f32
    %49 = vector.broadcast %cst_28 : f32 to vector<8x1xf32>
    %50 = arith.mulf %46, %49 : vector<8x1xf32>
    %51 = arith.mulf %48, %48 : vector<8x1xf32>
    %52 = arith.subf %50, %51 : vector<8x1xf32>
    %cst_29 = arith.constant 0.000000e+00 : f32
    %53 = vector.broadcast %cst_29 : f32 to vector<8x1xf32>
    %54 = arith.maximumf %52, %53 : vector<8x1xf32>
    %cst_30 = arith.constant 9.99999974E-6 : f32
    %55 = vector.broadcast %cst_30 : f32 to vector<8x1xf32>
    %56 = arith.addf %54, %55 : vector<8x1xf32>
    %57 = math.rsqrt %56 : vector<8x1xf32>
    %58 = vector.broadcast %48 : vector<8x1xf32> to vector<8x512xf32>
    %59 = arith.subf %39, %58 : vector<8x512xf32>
    %60 = vector.broadcast %57 : vector<8x1xf32> to vector<8x512xf32>
    %61 = arith.mulf %59, %60 : vector<8x512xf32>
    %62 = vector.broadcast %40 : vector<1x512xf32> to vector<8x512xf32>
    %63 = arith.mulf %61, %62 : vector<8x512xf32>
    %64 = vector.broadcast %41 : vector<1x512xf32> to vector<8x512xf32>
    %65 = arith.addf %63, %64 : vector<8x512xf32>
    %cst_31 = arith.constant 0.000000e+00 : f32
    %66 = vector.broadcast %cst_31 : f32 to vector<8x512xf32>
    %67 = arith.maximumf %65, %66 : vector<8x512xf32>
    %68 = arith.truncf %67 : vector<8x512xf32> to vector<8x512xbf16>
    %c0_32 = arith.constant 0 : index
    %c0_33 = arith.constant 0 : index
    %69 = vector.load %arg10[%c0_32, %c0_33] : memref<512x128xbf16, #tpu.memory_space<vmem>>, vector<512x128xbf16>
    %cst_34 = arith.constant dense<0.000000e+00> : vector<8x128xf32>
    %70 = tpu.matmul %68, %69, %cst_34 {dimension_numbers = #tpu.dot_dimension_numbers<[1], [0], [0], [1], [0, 0, 1, 1], [], []>} : vector<8x512xbf16>, vector<512x128xbf16>, vector<8x128xf32> -> vector<8x128xf32>
    %c0_35 = arith.constant 0 : index
    %c0_36 = arith.constant 0 : index
    %71 = vector.load %arg11[%c0_35, %c0_36] : memref<1x128xf32, #tpu.memory_space<vmem>>, vector<1x128xf32>
    %72 = vector.broadcast %71 : vector<1x128xf32> to vector<8x128xf32>
    %73 = arith.addf %70, %72 : vector<8x128xf32>
    %c0_37 = arith.constant 0 : index
    %c0_38 = arith.constant 0 : index
    %74 = vector.load %arg12[%c0_37, %c0_38] : memref<8x128xf32, #tpu.memory_space<vmem>>, vector<8x128xf32>
    tpu.vector_store %arg12[%c0_37, %c0_38], %73 {strides = array<i32>} : memref<8x128xf32, #tpu.memory_space<vmem>>, vector<8x128xf32>,
    return
  }
  func.func @transform_0(%arg0: i32) -> (i32, i32) {
    %c0_i32 = arith.constant 0 : i32
    %c0_i32_0 = arith.constant 0 : i32
    return %arg0, %c0_i32 : i32, i32
  }
  func.func @transform_1(%arg0: i32) -> (i32, i32) {
    %c0_i32 = arith.constant 0 : i32
    %c0_i32_0 = arith.constant 0 : i32
    %c0_i32_1 = arith.constant 0 : i32
    return %c0_i32, %c0_i32_0 : i32, i32
  }
  func.func @transform_2(%arg0: i32) -> (i32, i32) {
    %c0_i32 = arith.constant 0 : i32
    %c0_i32_0 = arith.constant 0 : i32
    %c0_i32_1 = arith.constant 0 : i32
    return %c0_i32, %c0_i32_0 : i32, i32
  }
  func.func @transform_3(%arg0: i32) -> (i32, i32) {
    %c0_i32 = arith.constant 0 : i32
    %c0_i32_0 = arith.constant 0 : i32
    %c0_i32_1 = arith.constant 0 : i32
    return %c0_i32, %c0_i32_0 : i32, i32
  }
  func.func @transform_4(%arg0: i32) -> (i32, i32) {
    %c0_i32 = arith.constant 0 : i32
    %c0_i32_0 = arith.constant 0 : i32
    %c0_i32_1 = arith.constant 0 : i32
    return %c0_i32, %c0_i32_0 : i32, i32
  }
  func.func @transform_5(%arg0: i32) -> (i32, i32) {
    %c0_i32 = arith.constant 0 : i32
    %c0_i32_0 = arith.constant 0 : i32
    %c0_i32_1 = arith.constant 0 : i32
    return %c0_i32, %c0_i32_0 : i32, i32
  }
  func.func @transform_6(%arg0: i32) -> (i32, i32) {
    %c0_i32 = arith.constant 0 : i32
    %c0_i32_0 = arith.constant 0 : i32
    %c0_i32_1 = arith.constant 0 : i32
    return %c0_i32, %c0_i32_0 : i32, i32
  }
  func.func @transform_7(%arg0: i32) -> (i32, i32) {
    %c0_i32 = arith.constant 0 : i32
    %c0_i32_0 = arith.constant 0 : i32
    %c0_i32_1 = arith.constant 0 : i32
    return %c0_i32, %c0_i32_0 : i32, i32
  }
  func.func @transform_8(%arg0: i32) -> (i32, i32) {
    %c0_i32 = arith.constant 0 : i32
    %c0_i32_0 = arith.constant 0 : i32
    %c0_i32_1 = arith.constant 0 : i32
    return %c0_i32, %c0_i32_0 : i32, i32
  }
  func.func @transform_9(%arg0: i32) -> (i32, i32) {
    %c0_i32 = arith.constant 0 : i32
    %c0_i32_0 = arith.constant 0 : i32
    %c0_i32_1 = arith.constant 0 : i32
    return %c0_i32, %c0_i32_0 : i32, i32
  }
  func.func @transform_10(%arg0: i32) -> (i32, i32) {
    %c0_i32 = arith.constant 0 : i32
    %c0_i32_0 = arith.constant 0 : i32
    %c0_i32_1 = arith.constant 0 : i32
    return %c0_i32, %c0_i32_0 : i32, i32
  }
  func.func @transform_11(%arg0: i32) -> (i32, i32) {
    %c0_i32 = arith.constant 0 : i32
    %c0_i32_0 = arith.constant 0 : i32
    return %arg0, %c0_i32 : i32, i32
  }
}

</mosaic_0001>

<llo_original>
// kernel: tpu_custom_call.1
$region0: #{tpu_custom_call.1}
  #allocation0 [shape = 'u32[]', space=smem, size = 0x4, offset = 0x4, fixed_abs, tag = 'smem constant byte address 0x4 - core index']
  #allocation1 [shape = 'u32[144,128]{1,0:T(1,128)}', space=vmem, size = 0x12000, scoped, tag = 'internal scratch']
  %s0 = inlined_call_operand.hbm [shape: bf16[8,512], index: 0, kind: input, shape index: {}]
  %s1 = inlined_call_operand.hbm [shape: bf16[512,1024], index: 1, kind: input, shape index: {}]
  %s2 = inlined_call_operand.hbm [shape: f32[1,1024], index: 2, kind: input, shape index: {}]
  %s3 = inlined_call_operand.vmem [shape: f32[1,1024], index: 3, kind: input, shape index: {}]
  %s4 = inlined_call_operand.hbm [shape: f32[1,1024], index: 4, kind: input, shape index: {}]
  %s5 = inlined_call_operand.hbm [shape: bf16[1024,512], index: 5, kind: input, shape index: {}]
  %s6 = inlined_call_operand.vmem [shape: f32[1,512], index: 6, kind: input, shape index: {}]
  %s7 = inlined_call_operand.vmem [shape: f32[1,512], index: 7, kind: input, shape index: {}]
  %s8 = inlined_call_operand.vmem [shape: f32[1,512], index: 8, kind: input, shape index: {}]
  %s9 = inlined_call_operand.hbm [shape: bf16[512,128], index: 9, kind: input, shape index: {}]
  %s10 = inlined_call_operand.vmem [shape: f32[1,128], index: 10, kind: input, shape index: {}]
  %s11 = inlined_call_operand.hbm [shape: f32[8,128], index: 11, kind: output, shape index: {}]
  %s12 = sld [smem:[#allocation0]]
  $region78: #{tpu_custom_call.1} parent=0
    _
  %s14 = ssub.s32 1, %s12
  %s15 = scalar_select 0, %s14, %s12
  $region1: #{tpu_custom_call.1} parent=0
    #allocation2 [shape = 'u8[8192]{0}', space=vmem, size = 0x2000, scoped, tag = 'input window, operand 0, single buffered']
    #allocation3 [shape = 's32[1]{0}', space=sflag, size = 0x4, scoped, tag = 'scoped memory for tpu_custom_call.1']
    #allocation4 [shape = 's32[1]{0}', space=sflag, size = 0x4, scoped, tag = 'scoped memory for tpu_custom_call.1']
    #allocation5 [shape = 'u8[1048576]{0}', space=vmem, size = 0x100000, scoped, tag = 'input window, operand 1, single buffered']
    #allocation6 [shape = 's32[1]{0}', space=sflag, size = 0x4, scoped, tag = 'scoped memory for tpu_custom_call.1']
    #allocation7 [shape = 'u8[4096]{0}', space=vmem, size = 0x1000, scoped, tag = 'input window, operand 2, single buffered']
    #allocation8 [shape = 'u8[4096]{0}', space=vmem, size = 0x1000, scoped, tag = 'input window, operand 4, single buffered']
    #allocation9 [shape = 's32[1]{0}', space=sflag, size = 0x4, scoped, tag = 'scoped memory for tpu_custom_call.1']
    #allocation10 [shape = 'u8[1048576]{0}', space=vmem, size = 0x100000, scoped, tag = 'input window, operand 5, single buffered']
    #allocation11 [shape = 'u8[131072]{0}', space=vmem, size = 0x20000, scoped, tag = 'input window, operand 9, single buffered']
    #allocation12 [shape = 's32[1]{0}', space=sflag, size = 0x4, scoped, tag = 'scoped memory for tpu_custom_call.1']
    #allocation13 [shape = 'u8[4096]{0}', space=vmem, size = 0x1000, scoped, tag = 'output window, operand 0, single buffered']
    %16 = vsyncpa [#allocation3], 0
    %17 = vsyncpa [#allocation6], 0
    %18 = vsyncpa [#allocation9], 0
    %19 = vsyncpa [#allocation12], 0
    %20 = vsyncpa [#allocation4], 0
    // Predicated region
    $region2: #{tpu_custom_call.1} parent=1 // pred_check
      _
    $region3: #{tpu_custom_call.1} parent=1 // pred_check_branch
      %22 = sbr.rel (0) target = $region5
    $region4: #{tpu_custom_call.1} parent=1 // pred_region
      %s24 = ssub.s32 256, 256
      %25 = vsyncadd [#allocation3], %s24
      %s27 = sshll.u32 [#allocation2], 4
      %s28 = int_to_ptr.vmem [resolvable:$true] %s27
      %30 = dma.hbm_to_vmem [thread:$0]  %s0, 256, %s28, [#allocation3]
    $region5: #{tpu_custom_call.1} parent=1 // pred_fallthru
      _
    // Predicated region
    $region6: #{tpu_custom_call.1} parent=1 // pred_check
      _
    $region7: #{tpu_custom_call.1} parent=1 // pred_check_branch
      %32 = sbr.rel (0) target = $region9
    $region8: #{tpu_custom_call.1} parent=1 // pred_region
      %s34 = ssub.s32 32768, 32768
      %35 = vsyncadd [#allocation6], %s34
      %s36 = sshll.u32 [#allocation5], 4
      %s37 = int_to_ptr.vmem [resolvable:$true] %s36
      %42 = dma.hbm_to_vmem [thread:$0]  %s1, 32768, %s37, [#allocation6], 512, 512, 32
    $region9: #{tpu_custom_call.1} parent=1 // pred_fallthru
      _
    // Predicated region
    $region10: #{tpu_custom_call.1} parent=1 // pred_check
      _
    $region11: #{tpu_custom_call.1} parent=1 // pred_check_branch
      %44 = sbr.rel (0) target = $region13
    $region12: #{tpu_custom_call.1} parent=1 // pred_region
      %s46 = ssub.s32 128, 128
      %47 = vsyncadd [#allocation6], %s46
      %s49 = sshll.u32 [#allocation7], 4
      %s50 = int_to_ptr.vmem [resolvable:$true] %s49
      %52 = dma.hbm_to_vmem [thread:$0]  %s2, 128, %s50, [#allocation6]
    $region13: #{tpu_custom_call.1} parent=1 // pred_fallthru
      _
    // Predicated region
    $region14: #{tpu_custom_call.1} parent=1 // pred_check
      _
    $region15: #{tpu_custom_call.1} parent=1 // pred_check_branch
      %54 = sbr.rel (0) target = $region17
    $region16: #{tpu_custom_call.1} parent=1 // pred_region
      _
    $region17: #{tpu_custom_call.1} parent=1 // pred_fallthru
      _
    // Predicated region
    $region18: #{tpu_custom_call.1} parent=1 // pred_check
      _
    $region19: #{tpu_custom_call.1} parent=1 // pred_check_branch
      %56 = sbr.rel (0) target = $region21
    $region20: #{tpu_custom_call.1} parent=1 // pred_region
      %s58 = ssub.s32 128, 128
      %59 = vsyncadd [#allocation9], %s58
      %s61 = sshll.u32 [#allocation8], 4
      %s62 = int_to_ptr.vmem [resolvable:$true] %s61
      %64 = dma.hbm_to_vmem [thread:$0]  %s4, 128, %s62, [#allocation9]
    $region21: #{tpu_custom_call.1} parent=1 // pred_fallthru
      _
    // Predicated region
    $region22: #{tpu_custom_call.1} parent=1 // pred_check
      _
    $region23: #{tpu_custom_call.1} parent=1 // pred_check_branch
      %66 = sbr.rel (0) target = $region25
    $region24: #{tpu_custom_call.1} parent=1 // pred_region
      %s68 = ssub.s32 32768, 32768
      %69 = vsyncadd [#allocation9], %s68
      %s70 = sshll.u32 [#allocation10], 4
      %s71 = int_to_ptr.vmem [resolvable:$true] %s70
      %76 = dma.hbm_to_vmem [thread:$0]  %s5, 32768, %s71, [#allocation9], 256, 256, 16
    $region25: #{tpu_custom_call.1} parent=1 // pred_fallthru
      _
    // Predicated region
    $region26: #{tpu_custom_call.1} parent=1 // pred_check
      _
    $region27: #{tpu_custom_call.1} parent=1 // pred_check_branch
      %78 = sbr.rel (0) target = $region29
    $region28: #{tpu_custom_call.1} parent=1 // pred_region
      _
    $region29: #{tpu_custom_call.1} parent=1 // pred_fallthru
      _
    // Predicated region
    $region30: #{tpu_custom_call.1} parent=1 // pred_check
      _
    $region31: #{tpu_custom_call.1} parent=1 // pred_check_branch
      %80 = sbr.rel (0) target = $region33
    $region32: #{tpu_custom_call.1} parent=1 // pred_region
      _
    $region33: #{tpu_custom_call.1} parent=1 // pred_fallthru
      _
    // Predicated region
    $region34: #{tpu_custom_call.1} parent=1 // pred_check
      _
    $region35: #{tpu_custom_call.1} parent=1 // pred_check_branch
      %82 = sbr.rel (0) target = $region37
    $region36: #{tpu_custom_call.1} parent=1 // pred_region
      _
    $region37: #{tpu_custom_call.1} parent=1 // pred_fallthru
      _
    // Predicated region
    $region38: #{tpu_custom_call.1} parent=1 // pred_check
      _
    $region39: #{tpu_custom_call.1} parent=1 // pred_check_branch
      %84 = sbr.rel (0) target = $region41
    $region40: #{tpu_custom_call.1} parent=1 // pred_region
      %s86 = ssub.s32 4096, 4096
      %87 = vsyncadd [#allocation12], %s86
      %s88 = sshll.u32 [#allocation11], 4
      %s89 = int_to_ptr.vmem [resolvable:$true] %s88
      %94 = dma.hbm_to_vmem [thread:$0]  %s9, 4096, %s89, [#allocation12], 64, 64, 4
    $region41: #{tpu_custom_call.1} parent=1 // pred_fallthru
      _
    // Predicated region
    $region42: #{tpu_custom_call.1} parent=1 // pred_check
      _
    $region43: #{tpu_custom_call.1} parent=1 // pred_check_branch
      %96 = sbr.rel (0) target = $region45
    $region44: #{tpu_custom_call.1} parent=1 // pred_region
      _
    $region45: #{tpu_custom_call.1} parent=1 // pred_fallthru
      _
    // Predicated region
    $region46: #{tpu_custom_call.1} parent=1 // pred_check
      _
    $region47: #{tpu_custom_call.1} parent=1 // pred_check_branch
      %98 = sbr.rel (0) target = $region49
    $region48: #{tpu_custom_call.1} parent=1 // pred_region
      %99 = dma.done [#allocation3], 256
    $region49: #{tpu_custom_call.1} parent=1 // pred_fallthru
      _
    // Predicated region
    $region50: #{tpu_custom_call.1} parent=1 // pred_check
      _
    $region51: #{tpu_custom_call.1} parent=1 // pred_check_branch
      %101 = sbr.rel (0) target = $region53
    $region52: #{tpu_custom_call.1} parent=1 // pred_region
      %102 = dma.done [#allocation6], 32768
    $region53: #{tpu_custom_call.1} parent=1 // pred_fallthru
      _
    // Predicated region
    $region54: #{tpu_custom_call.1} parent=1 // pred_check
      _
    $region55: #{tpu_custom_call.1} parent=1 // pred_check_branch
      %104 = sbr.rel (0) target = $region57
    $region56: #{tpu_custom_call.1} parent=1 // pred_region
      %105 = dma.done [#allocation6], 128
    $region57: #{tpu_custom_call.1} parent=1 // pred_fallthru
      _
    // Predicated region
    $region58: #{tpu_custom_call.1} parent=1 // pred_check
      _
    $region59: #{tpu_custom_call.1} parent=1 // pred_check_branch
      %107 = sbr.rel (0) target = $region61
    $region60: #{tpu_custom_call.1} parent=1 // pred_region
      %108 = dma.done [#allocation9], 128
    $region61: #{tpu_custom_call.1} parent=1 // pred_fallthru
      _
    // Predicated region
    $region62: #{tpu_custom_call.1} parent=1 // pred_check
      _
    $region63: #{tpu_custom_call.1} parent=1 // pred_check_branch
      %110 = sbr.rel (0) target = $region65
    $region64: #{tpu_custom_call.1} parent=1 // pred_region
      %111 = dma.done [#allocation9], 32768
    $region65: #{tpu_custom_call.1} parent=1 // pred_fallthru
      _
    // Predicated region
    $region66: #{tpu_custom_call.1} parent=1 // pred_check
      _
    $region67: #{tpu_custom_call.1} parent=1 // pred_check_branch
      %113 = sbr.rel (0) target = $region69
    $region68: #{tpu_custom_call.1} parent=1 // pred_region
      %114 = dma.done [#allocation12], 4096
    $region69: #{tpu_custom_call.1} parent=1 // pred_fallthru
      _
    %v116 = vld [vmem:[#allocation2] sm:$0xff]
    %v117 = vld [vmem:[#allocation2 + $0x8] sm:$0xff]
    %v118 = vld [vmem:[#allocation5] sm:$0xff]
    %v119 = vld [vmem:[#allocation5 + $0x8] sm:$0xff]
    %v120 = vld [vmem:[#allocation5 + $0x10] sm:$0xff]
    %v121 = vld [vmem:[#allocation5 + $0x18] sm:$0xff]
    %v122 = vld [vmem:[#allocation5 + $0x20] sm:$0xff]
    %v123 = vld [vmem:[#allocation5 + $0x28] sm:$0xff]
    %v124 = vld [vmem:[#allocation5 + $0x30] sm:$0xff]
    %v125 = vld [vmem:[#allocation5 + $0x38] sm:$0xff]
    %v126 = vld [vmem:[#allocation5 + $0x40] sm:$0xff]
    %v127 = vld [vmem:[#allocation5 + $0x48] sm:$0xff]
    %v128 = vld [vmem:[#allocation5 + $0x50] sm:$0xff]
    %v129 = vld [vmem:[#allocation5 + $0x58] sm:$0xff]
    %v130 = vld [vmem:[#allocation5 + $0x60] sm:$0xff]
    %v131 = vld [vmem:[#allocation5 + $0x68] sm:$0xff]
    %v132 = vld [vmem:[#allocation5 + $0x70] sm:$0xff]
    %v133 = vld [vmem:[#allocation5 + $0x78] sm:$0xff]
    %v134 = vld [vmem:[#allocation5 + $0x80] sm:$0xff]
    %v135 = vld [vmem:[#allocation5 + $0x88] sm:$0xff]
    %v136 = vld [vmem:[#allocation5 + $0x90] sm:$0xff]
    %v137 = vld [vmem:[#allocation5 + $0x98] sm:$0xff]
    %v138 = vld [vmem:[#allocation5 + $0xa0] sm:$0xff]
    %v139 = vld [vmem:[#allocation5 + $0xa8] sm:$0xff]
    %v140 = vld [vmem:[#allocation5 + $0xb0] sm:$0xff]
    %v141 = vld [vmem:[#allocation5 + $0xb8] sm:$0xff]
    %v142 = vld [vmem:[#allocation5 + $0xc0] sm:$0xff]
    %v143 = vld [vmem:[#allocation5 + $0xc8] sm:$0xff]
    %v144 = vld [vmem:[#allocation5 + $0xd0] sm:$0xff]
    %v145 = vld [vmem:[#allocation5 + $0xd8] sm:$0xff]
    %v146 = vld [vmem:[#allocation5 + $0xe0] sm:$0xff]
    %v147 = vld [vmem:[#allocation5 + $0xe8] sm:$0xff]
    %v148 = vld [vmem:[#allocation5 + $0xf0] sm:$0xff]
    %v149 = vld [vmem:[#allocation5 + $0xf8] sm:$0xff]
    %v150 = vld [vmem:[#allocation5 + $0x100] sm:$0xff]
    %v151 = vld [vmem:[#allocation5 + $0x108] sm:$0xff]
    %v152 = vld [vmem:[#allocation5 + $0x110] sm:$0xff]
    %v153 = vld [vmem:[#allocation5 + $0x118] sm:$0xff]
    %v154 = vld [vmem:[#allocation5 + $0x120] sm:$0xff]
    %v155 = vld [vmem:[#allocation5 + $0x128] sm:$0xff]
    %v156 = vld [vmem:[#allocation5 + $0x130] sm:$0xff]
    %v157 = vld [vmem:[#allocation5 + $0x138] sm:$0xff]
    %v158 = vld [vmem:[#allocation5 + $0x140] sm:$0xff]
    %v159 = vld [vmem:[#allocation5 + $0x148] sm:$0xff]
    %v160 = vld [vmem:[#allocation5 + $0x150] sm:$0xff]
    %v161 = vld [vmem:[#allocation5 + $0x158] sm:$0xff]
    %v162 = vld [vmem:[#allocation5 + $0x160] sm:$0xff]
    %v163 = vld [vmem:[#allocation5 + $0x168] sm:$0xff]
    %v164 = vld [vmem:[#allocation5 + $0x170] sm:$0xff]
    %v165 = vld [vmem:[#allocation5 + $0x178] sm:$0xff]
    %v166 = vld [vmem:[#allocation5 + $0x180] sm:$0xff]
    %v167 = vld [vmem:[#allocation5 + $0x188] sm:$0xff]
    %v168 = vld [vmem:[#allocation5 + $0x190] sm:$0xff]
    %v169 = vld [vmem:[#allocation5 + $0x198] sm:$0xff]
    %v170 = vld [vmem:[#allocation5 + $0x1a0] sm:$0xff]
    %v171 = vld [vmem:[#allocation5 + $0x1a8] sm:$0xff]
    %v172 = vld [vmem:[#allocation5 + $0x1b0] sm:$0xff]
    %v173 = vld [vmem:[#allocation5 + $0x1b8] sm:$0xff]
    %v174 = vld [vmem:[#allocation5 + $0x1c0] sm:$0xff]
    %v175 = vld [vmem:[#allocation5 + $0x1c8] sm:$0xff]
    %v176 = vld [vmem:[#allocation5 + $0x1d0] sm:$0xff]
    %v177 = vld [vmem:[#allocation5 + $0x1d8] sm:$0xff]
    %v178 = vld [vmem:[#allocation5 + $0x1e0] sm:$0xff]
    %v179 = vld [vmem:[#allocation5 + $0x1e8] sm:$0xff]
    %v180 = vld [vmem:[#allocation5 + $0x1f0] sm:$0xff]
    %v181 = vld [vmem:[#allocation5 + $0x1f8] sm:$0xff]
    %v182 = vld [vmem:[#allocation5 + $0x200] sm:$0xff]
    %v183 = vld [vmem:[#allocation5 + $0x208] sm:$0xff]
    %v184 = vld [vmem:[#allocation5 + $0x210] sm:$0xff]
    %v185 = vld [vmem:[#allocation5 + $0x218] sm:$0xff]
    %v186 = vld [vmem:[#allocation5 + $0x220] sm:$0xff]
    %v187 = vld [vmem:[#allocation5 + $0x228] sm:$0xff]
    %v188 = vld [vmem:[#allocation5 + $0x230] sm:$0xff]
    %v189 = vld [vmem:[#allocation5 + $0x238] sm:$0xff]
    %v190 = vld [vmem:[#allocation5 + $0x240] sm:$0xff]
    %v191 = vld [vmem:[#allocation5 + $0x248] sm:$0xff]
    %v192 = vld [vmem:[#allocation5 + $0x250] sm:$0xff]
    %v193 = vld [vmem:[#allocation5 + $0x258] sm:$0xff]
    %v194 = vld [vmem:[#allocation5 + $0x260] sm:$0xff]
    %v195 = vld [vmem:[#allocation5 + $0x268] sm:$0xff]
    %v196 = vld [vmem:[#allocation5 + $0x270] sm:$0xff]
    %v197 = vld [vmem:[#allocation5 + $0x278] sm:$0xff]
    %v198 = vld [vmem:[#allocation5 + $0x280] sm:$0xff]
    %v199 = vld [vmem:[#allocation5 + $0x288] sm:$0xff]
    %v200 = vld [vmem:[#allocation5 + $0x290] sm:$0xff]
    %v201 = vld [vmem:[#allocation5 + $0x298] sm:$0xff]
    %v202 = vld [vmem:[#allocation5 + $0x2a0] sm:$0xff]
    %v203 = vld [vmem:[#allocation5 + $0x2a8] sm:$0xff]
    %v204 = vld [vmem:[#allocation5 + $0x2b0] sm:$0xff]
    %v205 = vld [vmem:[#allocation5 + $0x2b8] sm:$0xff]
    %v206 = vld [vmem:[#allocation5 + $0x2c0] sm:$0xff]
    %v207 = vld [vmem:[#allocation5 + $0x2c8] sm:$0xff]
    %v208 = vld [vmem:[#allocation5 + $0x2d0] sm:$0xff]
    %v209 = vld [vmem:[#allocation5 + $0x2d8] sm:$0xff]
    %v210 = vld [vmem:[#allocation5 + $0x2e0] sm:$0xff]
    %v211 = vld [vmem:[#allocation5 + $0x2e8] sm:$0xff]
    %v212 = vld [vmem:[#allocation5 + $0x2f0] sm:$0xff]
    %v213 = vld [vmem:[#allocation5 + $0x2f8] sm:$0xff]
    %v214 = vld [vmem:[#allocation5 + $0x300] sm:$0xff]
    %v215 = vld [vmem:[#allocation5 + $0x308] sm:$0xff]
    %v216 = vld [vmem:[#allocation5 + $0x310] sm:$0xff]
    %v217 = vld [vmem:[#allocation5 + $0x318] sm:$0xff]
    %v218 = vld [vmem:[#allocation5 + $0x320] sm:$0xff]
    %v219 = vld [vmem:[#allocation5 + $0x328] sm:$0xff]
    %v220 = vld [vmem:[#allocation5 + $0x330] sm:$0xff]
    %v221 = vld [vmem:[#allocation5 + $0x338] sm:$0xff]
    %v222 = vld [vmem:[#allocation5 + $0x340] sm:$0xff]
    %v223 = vld [vmem:[#allocation5 + $0x348] sm:$0xff]
    %v224 = vld [vmem:[#allocation5 + $0x350] sm:$0xff]
    %v225 = vld [vmem:[#allocation5 + $0x358] sm:$0xff]
    %v226 = vld [vmem:[#allocation5 + $0x360] sm:$0xff]
    %v227 = vld [vmem:[#allocation5 + $0x368] sm:$0xff]
    %v228 = vld [vmem:[#allocation5 + $0x370] sm:$0xff]
    %v229 = vld [vmem:[#allocation5 + $0x378] sm:$0xff]
    %v230 = vld [vmem:[#allocation5 + $0x380] sm:$0xff]
    %v231 = vld [vmem:[#allocation5 + $0x388] sm:$0xff]
    %v232 = vld [vmem:[#allocation5 + $0x390] sm:$0xff]
    %v233 = vld [vmem:[#allocation5 + $0x398] sm:$0xff]
    %v234 = vld [vmem:[#allocation5 + $0x3a0] sm:$0xff]
    %v235 = vld [vmem:[#allocation5 + $0x3a8] sm:$0xff]
    %v236 = vld [vmem:[#allocation5 + $0x3b0] sm:$0xff]
    %v237 = vld [vmem:[#allocation5 + $0x3b8] sm:$0xff]
    %v238 = vld [vmem:[#allocation5 + $0x3c0] sm:$0xff]
    %v239 = vld [vmem:[#allocation5 + $0x3c8] sm:$0xff]
    %v240 = vld [vmem:[#allocation5 + $0x3d0] sm:$0xff]
    %v241 = vld [vmem:[#allocation5 + $0x3d8] sm:$0xff]
    %v242 = vld [vmem:[#allocation5 + $0x3e0] sm:$0xff]
    %v243 = vld [vmem:[#allocation5 + $0x3e8] sm:$0xff]
    %v244 = vld [vmem:[#allocation5 + $0x3f0] sm:$0xff]
    %v245 = vld [vmem:[#allocation5 + $0x3f8] sm:$0xff]
    %v246 = vld [vmem:[#allocation5 + $0x400] sm:$0xff]
    %v247 = vld [vmem:[#allocation5 + $0x408] sm:$0xff]
    %v248 = vld [vmem:[#allocation5 + $0x410] sm:$0xff]
    %v249 = vld [vmem:[#allocation5 + $0x418] sm:$0xff]
    %v250 = vld [vmem:[#allocation5 + $0x420] sm:$0xff]
    %v251 = vld [vmem:[#allocation5 + $0x428] sm:$0xff]
    %v252 = vld [vmem:[#allocation5 + $0x430] sm:$0xff]
    %v253 = vld [vmem:[#allocation5 + $0x438] sm:$0xff]
    %v254 = vld [vmem:[#allocation5 + $0x440] sm:$0xff]
    %v255 = vld [vmem:[#allocation5 + $0x448] sm:$0xff]
    %v256 = vld [vmem:[#allocation5 + $0x450] sm:$0xff]
    %v257 = vld [vmem:[#allocation5 + $0x458] sm:$0xff]
    %v258 = vld [vmem:[#allocation5 + $0x460] sm:$0xff]
    %v259 = vld [vmem:[#allocation5 + $0x468] sm:$0xff]
    %v260 = vld [vmem:[#allocation5 + $0x470] sm:$0xff]
    %v261 = vld [vmem:[#allocation5 + $0x478] sm:$0xff]
    %v262 = vld [vmem:[#allocation5 + $0x480] sm:$0xff]
    %v263 = vld [vmem:[#allocation5 + $0x488] sm:$0xff]
    %v264 = vld [vmem:[#allocation5 + $0x490] sm:$0xff]
    %v265 = vld [vmem:[#allocation5 + $0x498] sm:$0xff]
    %v266 = vld [vmem:[#allocation5 + $0x4a0] sm:$0xff]
    %v267 = vld [vmem:[#allocation5 + $0x4a8] sm:$0xff]
    %v268 = vld [vmem:[#allocation5 + $0x4b0] sm:$0xff]
    %v269 = vld [vmem:[#allocation5 + $0x4b8] sm:$0xff]
    %v270 = vld [vmem:[#allocation5 + $0x4c0] sm:$0xff]
    %v271 = vld [vmem:[#allocation5 + $0x4c8] sm:$0xff]
    %v272 = vld [vmem:[#allocation5 + $0x4d0] sm:$0xff]
    %v273 = vld [vmem:[#allocation5 + $0x4d8] sm:$0xff]
    %v274 = vld [vmem:[#allocation5 + $0x4e0] sm:$0xff]
    %v275 = vld [vmem:[#allocation5 + $0x4e8] sm:$0xff]
    %v276 = vld [vmem:[#allocation5 + $0x4f0] sm:$0xff]
    %v277 = vld [vmem:[#allocation5 + $0x4f8] sm:$0xff]
    %v278 = vld [vmem:[#allocation5 + $0x500] sm:$0xff]
    %v279 = vld [vmem:[#allocation5 + $0x508] sm:$0xff]
    %v280 = vld [vmem:[#allocation5 + $0x510] sm:$0xff]
    %v281 = vld [vmem:[#allocation5 + $0x518] sm:$0xff]
    %v282 = vld [vmem:[#allocation5 + $0x520] sm:$0xff]
    %v283 = vld [vmem:[#allocation5 + $0x528] sm:$0xff]
    %v284 = vld [vmem:[#allocation5 + $0x530] sm:$0xff]
    %v285 = vld [vmem:[#allocation5 + $0x538] sm:$0xff]
    %v286 = vld [vmem:[#allocation5 + $0x540] sm:$0xff]
    %v287 = vld [vmem:[#allocation5 + $0x548] sm:$0xff]
    %v288 = vld [vmem:[#allocation5 + $0x550] sm:$0xff]
    %v289 = vld [vmem:[#allocation5 + $0x558] sm:$0xff]
    %v290 = vld [vmem:[#allocation5 + $0x560] sm:$0xff]
    %v291 = vld [vmem:[#allocation5 + $0x568] sm:$0xff]
    %v292 = vld [vmem:[#allocation5 + $0x570] sm:$0xff]
    %v293 = vld [vmem:[#allocation5 + $0x578] sm:$0xff]
    %v294 = vld [vmem:[#allocation5 + $0x580] sm:$0xff]
    %v295 = vld [vmem:[#allocation5 + $0x588] sm:$0xff]
    %v296 = vld [vmem:[#allocation5 + $0x590] sm:$0xff]
    %v297 = vld [vmem:[#allocation5 + $0x598] sm:$0xff]
    %v298 = vld [vmem:[#allocation5 + $0x5a0] sm:$0xff]
    %v299 = vld [vmem:[#allocation5 + $0x5a8] sm:$0xff]
    %v300 = vld [vmem:[#allocation5 + $0x5b0] sm:$0xff]
    %v301 = vld [vmem:[#allocation5 + $0x5b8] sm:$0xff]
    %v302 = vld [vmem:[#allocation5 + $0x5c0] sm:$0xff]
    %v303 = vld [vmem:[#allocation5 + $0x5c8] sm:$0xff]
    %v304 = vld [vmem:[#allocation5 + $0x5d0] sm:$0xff]
    %v305 = vld [vmem:[#allocation5 + $0x5d8] sm:$0xff]
    %v306 = vld [vmem:[#allocation5 + $0x5e0] sm:$0xff]
    %v307 = vld [vmem:[#allocation5 + $0x5e8] sm:$0xff]
    %v308 = vld [vmem:[#allocation5 + $0x5f0] sm:$0xff]
    %v309 = vld [vmem:[#allocation5 + $0x5f8] sm:$0xff]
    %v310 = vld [vmem:[#allocation5 + $0x600] sm:$0xff]
    %v311 = vld [vmem:[#allocation5 + $0x608] sm:$0xff]
    %v312 = vld [vmem:[#allocation5 + $0x610] sm:$0xff]
    %v313 = vld [vmem:[#allocation5 + $0x618] sm:$0xff]
    %v314 = vld [vmem:[#allocation5 + $0x620] sm:$0xff]
    %v315 = vld [vmem:[#allocation5 + $0x628] sm:$0xff]
    %v316 = vld [vmem:[#allocation5 + $0x630] sm:$0xff]
    %v317 = vld [vmem:[#allocation5 + $0x638] sm:$0xff]
    %v318 = vld [vmem:[#allocation5 + $0x640] sm:$0xff]
    %v319 = vld [vmem:[#allocation5 + $0x648] sm:$0xff]
    %v320 = vld [vmem:[#allocation5 + $0x650] sm:$0xff]
    %v321 = vld [vmem:[#allocation5 + $0x658] sm:$0xff]
    %v322 = vld [vmem:[#allocation5 + $0x660] sm:$0xff]
    %v323 = vld [vmem:[#allocation5 + $0x668] sm:$0xff]
    %v324 = vld [vmem:[#allocation5 + $0x670] sm:$0xff]
    %v325 = vld [vmem:[#allocation5 + $0x678] sm:$0xff]
    %v326 = vld [vmem:[#allocation5 + $0x680] sm:$0xff]
    %v327 = vld [vmem:[#allocation5 + $0x688] sm:$0xff]
    %v328 = vld [vmem:[#allocation5 + $0x690] sm:$0xff]
    %v329 = vld [vmem:[#allocation5 + $0x698] sm:$0xff]
    %v330 = vld [vmem:[#allocation5 + $0x6a0] sm:$0xff]
    %v331 = vld [vmem:[#allocation5 + $0x6a8] sm:$0xff]
    %v332 = vld [vmem:[#allocation5 + $0x6b0] sm:$0xff]
    %v333 = vld [vmem:[#allocation5 + $0x6b8] sm:$0xff]
    %v334 = vld [vmem:[#allocation5 + $0x6c0] sm:$0xff]
    %v335 = vld [vmem:[#allocation5 + $0x6c8] sm:$0xff]
    %v336 = vld [vmem:[#allocation5 + $0x6d0] sm:$0xff]
    %v337 = vld [vmem:[#allocation5 + $0x6d8] sm:$0xff]
    %v338 = vld [vmem:[#allocation5 + $0x6e0] sm:$0xff]
    %v339 = vld [vmem:[#allocation5 + $0x6e8] sm:$0xff]
    %v340 = vld [vmem:[#allocation5 + $0x6f0] sm:$0xff]
    %v341 = vld [vmem:[#allocation5 + $0x6f8] sm:$0xff]
    %v342 = vld [vmem:[#allocation5 + $0x700] sm:$0xff]
    %v343 = vld [vmem:[#allocation5 + $0x708] sm:$0xff]
    %v344 = vld [vmem:[#allocation5 + $0x710] sm:$0xff]
    %v345 = vld [vmem:[#allocation5 + $0x718] sm:$0xff]
    %v346 = vld [vmem:[#allocation5 + $0x720] sm:$0xff]
    %v347 = vld [vmem:[#allocation5 + $0x728] sm:$0xff]
    %v348 = vld [vmem:[#allocation5 + $0x730] sm:$0xff]
    %v349 = vld [vmem:[#allocation5 + $0x738] sm:$0xff]
    %v350 = vld [vmem:[#allocation5 + $0x740] sm:$0xff]
    %v351 = vld [vmem:[#allocation5 + $0x748] sm:$0xff]
    %v352 = vld [vmem:[#allocation5 + $0x750] sm:$0xff]
    %v353 = vld [vmem:[#allocation5 + $0x758] sm:$0xff]
    %v354 = vld [vmem:[#allocation5 + $0x760] sm:$0xff]
    %v355 = vld [vmem:[#allocation5 + $0x768] sm:$0xff]
    %v356 = vld [vmem:[#allocation5 + $0x770] sm:$0xff]
    %v357 = vld [vmem:[#allocation5 + $0x778] sm:$0xff]
    %v358 = vld [vmem:[#allocation5 + $0x780] sm:$0xff]
    %v359 = vld [vmem:[#allocation5 + $0x788] sm:$0xff]
    %v360 = vld [vmem:[#allocation5 + $0x790] sm:$0xff]
    %v361 = vld [vmem:[#allocation5 + $0x798] sm:$0xff]
    %v362 = vld [vmem:[#allocation5 + $0x7a0] sm:$0xff]
    %v363 = vld [vmem:[#allocation5 + $0x7a8] sm:$0xff]
    %v364 = vld [vmem:[#allocation5 + $0x7b0] sm:$0xff]
    %v365 = vld [vmem:[#allocation5 + $0x7b8] sm:$0xff]
    %v366 = vld [vmem:[#allocation5 + $0x7c0] sm:$0xff]
    %v367 = vld [vmem:[#allocation5 + $0x7c8] sm:$0xff]
    %v368 = vld [vmem:[#allocation5 + $0x7d0] sm:$0xff]
    %v369 = vld [vmem:[#allocation5 + $0x7d8] sm:$0xff]
    %v370 = vld [vmem:[#allocation5 + $0x7e0] sm:$0xff]
    %v371 = vld [vmem:[#allocation5 + $0x7e8] sm:$0xff]
    %v372 = vld [vmem:[#allocation5 + $0x7f0] sm:$0xff]
    %v373 = vld [vmem:[#allocation5 + $0x7f8] sm:$0xff]
    %v374 = vld [vmem:[#allocation7] sm:$0xff]
    %v376 = vlaneseq
    %v377 = vshrl.u32 %v376, 7
    %v378 = vsub.s32 0, %v377
    %v379 = vrot.slane %v374, %v378
    %v380 = vlaneseq
    %v381 = vshrl.u32 %v380, 7
    %v382 = vsub.s32 1, %v381
    %v383 = vrot.slane %v374, %v382
    %v384 = vlaneseq
    %v385 = vshrl.u32 %v384, 7
    %v386 = vsub.s32 2, %v385
    %v387 = vrot.slane %v374, %v386
    %v388 = vlaneseq
    %v389 = vshrl.u32 %v388, 7
    %v390 = vsub.s32 3, %v389
    %v391 = vrot.slane %v374, %v390
    %v392 = vlaneseq
    %v393 = vshrl.u32 %v392, 7
    %v394 = vsub.s32 4, %v393
    %v395 = vrot.slane %v374, %v394
    %v396 = vlaneseq
    %v397 = vshrl.u32 %v396, 7
    %v398 = vsub.s32 5, %v397
    %v399 = vrot.slane %v374, %v398
    %v400 = vlaneseq
    %v401 = vshrl.u32 %v400, 7
    %v402 = vsub.s32 6, %v401
    %v403 = vrot.slane %v374, %v402
    %v404 = vlaneseq
    %v405 = vshrl.u32 %v404, 7
    %v406 = vsub.s32 7, %v405
    %v407 = vrot.slane %v374, %v406
    %v418 = vunpack.c.l.b16 %v116
    %v419 = vunpack.c.h.b16 %v116
    %v420 = vunpack.c.l.b16 %v117
    %v421 = vunpack.c.h.b16 %v117
    %v422 = vpack.c.b16 %v418, %v418
    %v423 = vpack.c.b16 %v419, %v419
    %v424 = vpack.c.b16 %v420, %v420
    %v425 = vpack.c.b16 %v421, %v421
    %v686 = vunpack.c.l.b16 %v118
    %v687 = vunpack.c.h.b16 %v118
    %v688 = vunpack.c.l.b16 %v119
    %v689 = vunpack.c.h.b16 %v119
    %v690 = vunpack.c.l.b16 %v120
    %v691 = vunpack.c.h.b16 %v120
    %v692 = vunpack.c.l.b16 %v121
    %v693 = vunpack.c.h.b16 %v121
    %v694 = vunpack.c.l.b16 %v122
    %v695 = vunpack.c.h.b16 %v122
    %v696 = vunpack.c.l.b16 %v123
    %v697 = vunpack.c.h.b16 %v123
    %v698 = vunpack.c.l.b16 %v124
    %v699 = vunpack.c.h.b16 %v124
    %v700 = vunpack.c.l.b16 %v125
    %v701 = vunpack.c.h.b16 %v125
    %v702 = vunpack.c.l.b16 %v126
    %v703 = vunpack.c.h.b16 %v126
    %v704 = vunpack.c.l.b16 %v127
    %v705 = vunpack.c.h.b16 %v127
    %v706 = vunpack.c.l.b16 %v128
    %v707 = vunpack.c.h.b16 %v128
    %v708 = vunpack.c.l.b16 %v129
    %v709 = vunpack.c.h.b16 %v129
    %v710 = vunpack.c.l.b16 %v130
    %v711 = vunpack.c.h.b16 %v130
    %v712 = vunpack.c.l.b16 %v131
    %v713 = vunpack.c.h.b16 %v131
    %v714 = vunpack.c.l.b16 %v132
    %v715 = vunpack.c.h.b16 %v132
    %v716 = vunpack.c.l.b16 %v133
    %v717 = vunpack.c.h.b16 %v133
    %v718 = vunpack.c.l.b16 %v134
    %v719 = vunpack.c.h.b16 %v134
    %v720 = vunpack.c.l.b16 %v135
    %v721 = vunpack.c.h.b16 %v135
    %v722 = vunpack.c.l.b16 %v136
    %v723 = vunpack.c.h.b16 %v136
    %v724 = vunpack.c.l.b16 %v137
    %v725 = vunpack.c.h.b16 %v137
    %v726 = vunpack.c.l.b16 %v138
    %v727 = vunpack.c.h.b16 %v138
    %v728 = vunpack.c.l.b16 %v139
    %v729 = vunpack.c.h.b16 %v139
    %v730 = vunpack.c.l.b16 %v140
    %v731 = vunpack.c.h.b16 %v140
    %v732 = vunpack.c.l.b16 %v141
    %v733 = vunpack.c.h.b16 %v141
    %v734 = vunpack.c.l.b16 %v142
    %v735 = vunpack.c.h.b16 %v142
    %v736 = vunpack.c.l.b16 %v143
    %v737 = vunpack.c.h.b16 %v143
    %v738 = vunpack.c.l.b16 %v144
    %v739 = vunpack.c.h.b16 %v144
    %v740 = vunpack.c.l.b16 %v145
    %v741 = vunpack.c.h.b16 %v145
    %v742 = vunpack.c.l.b16 %v146
    %v743 = vunpack.c.h.b16 %v146
    %v744 = vunpack.c.l.b16 %v147
    %v745 = vunpack.c.h.b16 %v147
    %v746 = vunpack.c.l.b16 %v148
    %v747 = vunpack.c.h.b16 %v148
    %v748 = vunpack.c.l.b16 %v149
    %v749 = vunpack.c.h.b16 %v149
    %v750 = vunpack.c.l.b16 %v150
    %v751 = vunpack.c.h.b16 %v150
    %v752 = vunpack.c.l.b16 %v151
    %v753 = vunpack.c.h.b16 %v151
    %v754 = vunpack.c.l.b16 %v152
    %v755 = vunpack.c.h.b16 %v152
    %v756 = vunpack.c.l.b16 %v153
    %v757 = vunpack.c.h.b16 %v153
    %v758 = vunpack.c.l.b16 %v154
    %v759 = vunpack.c.h.b16 %v154
    %v760 = vunpack.c.l.b16 %v155
    %v761 = vunpack.c.h.b16 %v155
    %v762 = vunpack.c.l.b16 %v156
    %v763 = vunpack.c.h.b16 %v156
    %v764 = vunpack.c.l.b16 %v157
    %v765 = vunpack.c.h.b16 %v157
    %v766 = vunpack.c.l.b16 %v158
    %v767 = vunpack.c.h.b16 %v158
    %v768 = vunpack.c.l.b16 %v159
    %v769 = vunpack.c.h.b16 %v159
    %v770 = vunpack.c.l.b16 %v160
    %v771 = vunpack.c.h.b16 %v160
    %v772 = vunpack.c.l.b16 %v161
    %v773 = vunpack.c.h.b16 %v161
    %v774 = vunpack.c.l.b16 %v162
    %v775 = vunpack.c.h.b16 %v162
    %v776 = vunpack.c.l.b16 %v163
    %v777 = vunpack.c.h.b16 %v163
    %v778 = vunpack.c.l.b16 %v164
    %v779 = vunpack.c.h.b16 %v164
    %v780 = vunpack.c.l.b16 %v165
    %v781 = vunpack.c.h.b16 %v165
    %v782 = vunpack.c.l.b16 %v166
    %v783 = vunpack.c.h.b16 %v166
    %v784 = vunpack.c.l.b16 %v167
    %v785 = vunpack.c.h.b16 %v167
    %v786 = vunpack.c.l.b16 %v168
    %v787 = vunpack.c.h.b16 %v168
    %v788 = vunpack.c.l.b16 %v169
    %v789 = vunpack.c.h.b16 %v169
    %v790 = vunpack.c.l.b16 %v170
    %v791 = vunpack.c.h.b16 %v170
    %v792 = vunpack.c.l.b16 %v171
    %v793 = vunpack.c.h.b16 %v171
    %v794 = vunpack.c.l.b16 %v172
    %v795 = vunpack.c.h.b16 %v172
    %v796 = vunpack.c.l.b16 %v173
    %v797 = vunpack.c.h.b16 %v173
    %v798 = vunpack.c.l.b16 %v174
    %v799 = vunpack.c.h.b16 %v174
    %v800 = vunpack.c.l.b16 %v175
    %v801 = vunpack.c.h.b16 %v175
    %v802 = vunpack.c.l.b16 %v176
    %v803 = vunpack.c.h.b16 %v176
    %v804 = vunpack.c.l.b16 %v177
    %v805 = vunpack.c.h.b16 %v177
    %v806 = vunpack.c.l.b16 %v178
    %v807 = vunpack.c.h.b16 %v178
    %v808 = vunpack.c.l.b16 %v179
    %v809 = vunpack.c.h.b16 %v179
    %v810 = vunpack.c.l.b16 %v180
    %v811 = vunpack.c.h.b16 %v180
    %v812 = vunpack.c.l.b16 %v181
    %v813 = vunpack.c.h.b16 %v181
    %v814 = vunpack.c.l.b16 %v182
    %v815 = vunpack.c.h.b16 %v182
    %v816 = vunpack.c.l.b16 %v183
    %v817 = vunpack.c.h.b16 %v183
    %v818 = vunpack.c.l.b16 %v184
    %v819 = vunpack.c.h.b16 %v184
    %v820 = vunpack.c.l.b16 %v185
    %v821 = vunpack.c.h.b16 %v185
    %v822 = vunpack.c.l.b16 %v186
    %v823 = vunpack.c.h.b16 %v186
    %v824 = vunpack.c.l.b16 %v187
    %v825 = vunpack.c.h.b16 %v187
    %v826 = vunpack.c.l.b16 %v188
    %v827 = vunpack.c.h.b16 %v188
    %v828 = vunpack.c.l.b16 %v189
    %v829 = vunpack.c.h.b16 %v189
    %v830 = vunpack.c.l.b16 %v190
    %v831 = vunpack.c.h.b16 %v190
    %v832 = vunpack.c.l.b16 %v191
    %v833 = vunpack.c.h.b16 %v191
    %v834 = vunpack.c.l.b16 %v192
    %v835 = vunpack.c.h.b16 %v192
    %v836 = vunpack.c.l.b16 %v193
    %v837 = vunpack.c.h.b16 %v193
    %v838 = vunpack.c.l.b16 %v194
    %v839 = vunpack.c.h.b16 %v194
    %v840 = vunpack.c.l.b16 %v195
    %v841 = vunpack.c.h.b16 %v195
    %v842 = vunpack.c.l.b16 %v196
    %v843 = vunpack.c.h.b16 %v196
    %v844 = vunpack.c.l.b16 %v197
    %v845 = vunpack.c.h.b16 %v197
    %v846 = vunpack.c.l.b16 %v198
    %v847 = vunpack.c.h.b16 %v198
    %v848 = vunpack.c.l.b16 %v199
    %v849 = vunpack.c.h.b16 %v199
    %v850 = vunpack.c.l.b16 %v200
    %v851 = vunpack.c.h.b16 %v200
    %v852 = vunpack.c.l.b16 %v201
    %v853 = vunpack.c.h.b16 %v201
    %v854 = vunpack.c.l.b16 %v202
    %v855 = vunpack.c.h.b16 %v202
    %v856 = vunpack.c.l.b16 %v203
    %v857 = vunpack.c.h.b16 %v203
    %v858 = vunpack.c.l.b16 %v204
    %v859 = vunpack.c.h.b16 %v204
    %v860 = vunpack.c.l.b16 %v205
    %v861 = vunpack.c.h.b16 %v205
    %v862 = vunpack.c.l.b16 %v206
    %v863 = vunpack.c.h.b16 %v206
    %v864 = vunpack.c.l.b16 %v207
    %v865 = vunpack.c.h.b16 %v207
    %v866 = vunpack.c.l.b16 %v208
    %v867 = vunpack.c.h.b16 %v208
    %v868 = vunpack.c.l.b16 %v209
    %v869 = vunpack.c.h.b16 %v209
    %v870 = vunpack.c.l.b16 %v210
    %v871 = vunpack.c.h.b16 %v210
    %v872 = vunpack.c.l.b16 %v211
    %v873 = vunpack.c.h.b16 %v211
    %v874 = vunpack.c.l.b16 %v212
    %v875 = vunpack.c.h.b16 %v212
    %v876 = vunpack.c.l.b16 %v213
    %v877 = vunpack.c.h.b16 %v213
    %v878 = vunpack.c.l.b16 %v214
    %v879 = vunpack.c.h.b16 %v214
    %v880 = vunpack.c.l.b16 %v215
    %v881 = vunpack.c.h.b16 %v215
    %v882 = vunpack.c.l.b16 %v216
    %v883 = vunpack.c.h.b16 %v216
    %v884 = vunpack.c.l.b16 %v217
    %v885 = vunpack.c.h.b16 %v217
    %v886 = vunpack.c.l.b16 %v218
    %v887 = vunpack.c.h.b16 %v218
    %v888 = vunpack.c.l.b16 %v219
    %v889 = vunpack.c.h.b16 %v219
    %v890 = vunpack.c.l.b16 %v220
    %v891 = vunpack.c.h.b16 %v220
    %v892 = vunpack.c.l.b16 %v221
    %v893 = vunpack.c.h.b16 %v221
    %v894 = vunpack.c.l.b16 %v222
    %v895 = vunpack.c.h.b16 %v222
    %v896 = vunpack.c.l.b16 %v223
    %v897 = vunpack.c.h.b16 %v223
    %v898 = vunpack.c.l.b16 %v224
    %v899 = vunpack.c.h.b16 %v224
    %v900 = vunpack.c.l.b16 %v225
    %v901 = vunpack.c.h.b16 %v225
    %v902 = vunpack.c.l.b16 %v226
    %v903 = vunpack.c.h.b16 %v226
    %v904 = vunpack.c.l.b16 %v227
    %v905 = vunpack.c.h.b16 %v227
    %v906 = vunpack.c.l.b16 %v228
    %v907 = vunpack.c.h.b16 %v228
    %v908 = vunpack.c.l.b16 %v229
    %v909 = vunpack.c.h.b16 %v229
    %v910 = vunpack.c.l.b16 %v230
    %v911 = vunpack.c.h.b16 %v230
    %v912 = vunpack.c.l.b16 %v231
    %v913 = vunpack.c.h.b16 %v231
    %v914 = vunpack.c.l.b16 %v232
    %v915 = vunpack.c.h.b16 %v232
    %v916 = vunpack.c.l.b16 %v233
    %v917 = vunpack.c.h.b16 %v233
    %v918 = vunpack.c.l.b16 %v234
    %v919 = vunpack.c.h.b16 %v234
    %v920 = vunpack.c.l.b16 %v235
    %v921 = vunpack.c.h.b16 %v235
    %v922 = vunpack.c.l.b16 %v236
    %v923 = vunpack.c.h.b16 %v236
    %v924 = vunpack.c.l.b16 %v237
    %v925 = vunpack.c.h.b16 %v237
    %v926 = vunpack.c.l.b16 %v238
    %v927 = vunpack.c.h.b16 %v238
    %v928 = vunpack.c.l.b16 %v239
    %v929 = vunpack.c.h.b16 %v239
    %v930 = vunpack.c.l.b16 %v240
    %v931 = vunpack.c.h.b16 %v240
    %v932 = vunpack.c.l.b16 %v241
    %v933 = vunpack.c.h.b16 %v241
    %v934 = vunpack.c.l.b16 %v242
    %v935 = vunpack.c.h.b16 %v242
    %v936 = vunpack.c.l.b16 %v243
    %v937 = vunpack.c.h.b16 %v243
    %v938 = vunpack.c.l.b16 %v244
    %v939 = vunpack.c.h.b16 %v244
    %v940 = vunpack.c.l.b16 %v245
    %v941 = vunpack.c.h.b16 %v245
    %v942 = vunpack.c.l.b16 %v246
    %v943 = vunpack.c.h.b16 %v246
    %v944 = vunpack.c.l.b16 %v247
    %v945 = vunpack.c.h.b16 %v247
    %v946 = vunpack.c.l.b16 %v248
    %v947 = vunpack.c.h.b16 %v248
    %v948 = vunpack.c.l.b16 %v249
    %v949 = vunpack.c.h.b16 %v249
    %v950 = vunpack.c.l.b16 %v250
    %v951 = vunpack.c.h.b16 %v250
    %v952 = vunpack.c.l.b16 %v251
    %v953 = vunpack.c.h.b16 %v251
    %v954 = vunpack.c.l.b16 %v252
    %v955 = vunpack.c.h.b16 %v252
    %v956 = vunpack.c.l.b16 %v253
    %v957 = vunpack.c.h.b16 %v253
    %v958 = vunpack.c.l.b16 %v254
    %v959 = vunpack.c.h.b16 %v254
    %v960 = vunpack.c.l.b16 %v255
    %v961 = vunpack.c.h.b16 %v255
    %v962 = vunpack.c.l.b16 %v256
    %v963 = vunpack.c.h.b16 %v256
    %v964 = vunpack.c.l.b16 %v257
    %v965 = vunpack.c.h.b16 %v257
    %v966 = vunpack.c.l.b16 %v258
    %v967 = vunpack.c.h.b16 %v258
    %v968 = vunpack.c.l.b16 %v259
    %v969 = vunpack.c.h.b16 %v259
    %v970 = vunpack.c.l.b16 %v260
    %v971 = vunpack.c.h.b16 %v260
    %v972 = vunpack.c.l.b16 %v261
    %v973 = vunpack.c.h.b16 %v261
    %v974 = vunpack.c.l.b16 %v262
    %v975 = vunpack.c.h.b16 %v262
    %v976 = vunpack.c.l.b16 %v263
    %v977 = vunpack.c.h.b16 %v263
    %v978 = vunpack.c.l.b16 %v264
    %v979 = vunpack.c.h.b16 %v264
    %v980 = vunpack.c.l.b16 %v265
    %v981 = vunpack.c.h.b16 %v265
    %v982 = vunpack.c.l.b16 %v266
    %v983 = vunpack.c.h.b16 %v266
    %v984 = vunpack.c.l.b16 %v267
    %v985 = vunpack.c.h.b16 %v267
    %v986 = vunpack.c.l.b16 %v268
    %v987 = vunpack.c.h.b16 %v268
    %v988 = vunpack.c.l.b16 %v269
    %v989 = vunpack.c.h.b16 %v269
    %v990 = vunpack.c.l.b16 %v270
    %v991 = vunpack.c.h.b16 %v270
    %v992 = vunpack.c.l.b16 %v271
    %v993 = vunpack.c.h.b16 %v271
    %v994 = vunpack.c.l.b16 %v272
    %v995 = vunpack.c.h.b16 %v272
    %v996 = vunpack.c.l.b16 %v273
    %v997 = vunpack.c.h.b16 %v273
    %v998 = vunpack.c.l.b16 %v274
    %v999 = vunpack.c.h.b16 %v274
    %v1000 = vunpack.c.l.b16 %v275
    %v1001 = vunpack.c.h.b16 %v275
    %v1002 = vunpack.c.l.b16 %v276
    %v1003 = vunpack.c.h.b16 %v276
    %v1004 = vunpack.c.l.b16 %v277
    %v1005 = vunpack.c.h.b16 %v277
    %v1006 = vunpack.c.l.b16 %v278
    %v1007 = vunpack.c.h.b16 %v278
    %v1008 = vunpack.c.l.b16 %v279
    %v1009 = vunpack.c.h.b16 %v279
    %v1010 = vunpack.c.l.b16 %v280
    %v1011 = vunpack.c.h.b16 %v280
    %v1012 = vunpack.c.l.b16 %v281
    %v1013 = vunpack.c.h.b16 %v281
    %v1014 = vunpack.c.l.b16 %v282
    %v1015 = vunpack.c.h.b16 %v282
    %v1016 = vunpack.c.l.b16 %v283
    %v1017 = vunpack.c.h.b16 %v283
    %v1018 = vunpack.c.l.b16 %v284
    %v1019 = vunpack.c.h.b16 %v284
    %v1020 = vunpack.c.l.b16 %v285
    %v1021 = vunpack.c.h.b16 %v285
    %v1022 = vunpack.c.l.b16 %v286
    %v1023 = vunpack.c.h.b16 %v286
    %v1024 = vunpack.c.l.b16 %v287
    %v1025 = vunpack.c.h.b16 %v287
    %v1026 = vunpack.c.l.b16 %v288
    %v1027 = vunpack.c.h.b16 %v288
    %v1028 = vunpack.c.l.b16 %v289
    %v1029 = vunpack.c.h.b16 %v289
    %v1030 = vunpack.c.l.b16 %v290
    %v1031 = vunpack.c.h.b16 %v290
    %v1032 = vunpack.c.l.b16 %v291
    %v1033 = vunpack.c.h.b16 %v291
    %v1034 = vunpack.c.l.b16 %v292
    %v1035 = vunpack.c.h.b16 %v292
    %v1036 = vunpack.c.l.b16 %v293
    %v1037 = vunpack.c.h.b16 %v293
    %v1038 = vunpack.c.l.b16 %v294
    %v1039 = vunpack.c.h.b16 %v294
    %v1040 = vunpack.c.l.b16 %v295
    %v1041 = vunpack.c.h.b16 %v295
    %v1042 = vunpack.c.l.b16 %v296
    %v1043 = vunpack.c.h.b16 %v296
    %v1044 = vunpack.c.l.b16 %v297
    %v1045 = vunpack.c.h.b16 %v297
    %v1046 = vunpack.c.l.b16 %v298
    %v1047 = vunpack.c.h.b16 %v298
    %v1048 = vunpack.c.l.b16 %v299
    %v1049 = vunpack.c.h.b16 %v299
    %v1050 = vunpack.c.l.b16 %v300
    %v1051 = vunpack.c.h.b16 %v300
    %v1052 = vunpack.c.l.b16 %v301
    %v1053 = vunpack.c.h.b16 %v301
    %v1054 = vunpack.c.l.b16 %v302
    %v1055 = vunpack.c.h.b16 %v302
    %v1056 = vunpack.c.l.b16 %v303
    %v1057 = vunpack.c.h.b16 %v303
    %v1058 = vunpack.c.l.b16 %v304
    %v1059 = vunpack.c.h.b16 %v304
    %v1060 = vunpack.c.l.b16 %v305
    %v1061 = vunpack.c.h.b16 %v305
    %v1062 = vunpack.c.l.b16 %v306
    %v1063 = vunpack.c.h.b16 %v306
    %v1064 = vunpack.c.l.b16 %v307
    %v1065 = vunpack.c.h.b16 %v307
    %v1066 = vunpack.c.l.b16 %v308
    %v1067 = vunpack.c.h.b16 %v308
    %v1068 = vunpack.c.l.b16 %v309
    %v1069 = vunpack.c.h.b16 %v309
    %v1070 = vunpack.c.l.b16 %v310
    %v1071 = vunpack.c.h.b16 %v310
    %v1072 = vunpack.c.l.b16 %v311
    %v1073 = vunpack.c.h.b16 %v311
    %v1074 = vunpack.c.l.b16 %v312
    %v1075 = vunpack.c.h.b16 %v312
    %v1076 = vunpack.c.l.b16 %v313
    %v1077 = vunpack.c.h.b16 %v313
    %v1078 = vunpack.c.l.b16 %v314
    %v1079 = vunpack.c.h.b16 %v314
    %v1080 = vunpack.c.l.b16 %v315
    %v1081 = vunpack.c.h.b16 %v315
    %v1082 = vunpack.c.l.b16 %v316
    %v1083 = vunpack.c.h.b16 %v316
    %v1084 = vunpack.c.l.b16 %v317
    %v1085 = vunpack.c.h.b16 %v317
    %v1086 = vunpack.c.l.b16 %v318
    %v1087 = vunpack.c.h.b16 %v318
    %v1088 = vunpack.c.l.b16 %v319
    %v1089 = vunpack.c.h.b16 %v319
    %v1090 = vunpack.c.l.b16 %v320
    %v1091 = vunpack.c.h.b16 %v320
    %v1092 = vunpack.c.l.b16 %v321
    %v1093 = vunpack.c.h.b16 %v321
    %v1094 = vunpack.c.l.b16 %v322
    %v1095 = vunpack.c.h.b16 %v322
    %v1096 = vunpack.c.l.b16 %v323
    %v1097 = vunpack.c.h.b16 %v323
    %v1098 = vunpack.c.l.b16 %v324
    %v1099 = vunpack.c.h.b16 %v324
    %v1100 = vunpack.c.l.b16 %v325
    %v1101 = vunpack.c.h.b16 %v325
    %v1102 = vunpack.c.l.b16 %v326
    %v1103 = vunpack.c.h.b16 %v326
    %v1104 = vunpack.c.l.b16 %v327
    %v1105 = vunpack.c.h.b16 %v327
    %v1106 = vunpack.c.l.b16 %v328
    %v1107 = vunpack.c.h.b16 %v328
    %v1108 = vunpack.c.l.b16 %v329
    %v1109 = vunpack.c.h.b16 %v329
    %v1110 = vunpack.c.l.b16 %v330
    %v1111 = vunpack.c.h.b16 %v330
    %v1112 = vunpack.c.l.b16 %v331
    %v1113 = vunpack.c.h.b16 %v331
    %v1114 = vunpack.c.l.b16 %v332
    %v1115 = vunpack.c.h.b16 %v332
    %v1116 = vunpack.c.l.b16 %v333
    %v1117 = vunpack.c.h.b16 %v333
    %v1118 = vunpack.c.l.b16 %v334
    %v1119 = vunpack.c.h.b16 %v334
    %v1120 = vunpack.c.l.b16 %v335
    %v1121 = vunpack.c.h.b16 %v335
    %v1122 = vunpack.c.l.b16 %v336
    %v1123 = vunpack.c.h.b16 %v336
    %v1124 = vunpack.c.l.b16 %v337
    %v1125 = vunpack.c.h.b16 %v337
    %v1126 = vunpack.c.l.b16 %v338
    %v1127 = vunpack.c.h.b16 %v338
    %v1128 = vunpack.c.l.b16 %v339
    %v1129 = vunpack.c.h.b16 %v339
    %v1130 = vunpack.c.l.b16 %v340
    %v1131 = vunpack.c.h.b16 %v340
    %v1132 = vunpack.c.l.b16 %v341
    %v1133 = vunpack.c.h.b16 %v341
    %v1134 = vunpack.c.l.b16 %v342
    %v1135 = vunpack.c.h.b16 %v342
    %v1136 = vunpack.c.l.b16 %v343
    %v1137 = vunpack.c.h.b16 %v343
    %v1138 = vunpack.c.l.b16 %v344
    %v1139 = vunpack.c.h.b16 %v344
    %v1140 = vunpack.c.l.b16 %v345
    %v1141 = vunpack.c.h.b16 %v345
    %v1142 = vunpack.c.l.b16 %v346
    %v1143 = vunpack.c.h.b16 %v346
    %v1144 = vunpack.c.l.b16 %v347
    %v1145 = vunpack.c.h.b16 %v347
    %v1146 = vunpack.c.l.b16 %v348
    %v1147 = vunpack.c.h.b16 %v348
    %v1148 = vunpack.c.l.b16 %v349
    %v1149 = vunpack.c.h.b16 %v349
    %v1150 = vunpack.c.l.b16 %v350
    %v1151 = vunpack.c.h.b16 %v350
    %v1152 = vunpack.c.l.b16 %v351
    %v1153 = vunpack.c.h.b16 %v351
    %v1154 = vunpack.c.l.b16 %v352
    %v1155 = vunpack.c.h.b16 %v352
    %v1156 = vunpack.c.l.b16 %v353
    %v1157 = vunpack.c.h.b16 %v353
    %v1158 = vunpack.c.l.b16 %v354
    %v1159 = vunpack.c.h.b16 %v354
    %v1160 = vunpack.c.l.b16 %v355
    %v1161 = vunpack.c.h.b16 %v355
    %v1162 = vunpack.c.l.b16 %v356
    %v1163 = vunpack.c.h.b16 %v356
    %v1164 = vunpack.c.l.b16 %v357
    %v1165 = vunpack.c.h.b16 %v357
    %v1166 = vunpack.c.l.b16 %v358
    %v1167 = vunpack.c.h.b16 %v358
    %v1168 = vunpack.c.l.b16 %v359
    %v1169 = vunpack.c.h.b16 %v359
    %v1170 = vunpack.c.l.b16 %v360
    %v1171 = vunpack.c.h.b16 %v360
    %v1172 = vunpack.c.l.b16 %v361
    %v1173 = vunpack.c.h.b16 %v361
    %v1174 = vunpack.c.l.b16 %v362
    %v1175 = vunpack.c.h.b16 %v362
    %v1176 = vunpack.c.l.b16 %v363
    %v1177 = vunpack.c.h.b16 %v363
    %v1178 = vunpack.c.l.b16 %v364
    %v1179 = vunpack.c.h.b16 %v364
    %v1180 = vunpack.c.l.b16 %v365
    %v1181 = vunpack.c.h.b16 %v365
    %v1182 = vunpack.c.l.b16 %v366
    %v1183 = vunpack.c.h.b16 %v366
    %v1184 = vunpack.c.l.b16 %v367
    %v1185 = vunpack.c.h.b16 %v367
    %v1186 = vunpack.c.l.b16 %v368
    %v1187 = vunpack.c.h.b16 %v368
    %v1188 = vunpack.c.l.b16 %v369
    %v1189 = vunpack.c.h.b16 %v369
    %v1190 = vunpack.c.l.b16 %v370
    %v1191 = vunpack.c.h.b16 %v370
    %v1192 = vunpack.c.l.b16 %v371
    %v1193 = vunpack.c.h.b16 %v371
    %v1194 = vunpack.c.l.b16 %v372
    %v1195 = vunpack.c.h.b16 %v372
    %v1196 = vunpack.c.l.b16 %v373
    %v1197 = vunpack.c.h.b16 %v373
    %v1198 = vpack.c.b16 %v694, %v686
    %v1199 = vpack.c.b16 %v695, %v687
    %v1200 = vpack.c.b16 %v696, %v688
    %v1201 = vpack.c.b16 %v697, %v689
    %v1202 = vpack.c.b16 %v698, %v690
    %v1203 = vpack.c.b16 %v699, %v691
    %v1204 = vpack.c.b16 %v700, %v692
    %v1205 = vpack.c.b16 %v701, %v693
    %v1206 = vpack.c.b16 %v710, %v702
    %v1207 = vpack.c.b16 %v711, %v703
    %v1208 = vpack.c.b16 %v712, %v704
    %v1209 = vpack.c.b16 %v713, %v705
    %v1210 = vpack.c.b16 %v714, %v706
    %v1211 = vpack.c.b16 %v715, %v707
    %v1212 = vpack.c.b16 %v716, %v708
    %v1213 = vpack.c.b16 %v717, %v709
    %v1214 = vpack.c.b16 %v726, %v718
    %v1215 = vpack.c.b16 %v727, %v719
    %v1216 = vpack.c.b16 %v728, %v720
    %v1217 = vpack.c.b16 %v729, %v721
    %v1218 = vpack.c.b16 %v730, %v722
    %v1219 = vpack.c.b16 %v731, %v723
    %v1220 = vpack.c.b16 %v732, %v724
    %v1221 = vpack.c.b16 %v733, %v725
    %v1222 = vpack.c.b16 %v742, %v734
    %v1223 = vpack.c.b16 %v743, %v735
    %v1224 = vpack.c.b16 %v744, %v736
    %v1225 = vpack.c.b16 %v745, %v737
    %v1226 = vpack.c.b16 %v746, %v738
    %v1227 = vpack.c.b16 %v747, %v739
    %v1228 = vpack.c.b16 %v748, %v740
    %v1229 = vpack.c.b16 %v749, %v741
    %v1230 = vpack.c.b16 %v758, %v750
    %v1231 = vpack.c.b16 %v759, %v751
    %v1232 = vpack.c.b16 %v760, %v752
    %v1233 = vpack.c.b16 %v761, %v753
    %v1234 = vpack.c.b16 %v762, %v754
    %v1235 = vpack.c.b16 %v763, %v755
    %v1236 = vpack.c.b16 %v764, %v756
    %v1237 = vpack.c.b16 %v765, %v757
    %v1238 = vpack.c.b16 %v774, %v766
    %v1239 = vpack.c.b16 %v775, %v767
    %v1240 = vpack.c.b16 %v776, %v768
    %v1241 = vpack.c.b16 %v777, %v769
    %v1242 = vpack.c.b16 %v778, %v770
    %v1243 = vpack.c.b16 %v779, %v771
    %v1244 = vpack.c.b16 %v780, %v772
    %v1245 = vpack.c.b16 %v781, %v773
    %v1246 = vpack.c.b16 %v790, %v782
    %v1247 = vpack.c.b16 %v791, %v783
    %v1248 = vpack.c.b16 %v792, %v784
    %v1249 = vpack.c.b16 %v793, %v785
    %v1250 = vpack.c.b16 %v794, %v786
    %v1251 = vpack.c.b16 %v795, %v787
    %v1252 = vpack.c.b16 %v796, %v788
    %v1253 = vpack.c.b16 %v797, %v789
    %v1254 = vpack.c.b16 %v806, %v798
    %v1255 = vpack.c.b16 %v807, %v799
    %v1256 = vpack.c.b16 %v808, %v800
    %v1257 = vpack.c.b16 %v809, %v801
    %v1258 = vpack.c.b16 %v810, %v802
    %v1259 = vpack.c.b16 %v811, %v803
    %v1260 = vpack.c.b16 %v812, %v804
    %v1261 = vpack.c.b16 %v813, %v805
    %v1262 = vpack.c.b16 %v822, %v814
    %v1263 = vpack.c.b16 %v823, %v815
    %v1264 = vpack.c.b16 %v824, %v816
    %v1265 = vpack.c.b16 %v825, %v817
    %v1266 = vpack.c.b16 %v826, %v818
    %v1267 = vpack.c.b16 %v827, %v819
    %v1268 = vpack.c.b16 %v828, %v820
    %v1269 = vpack.c.b16 %v829, %v821
    %v1270 = vpack.c.b16 %v838, %v830
    %v1271 = vpack.c.b16 %v839, %v831
    %v1272 = vpack.c.b16 %v840, %v832
    %v1273 = vpack.c.b16 %v841, %v833
    %v1274 = vpack.c.b16 %v842, %v834
    %v1275 = vpack.c.b16 %v843, %v835
    %v1276 = vpack.c.b16 %v844, %v836
    %v1277 = vpack.c.b16 %v845, %v837
    %v1278 = vpack.c.b16 %v854, %v846
    %v1279 = vpack.c.b16 %v855, %v847
    %v1280 = vpack.c.b16 %v856, %v848
    %v1281 = vpack.c.b16 %v857, %v849
    %v1282 = vpack.c.b16 %v858, %v850
    %v1283 = vpack.c.b16 %v859, %v851
    %v1284 = vpack.c.b16 %v860, %v852
    %v1285 = vpack.c.b16 %v861, %v853
    %v1286 = vpack.c.b16 %v870, %v862
    %v1287 = vpack.c.b16 %v871, %v863
    %v1288 = vpack.c.b16 %v872, %v864
    %v1289 = vpack.c.b16 %v873, %v865
    %v1290 = vpack.c.b16 %v874, %v866
    %v1291 = vpack.c.b16 %v875, %v867
    %v1292 = vpack.c.b16 %v876, %v868
    %v1293 = vpack.c.b16 %v877, %v869
    %v1294 = vpack.c.b16 %v886, %v878
    %v1295 = vpack.c.b16 %v887, %v879
    %v1296 = vpack.c.b16 %v888, %v880
    %v1297 = vpack.c.b16 %v889, %v881
    %v1298 = vpack.c.b16 %v890, %v882
    %v1299 = vpack.c.b16 %v891, %v883
    %v1300 = vpack.c.b16 %v892, %v884
    %v1301 = vpack.c.b16 %v893, %v885
    %v1302 = vpack.c.b16 %v902, %v894
    %v1303 = vpack.c.b16 %v903, %v895
    %v1304 = vpack.c.b16 %v904, %v896
    %v1305 = vpack.c.b16 %v905, %v897
    %v1306 = vpack.c.b16 %v906, %v898
    %v1307 = vpack.c.b16 %v907, %v899
    %v1308 = vpack.c.b16 %v908, %v900
    %v1309 = vpack.c.b16 %v909, %v901
    %v1310 = vpack.c.b16 %v918, %v910
    %v1311 = vpack.c.b16 %v919, %v911
    %v1312 = vpack.c.b16 %v920, %v912
    %v1313 = vpack.c.b16 %v921, %v913
    %v1314 = vpack.c.b16 %v922, %v914
    %v1315 = vpack.c.b16 %v923, %v915
    %v1316 = vpack.c.b16 %v924, %v916
    %v1317 = vpack.c.b16 %v925, %v917
    %v1318 = vpack.c.b16 %v934, %v926
    %v1319 = vpack.c.b16 %v935, %v927
    %v1320 = vpack.c.b16 %v936, %v928
    %v1321 = vpack.c.b16 %v937, %v929
    %v1322 = vpack.c.b16 %v938, %v930
    %v1323 = vpack.c.b16 %v939, %v931
    %v1324 = vpack.c.b16 %v940, %v932
    %v1325 = vpack.c.b16 %v941, %v933
    %v1326 = vpack.c.b16 %v950, %v942
    %v1327 = vpack.c.b16 %v951, %v943
    %v1328 = vpack.c.b16 %v952, %v944
    %v1329 = vpack.c.b16 %v953, %v945
    %v1330 = vpack.c.b16 %v954, %v946
    %v1331 = vpack.c.b16 %v955, %v947
    %v1332 = vpack.c.b16 %v956, %v948
    %v1333 = vpack.c.b16 %v957, %v949
    %v1334 = vpack.c.b16 %v966, %v958
    %v1335 = vpack.c.b16 %v967, %v959
    %v1336 = vpack.c.b16 %v968, %v960
    %v1337 = vpack.c.b16 %v969, %v961
    %v1338 = vpack.c.b16 %v970, %v962
    %v1339 = vpack.c.b16 %v971, %v963
    %v1340 = vpack.c.b16 %v972, %v964
    %v1341 = vpack.c.b16 %v973, %v965
    %v1342 = vpack.c.b16 %v982, %v974
    %v1343 = vpack.c.b16 %v983, %v975
    %v1344 = vpack.c.b16 %v984, %v976
    %v1345 = vpack.c.b16 %v985, %v977
    %v1346 = vpack.c.b16 %v986, %v978
    %v1347 = vpack.c.b16 %v987, %v979
    %v1348 = vpack.c.b16 %v988, %v980
    %v1349 = vpack.c.b16 %v989, %v981
    %v1350 = vpack.c.b16 %v998, %v990
    %v1351 = vpack.c.b16 %v999, %v991
    %v1352 = vpack.c.b16 %v1000, %v992
    %v1353 = vpack.c.b16 %v1001, %v993
    %v1354 = vpack.c.b16 %v1002, %v994
    %v1355 = vpack.c.b16 %v1003, %v995
    %v1356 = vpack.c.b16 %v1004, %v996
    %v1357 = vpack.c.b16 %v1005, %v997
    %v1358 = vpack.c.b16 %v1014, %v1006
    %v1359 = vpack.c.b16 %v1015, %v1007
    %v1360 = vpack.c.b16 %v1016, %v1008
    %v1361 = vpack.c.b16 %v1017, %v1009
    %v1362 = vpack.c.b16 %v1018, %v1010
    %v1363 = vpack.c.b16 %v1019, %v1011
    %v1364 = vpack.c.b16 %v1020, %v1012
    %v1365 = vpack.c.b16 %v1021, %v1013
    %v1366 = vpack.c.b16 %v1030, %v1022
    %v1367 = vpack.c.b16 %v1031, %v1023
    %v1368 = vpack.c.b16 %v1032, %v1024
    %v1369 = vpack.c.b16 %v1033, %v1025
    %v1370 = vpack.c.b16 %v1034, %v1026
    %v1371 = vpack.c.b16 %v1035, %v1027
    %v1372 = vpack.c.b16 %v1036, %v1028
    %v1373 = vpack.c.b16 %v1037, %v1029
    %v1374 = vpack.c.b16 %v1046, %v1038
    %v1375 = vpack.c.b16 %v1047, %v1039
    %v1376 = vpack.c.b16 %v1048, %v1040
    %v1377 = vpack.c.b16 %v1049, %v1041
    %v1378 = vpack.c.b16 %v1050, %v1042
    %v1379 = vpack.c.b16 %v1051, %v1043
    %v1380 = vpack.c.b16 %v1052, %v1044
    %v1381 = vpack.c.b16 %v1053, %v1045
    %v1382 = vpack.c.b16 %v1062, %v1054
    %v1383 = vpack.c.b16 %v1063, %v1055
    %v1384 = vpack.c.b16 %v1064, %v1056
    %v1385 = vpack.c.b16 %v1065, %v1057
    %v1386 = vpack.c.b16 %v1066, %v1058
    %v1387 = vpack.c.b16 %v1067, %v1059
    %v1388 = vpack.c.b16 %v1068, %v1060
    %v1389 = vpack.c.b16 %v1069, %v1061
    %v1390 = vpack.c.b16 %v1078, %v1070
    %v1391 = vpack.c.b16 %v1079, %v1071
    %v1392 = vpack.c.b16 %v1080, %v1072
    %v1393 = vpack.c.b16 %v1081, %v1073
    %v1394 = vpack.c.b16 %v1082, %v1074
    %v1395 = vpack.c.b16 %v1083, %v1075
    %v1396 = vpack.c.b16 %v1084, %v1076
    %v1397 = vpack.c.b16 %v1085, %v1077
    %v1398 = vpack.c.b16 %v1094, %v1086
    %v1399 = vpack.c.b16 %v1095, %v1087
    %v1400 = vpack.c.b16 %v1096, %v1088
    %v1401 = vpack.c.b16 %v1097, %v1089
    %v1402 = vpack.c.b16 %v1098, %v1090
    %v1403 = vpack.c.b16 %v1099, %v1091
    %v1404 = vpack.c.b16 %v1100, %v1092
    %v1405 = vpack.c.b16 %v1101, %v1093
    %v1406 = vpack.c.b16 %v1110, %v1102
    %v1407 = vpack.c.b16 %v1111, %v1103
    %v1408 = vpack.c.b16 %v1112, %v1104
    %v1409 = vpack.c.b16 %v1113, %v1105
    %v1410 = vpack.c.b16 %v1114, %v1106
    %v1411 = vpack.c.b16 %v1115, %v1107
    %v1412 = vpack.c.b16 %v1116, %v1108
    %v1413 = vpack.c.b16 %v1117, %v1109
    %v1414 = vpack.c.b16 %v1126, %v1118
    %v1415 = vpack.c.b16 %v1127, %v1119
    %v1416 = vpack.c.b16 %v1128, %v1120
    %v1417 = vpack.c.b16 %v1129, %v1121
    %v1418 = vpack.c.b16 %v1130, %v1122
    %v1419 = vpack.c.b16 %v1131, %v1123
    %v1420 = vpack.c.b16 %v1132, %v1124
    %v1421 = vpack.c.b16 %v1133, %v1125
    %v1422 = vpack.c.b16 %v1142, %v1134
    %v1423 = vpack.c.b16 %v1143, %v1135
    %v1424 = vpack.c.b16 %v1144, %v1136
    %v1425 = vpack.c.b16 %v1145, %v1137
    %v1426 = vpack.c.b16 %v1146, %v1138
    %v1427 = vpack.c.b16 %v1147, %v1139
    %v1428 = vpack.c.b16 %v1148, %v1140
    %v1429 = vpack.c.b16 %v1149, %v1141
    %v1430 = vpack.c.b16 %v1158, %v1150
    %v1431 = vpack.c.b16 %v1159, %v1151
    %v1432 = vpack.c.b16 %v1160, %v1152
    %v1433 = vpack.c.b16 %v1161, %v1153
    %v1434 = vpack.c.b16 %v1162, %v1154
    %v1435 = vpack.c.b16 %v1163, %v1155
    %v1436 = vpack.c.b16 %v1164, %v1156
    %v1437 = vpack.c.b16 %v1165, %v1157
    %v1438 = vpack.c.b16 %v1174, %v1166
    %v1439 = vpack.c.b16 %v1175, %v1167
    %v1440 = vpack.c.b16 %v1176, %v1168
    %v1441 = vpack.c.b16 %v1177, %v1169
    %v1442 = vpack.c.b16 %v1178, %v1170
    %v1443 = vpack.c.b16 %v1179, %v1171
    %v1444 = vpack.c.b16 %v1180, %v1172
    %v1445 = vpack.c.b16 %v1181, %v1173
    %v1446 = vpack.c.b16 %v1190, %v1182
    %v1447 = vpack.c.b16 %v1191, %v1183
    %v1448 = vpack.c.b16 %v1192, %v1184
    %v1449 = vpack.c.b16 %v1193, %v1185
    %v1450 = vpack.c.b16 %v1194, %v1186
    %v1451 = vpack.c.b16 %v1195, %v1187
    %v1452 = vpack.c.b16 %v1196, %v1188
    %v1453 = vpack.c.b16 %v1197, %v1189
    %1710 = vmatprep.subr.bf16.mxu0 %v1199
    %1711 = vmatpush1.bf16.msra.mxu0 %v1198
    %1712 = vmatprep.subr.bf16.mxu0 %v1207
    %1713 = vmatpush1.bf16.msra.mxu0 %v1206
    %1714 = vmatprep.subr.bf16.mxu0 %v1215
    %1715 = vmatpush1.bf16.msra.mxu0 %v1214
    %1716 = vmatprep.subr.bf16.mxu0 %v1223
    %1717 = vmatpush1.bf16.msra.mxu0 %v1222
    %1718 = vmatprep.subr.bf16.mxu0 %v1231
    %1719 = vmatpush1.bf16.msra.mxu0 %v1230
    %1720 = vmatprep.subr.bf16.mxu0 %v1239
    %1721 = vmatpush1.bf16.msra.mxu0 %v1238
    %1722 = vmatprep.subr.bf16.mxu0 %v1247
    %1723 = vmatpush1.bf16.msra.mxu0 %v1246
    %1724 = vmatprep.subr.bf16.mxu0 %v1255
    %1725 = vmatpush1.bf16.msra.mxu0 %v1254
    %1726 = vmatprep.subr.bf16.mxu0 %v1263
    %1727 = vmatpush1.bf16.msra.mxu0 %v1262
    %1728 = vmatprep.subr.bf16.mxu0 %v1271
    %1729 = vmatpush1.bf16.msra.mxu0 %v1270
    %1730 = vmatprep.subr.bf16.mxu0 %v1279
    %1731 = vmatpush1.bf16.msra.mxu0 %v1278
    %1732 = vmatprep.subr.bf16.mxu0 %v1287
    %1733 = vmatpush1.bf16.msra.mxu0 %v1286
    %1734 = vmatprep.subr.bf16.mxu0 %v1295
    %1735 = vmatpush1.bf16.msra.mxu0 %v1294
    %1736 = vmatprep.subr.bf16.mxu0 %v1303
    %1737 = vmatpush1.bf16.msra.mxu0 %v1302
    %1738 = vmatprep.subr.bf16.mxu0 %v1311
    %1739 = vmatpush1.bf16.msra.mxu0 %v1310
    %1740 = vmatprep.subr.bf16.mxu0 %v1319
    %1741 = vmatpush1.bf16.msra.mxu0 %v1318
    %1742 = vmatprep.mubr.bf16.mxu0 %v423
    %1743 = vmatmul.mubr.bf16.gmra.mrb[0].mxu0 %v422
    %v1744 = vpop.f32.mrb[0].mxu0
    %v1745 = vadd.f32 %v379, %v1744
    %v1746 = vpop.f32.mrb[0].mxu0
    %v1747 = vadd.f32 %v383, %v1746
    %v1748 = vpop.f32.mrb[0].mxu0
    %v1749 = vpop.f32.mrb[0].mxu0
    %1750 = vdwg.mxu0
    %1751 = vmatprep.subr.bf16.mxu0 %v1327
    %1752 = vmatpush1.bf16.msra.mxu0 %v1326
    %1753 = vmatprep.subr.bf16.mxu0 %v1335
    %1754 = vmatpush1.bf16.msra.mxu0 %v1334
    %1755 = vmatprep.subr.bf16.mxu0 %v1343
    %1756 = vmatpush1.bf16.msra.mxu0 %v1342
    %1757 = vmatprep.subr.bf16.mxu0 %v1351
    %1758 = vmatpush1.bf16.msra.mxu0 %v1350
    %1759 = vmatprep.subr.bf16.mxu0 %v1359
    %1760 = vmatpush1.bf16.msra.mxu0 %v1358
    %1761 = vmatprep.subr.bf16.mxu0 %v1367
    %1762 = vmatpush1.bf16.msra.mxu0 %v1366
    %1763 = vmatprep.subr.bf16.mxu0 %v1375
    %1764 = vmatpush1.bf16.msra.mxu0 %v1374
    %1765 = vmatprep.subr.bf16.mxu0 %v1383
    %1766 = vmatpush1.bf16.msra.mxu0 %v1382
    %1767 = vmatprep.subr.bf16.mxu0 %v1391
    %1768 = vmatpush1.bf16.msra.mxu0 %v1390
    %1769 = vmatprep.subr.bf16.mxu0 %v1399
    %1770 = vmatpush1.bf16.msra.mxu0 %v1398
    %1771 = vmatprep.subr.bf16.mxu0 %v1407
    %1772 = vmatpush1.bf16.msra.mxu0 %v1406
    %1773 = vmatprep.subr.bf16.mxu0 %v1415
    %1774 = vmatpush1.bf16.msra.mxu0 %v1414
    %1775 = vmatprep.subr.bf16.mxu0 %v1423
    %1776 = vmatpush1.bf16.msra.mxu0 %v1422
    %1777 = vmatprep.subr.bf16.mxu0 %v1431
    %1778 = vmatpush1.bf16.msra.mxu0 %v1430
    %1779 = vmatprep.subr.bf16.mxu0 %v1439
    %1780 = vmatpush1.bf16.msra.mxu0 %v1438
    %1781 = vmatprep.subr.bf16.mxu0 %v1447
    %1782 = vmatpush1.bf16.msra.mxu0 %v1446
    %1783 = vmatprep.mubr.bf16.mxu0 %v425
    %1784 = vmatmul.mubr.bf16.gmra.mrb[0].mxu0 %v424
    %v1785 = vpop.f32.mrb[0].mxu0
    %v1786 = vadd.f32 %v1745, %v1785
    %v1787 = vpop.f32.mrb[0].mxu0
    %v1788 = vadd.f32 %v1747, %v1787
    %v1789 = vpop.f32.mrb[0].mxu0
    %v1790 = vpop.f32.mrb[0].mxu0
    %1791 = vdwg.mxu0
    %1792 = vmatprep.subr.bf16.mxu0 %v1201
    %1793 = vmatpush1.bf16.msra.mxu0 %v1200
    %1794 = vmatprep.subr.bf16.mxu0 %v1209
    %1795 = vmatpush1.bf16.msra.mxu0 %v1208
    %1796 = vmatprep.subr.bf16.mxu0 %v1217
    %1797 = vmatpush1.bf16.msra.mxu0 %v1216
    %1798 = vmatprep.subr.bf16.mxu0 %v1225
    %1799 = vmatpush1.bf16.msra.mxu0 %v1224
    %1800 = vmatprep.subr.bf16.mxu0 %v1233
    %1801 = vmatpush1.bf16.msra.mxu0 %v1232
    %1802 = vmatprep.subr.bf16.mxu0 %v1241
    %1803 = vmatpush1.bf16.msra.mxu0 %v1240
    %1804 = vmatprep.subr.bf16.mxu0 %v1249
    %1805 = vmatpush1.bf16.msra.mxu0 %v1248
    %1806 = vmatprep.subr.bf16.mxu0 %v1257
    %1807 = vmatpush1.bf16.msra.mxu0 %v1256
    %1808 = vmatprep.subr.bf16.mxu0 %v1265
    %1809 = vmatpush1.bf16.msra.mxu0 %v1264
    %1810 = vmatprep.subr.bf16.mxu0 %v1273
    %1811 = vmatpush1.bf16.msra.mxu0 %v1272
    %1812 = vmatprep.subr.bf16.mxu0 %v1281
    %1813 = vmatpush1.bf16.msra.mxu0 %v1280
    %1814 = vmatprep.subr.bf16.mxu0 %v1289
    %1815 = vmatpush1.bf16.msra.mxu0 %v1288
    %1816 = vmatprep.subr.bf16.mxu0 %v1297
    %1817 = vmatpush1.bf16.msra.mxu0 %v1296
    %1818 = vmatprep.subr.bf16.mxu0 %v1305
    %1819 = vmatpush1.bf16.msra.mxu0 %v1304
    %1820 = vmatprep.subr.bf16.mxu0 %v1313
    %1821 = vmatpush1.bf16.msra.mxu0 %v1312
    %1822 = vmatprep.subr.bf16.mxu0 %v1321
    %1823 = vmatpush1.bf16.msra.mxu0 %v1320
    %1824 = vmatprep.mubr.bf16.mxu0 %v423
    %1825 = vmatmul.mubr.bf16.gmra.mrb[0].mxu0 %v422
    %v1826 = vpop.f32.mrb[0].mxu0
    %v1827 = vadd.f32 %v387, %v1826
    %v1828 = vpop.f32.mrb[0].mxu0
    %v1829 = vadd.f32 %v391, %v1828
    %v1830 = vpop.f32.mrb[0].mxu0
    %v1831 = vpop.f32.mrb[0].mxu0
    %1832 = vdwg.mxu0
    %1833 = vmatprep.subr.bf16.mxu0 %v1329
    %1834 = vmatpush1.bf16.msra.mxu0 %v1328
    %1835 = vmatprep.subr.bf16.mxu0 %v1337
    %1836 = vmatpush1.bf16.msra.mxu0 %v1336
    %1837 = vmatprep.subr.bf16.mxu0 %v1345
    %1838 = vmatpush1.bf16.msra.mxu0 %v1344
    %1839 = vmatprep.subr.bf16.mxu0 %v1353
    %1840 = vmatpush1.bf16.msra.mxu0 %v1352
    %1841 = vmatprep.subr.bf16.mxu0 %v1361
    %1842 = vmatpush1.bf16.msra.mxu0 %v1360
    %1843 = vmatprep.subr.bf16.mxu0 %v1369
    %1844 = vmatpush1.bf16.msra.mxu0 %v1368
    %1845 = vmatprep.subr.bf16.mxu0 %v1377
    %1846 = vmatpush1.bf16.msra.mxu0 %v1376
    %1847 = vmatprep.subr.bf16.mxu0 %v1385
    %1848 = vmatpush1.bf16.msra.mxu0 %v1384
    %1849 = vmatprep.subr.bf16.mxu0 %v1393
    %1850 = vmatpush1.bf16.msra.mxu0 %v1392
    %1851 = vmatprep.subr.bf16.mxu0 %v1401
    %1852 = vmatpush1.bf16.msra.mxu0 %v1400
    %1853 = vmatprep.subr.bf16.mxu0 %v1409
    %1854 = vmatpush1.bf16.msra.mxu0 %v1408
    %1855 = vmatprep.subr.bf16.mxu0 %v1417
    %1856 = vmatpush1.bf16.msra.mxu0 %v1416
    %1857 = vmatprep.subr.bf16.mxu0 %v1425
    %1858 = vmatpush1.bf16.msra.mxu0 %v1424
    %1859 = vmatprep.subr.bf16.mxu0 %v1433
    %1860 = vmatpush1.bf16.msra.mxu0 %v1432
    %1861 = vmatprep.subr.bf16.mxu0 %v1441
    %1862 = vmatpush1.bf16.msra.mxu0 %v1440
    %1863 = vmatprep.subr.bf16.mxu0 %v1449
    %1864 = vmatpush1.bf16.msra.mxu0 %v1448
    %1865 = vmatprep.mubr.bf16.mxu0 %v425
    %1866 = vmatmul.mubr.bf16.gmra.mrb[0].mxu0 %v424
    %v1867 = vpop.f32.mrb[0].mxu0
    %v1868 = vadd.f32 %v1827, %v1867
    %v1869 = vpop.f32.mrb[0].mxu0
    %v1870 = vadd.f32 %v1829, %v1869
    %v1871 = vpop.f32.mrb[0].mxu0
    %v1872 = vpop.f32.mrb[0].mxu0
    %1873 = vdwg.mxu0
    %1874 = vmatprep.subr.bf16.mxu0 %v1203
    %1875 = vmatpush1.bf16.msra.mxu0 %v1202
    %1876 = vmatprep.subr.bf16.mxu0 %v1211
    %1877 = vmatpush1.bf16.msra.mxu0 %v1210
    %1878 = vmatprep.subr.bf16.mxu0 %v1219
    %1879 = vmatpush1.bf16.msra.mxu0 %v1218
    %1880 = vmatprep.subr.bf16.mxu0 %v1227
    %1881 = vmatpush1.bf16.msra.mxu0 %v1226
    %1882 = vmatprep.subr.bf16.mxu0 %v1235
    %1883 = vmatpush1.bf16.msra.mxu0 %v1234
    %1884 = vmatprep.subr.bf16.mxu0 %v1243
    %1885 = vmatpush1.bf16.msra.mxu0 %v1242
    %1886 = vmatprep.subr.bf16.mxu0 %v1251
    %1887 = vmatpush1.bf16.msra.mxu0 %v1250
    %1888 = vmatprep.subr.bf16.mxu0 %v1259
    %1889 = vmatpush1.bf16.msra.mxu0 %v1258
    %1890 = vmatprep.subr.bf16.mxu0 %v1267
    %1891 = vmatpush1.bf16.msra.mxu0 %v1266
    %1892 = vmatprep.subr.bf16.mxu0 %v1275
    %1893 = vmatpush1.bf16.msra.mxu0 %v1274
    %1894 = vmatprep.subr.bf16.mxu0 %v1283
    %1895 = vmatpush1.bf16.msra.mxu0 %v1282
    %1896 = vmatprep.subr.bf16.mxu0 %v1291
    %1897 = vmatpush1.bf16.msra.mxu0 %v1290
    %1898 = vmatprep.subr.bf16.mxu0 %v1299
    %1899 = vmatpush1.bf16.msra.mxu0 %v1298
    %1900 = vmatprep.subr.bf16.mxu0 %v1307
    %1901 = vmatpush1.bf16.msra.mxu0 %v1306
    %1902 = vmatprep.subr.bf16.mxu0 %v1315
    %1903 = vmatpush1.bf16.msra.mxu0 %v1314
    %1904 = vmatprep.subr.bf16.mxu0 %v1323
    %1905 = vmatpush1.bf16.msra.mxu0 %v1322
    %1906 = vmatprep.mubr.bf16.mxu0 %v423
    %1907 = vmatmul.mubr.bf16.gmra.mrb[0].mxu0 %v422
    %v1908 = vpop.f32.mrb[0].mxu0
    %v1909 = vadd.f32 %v395, %v1908
    %v1910 = vpop.f32.mrb[0].mxu0
    %v1911 = vadd.f32 %v399, %v1910
    %v1912 = vpop.f32.mrb[0].mxu0
    %v1913 = vpop.f32.mrb[0].mxu0
    %1914 = vdwg.mxu0
    %1915 = vmatprep.subr.bf16.mxu0 %v1331
    %1916 = vmatpush1.bf16.msra.mxu0 %v1330
    %1917 = vmatprep.subr.bf16.mxu0 %v1339
    %1918 = vmatpush1.bf16.msra.mxu0 %v1338
    %1919 = vmatprep.subr.bf16.mxu0 %v1347
    %1920 = vmatpush1.bf16.msra.mxu0 %v1346
    %1921 = vmatprep.subr.bf16.mxu0 %v1355
    %1922 = vmatpush1.bf16.msra.mxu0 %v1354
    %1923 = vmatprep.subr.bf16.mxu0 %v1363
    %1924 = vmatpush1.bf16.msra.mxu0 %v1362
    %1925 = vmatprep.subr.bf16.mxu0 %v1371
    %1926 = vmatpush1.bf16.msra.mxu0 %v1370
    %1927 = vmatprep.subr.bf16.mxu0 %v1379
    %1928 = vmatpush1.bf16.msra.mxu0 %v1378
    %1929 = vmatprep.subr.bf16.mxu0 %v1387
    %1930 = vmatpush1.bf16.msra.mxu0 %v1386
    %1931 = vmatprep.subr.bf16.mxu0 %v1395
    %1932 = vmatpush1.bf16.msra.mxu0 %v1394
    %1933 = vmatprep.subr.bf16.mxu0 %v1403
    %1934 = vmatpush1.bf16.msra.mxu0 %v1402
    %1935 = vmatprep.subr.bf16.mxu0 %v1411
    %1936 = vmatpush1.bf16.msra.mxu0 %v1410
    %1937 = vmatprep.subr.bf16.mxu0 %v1419
    %1938 = vmatpush1.bf16.msra.mxu0 %v1418
    %1939 = vmatprep.subr.bf16.mxu0 %v1427
    %1940 = vmatpush1.bf16.msra.mxu0 %v1426
    %1941 = vmatprep.subr.bf16.mxu0 %v1435
    %1942 = vmatpush1.bf16.msra.mxu0 %v1434
    %1943 = vmatprep.subr.bf16.mxu0 %v1443
    %1944 = vmatpush1.bf16.msra.mxu0 %v1442
    %1945 = vmatprep.subr.bf16.mxu0 %v1451
    %1946 = vmatpush1.bf16.msra.mxu0 %v1450
    %1947 = vmatprep.mubr.bf16.mxu0 %v425
    %1948 = vmatmul.mubr.bf16.gmra.mrb[0].mxu0 %v424
    %v1949 = vpop.f32.mrb[0].mxu0
    %v1950 = vadd.f32 %v1909, %v1949
    %v1951 = vpop.f32.mrb[0].mxu0
    %v1952 = vadd.f32 %v1911, %v1951
    %v1953 = vpop.f32.mrb[0].mxu0
    %v1954 = vpop.f32.mrb[0].mxu0
    %1955 = vdwg.mxu0
    %1956 = vmatprep.subr.bf16.mxu0 %v1205
    %1957 = vmatpush1.bf16.msra.mxu0 %v1204
    %1958 = vmatprep.subr.bf16.mxu0 %v1213
    %1959 = vmatpush1.bf16.msra.mxu0 %v1212
    %1960 = vmatprep.subr.bf16.mxu0 %v1221
    %1961 = vmatpush1.bf16.msra.mxu0 %v1220
    %1962 = vmatprep.subr.bf16.mxu0 %v1229
    %1963 = vmatpush1.bf16.msra.mxu0 %v1228
    %1964 = vmatprep.subr.bf16.mxu0 %v1237
    %1965 = vmatpush1.bf16.msra.mxu0 %v1236
    %1966 = vmatprep.subr.bf16.mxu0 %v1245
    %1967 = vmatpush1.bf16.msra.mxu0 %v1244
    %1968 = vmatprep.subr.bf16.mxu0 %v1253
    %1969 = vmatpush1.bf16.msra.mxu0 %v1252
    %1970 = vmatprep.subr.bf16.mxu0 %v1261
    %1971 = vmatpush1.bf16.msra.mxu0 %v1260
    %1972 = vmatprep.subr.bf16.mxu0 %v1269
    %1973 = vmatpush1.bf16.msra.mxu0 %v1268
    %1974 = vmatprep.subr.bf16.mxu0 %v1277
    %1975 = vmatpush1.bf16.msra.mxu0 %v1276
    %1976 = vmatprep.subr.bf16.mxu0 %v1285
    %1977 = vmatpush1.bf16.msra.mxu0 %v1284
    %1978 = vmatprep.subr.bf16.mxu0 %v1293
    %1979 = vmatpush1.bf16.msra.mxu0 %v1292
    %1980 = vmatprep.subr.bf16.mxu0 %v1301
    %1981 = vmatpush1.bf16.msra.mxu0 %v1300
    %1982 = vmatprep.subr.bf16.mxu0 %v1309
    %1983 = vmatpush1.bf16.msra.mxu0 %v1308
    %1984 = vmatprep.subr.bf16.mxu0 %v1317
    %1985 = vmatpush1.bf16.msra.mxu0 %v1316
    %1986 = vmatprep.subr.bf16.mxu0 %v1325
    %1987 = vmatpush1.bf16.msra.mxu0 %v1324
    %1988 = vmatprep.mubr.bf16.mxu0 %v423
    %1989 = vmatmul.mubr.bf16.gmra.mrb[0].mxu0 %v422
    %v1990 = vpop.f32.mrb[0].mxu0
    %v1991 = vadd.f32 %v403, %v1990
    %v1992 = vpop.f32.mrb[0].mxu0
    %v1993 = vadd.f32 %v407, %v1992
    %v1994 = vpop.f32.mrb[0].mxu0
    %v1995 = vpop.f32.mrb[0].mxu0
    %1996 = vdwg.mxu0
    %1997 = vmatprep.subr.bf16.mxu0 %v1333
    %1998 = vmatpush1.bf16.msra.mxu0 %v1332
    %1999 = vmatprep.subr.bf16.mxu0 %v1341
    %2000 = vmatpush1.bf16.msra.mxu0 %v1340
    %2001 = vmatprep.subr.bf16.mxu0 %v1349
    %2002 = vmatpush1.bf16.msra.mxu0 %v1348
    %2003 = vmatprep.subr.bf16.mxu0 %v1357
    %2004 = vmatpush1.bf16.msra.mxu0 %v1356
    %2005 = vmatprep.subr.bf16.mxu0 %v1365
    %2006 = vmatpush1.bf16.msra.mxu0 %v1364
    %2007 = vmatprep.subr.bf16.mxu0 %v1373
    %2008 = vmatpush1.bf16.msra.mxu0 %v1372
    %2009 = vmatprep.subr.bf16.mxu0 %v1381
    %2010 = vmatpush1.bf16.msra.mxu0 %v1380
    %2011 = vmatprep.subr.bf16.mxu0 %v1389
    %2012 = vmatpush1.bf16.msra.mxu0 %v1388
    %2013 = vmatprep.subr.bf16.mxu0 %v1397
    %2014 = vmatpush1.bf16.msra.mxu0 %v1396
    %2015 = vmatprep.subr.bf16.mxu0 %v1405
    %2016 = vmatpush1.bf16.msra.mxu0 %v1404
    %2017 = vmatprep.subr.bf16.mxu0 %v1413
    %2018 = vmatpush1.bf16.msra.mxu0 %v1412
    %2019 = vmatprep.subr.bf16.mxu0 %v1421
    %2020 = vmatpush1.bf16.msra.mxu0 %v1420
    %2021 = vmatprep.subr.bf16.mxu0 %v1429
    %2022 = vmatpush1.bf16.msra.mxu0 %v1428
    %2023 = vmatprep.subr.bf16.mxu0 %v1437
    %2024 = vmatpush1.bf16.msra.mxu0 %v1436
    %2025 = vmatprep.subr.bf16.mxu0 %v1445
    %2026 = vmatpush1.bf16.msra.mxu0 %v1444
    %2027 = vmatprep.subr.bf16.mxu0 %v1453
    %2028 = vmatpush1.bf16.msra.mxu0 %v1452
    %2029 = vmatprep.mubr.bf16.mxu0 %v425
    %2030 = vmatmul.mubr.bf16.gmra.mrb[0].mxu0 %v424
    %v2031 = vpop.f32.mrb[0].mxu0
    %v2032 = vadd.f32 %v1991, %v2031
    %v2033 = vpop.f32.mrb[0].mxu0
    %v2034 = vadd.f32 %v1993, %v2033
    %v2035 = vpop.f32.mrb[0].mxu0
    %v2036 = vpop.f32.mrb[0].mxu0
    %2037 = vdwg.mxu0
    %v2038 = vld [vmem:[%s3] sm:$0xff]
    %v2039 = vld [vmem:[#allocation8] sm:$0xff]
    %v2040 = vadd.f32 %v1786, %v1788
    %v2041 = vadd.f32 %v2040, %v1868
    %v2042 = vadd.f32 %v2041, %v1870
    %v2043 = vadd.f32 %v2042, %v1950
    %v2044 = vadd.f32 %v2043, %v1952
    %v2045 = vadd.f32 %v2044, %v2032
    %v2046 = vadd.f32 %v2045, %v2034
    %2047 = vadd.xlane.f32.xlu0 %v2046
    %v2048 = vpop.xlane.xlu0 %2047
    %v2049 = vmul.f32 %v1786, %v1786
    %v2050 = vmul.f32 %v1788, %v1788
    %v2051 = vmul.f32 %v1868, %v1868
    %v2052 = vmul.f32 %v1870, %v1870
    %v2053 = vmul.f32 %v1950, %v1950
    %v2054 = vmul.f32 %v1952, %v1952
    %v2055 = vmul.f32 %v2032, %v2032
    %v2056 = vmul.f32 %v2034, %v2034
    %v2057 = vadd.f32 %v2049, %v2050
    %v2058 = vadd.f32 %v2057, %v2051
    %v2059 = vadd.f32 %v2058, %v2052
    %v2060 = vadd.f32 %v2059, %v2053
    %v2061 = vadd.f32 %v2060, %v2054
    %v2062 = vadd.f32 %v2061, %v2055
    %v2063 = vadd.f32 %v2062, %v2056
    %2064 = vadd.xlane.f32.xlu0 %v2063
    %v2065 = vpop.xlane.xlu0 %2064
    %v2066 = vmul.f32 %v2048, 0.0009765625
    %v2067 = vmul.f32 %v2065, 0.0009765625
    %v2068 = vmul.f32 %v2066, %v2066
    %v2069 = vsub.f32 %v2067, %v2068
    %v2070 = vmax.f32 %v2069, 0.0
    %v2071 = vadd.f32 %v2070, 1e-05
    %v2072 = vrsqrt.pop %v2071
    %v2073 = vsub.f32 %v1786, %v2066
    %v2074 = vsub.f32 %v1788, %v2066
    %v2075 = vsub.f32 %v1868, %v2066
    %v2076 = vsub.f32 %v1870, %v2066
    %v2077 = vsub.f32 %v1950, %v2066
    %v2078 = vsub.f32 %v1952, %v2066
    %v2079 = vsub.f32 %v2032, %v2066
    %v2080 = vsub.f32 %v2034, %v2066
    %v2081 = vmul.f32 %v2073, %v2072
    %v2082 = vmul.f32 %v2074, %v2072
    %v2083 = vmul.f32 %v2075, %v2072
    %v2084 = vmul.f32 %v2076, %v2072
    %v2085 = vmul.f32 %v2077, %v2072
    %v2086 = vmul.f32 %v2078, %v2072
    %v2087 = vmul.f32 %v2079, %v2072
    %v2088 = vmul.f32 %v2080, %v2072
    %v2090 = vlaneseq
    %v2091 = vshrl.u32 %v2090, 7
    %v2092 = vsub.s32 0, %v2091
    %v2093 = vrot.slane %v2038, %v2092
    %v2094 = vlaneseq
    %v2095 = vshrl.u32 %v2094, 7
    %v2096 = vsub.s32 1, %v2095
    %v2097 = vrot.slane %v2038, %v2096
    %v2098 = vlaneseq
    %v2099 = vshrl.u32 %v2098, 7
    %v2100 = vsub.s32 2, %v2099
    %v2101 = vrot.slane %v2038, %v2100
    %v2102 = vlaneseq
    %v2103 = vshrl.u32 %v2102, 7
    %v2104 = vsub.s32 3, %v2103
    %v2105 = vrot.slane %v2038, %v2104
    %v2106 = vlaneseq
    %v2107 = vshrl.u32 %v2106, 7
    %v2108 = vsub.s32 4, %v2107
    %v2109 = vrot.slane %v2038, %v2108
    %v2110 = vlaneseq
    %v2111 = vshrl.u32 %v2110, 7
    %v2112 = vsub.s32 5, %v2111
    %v2113 = vrot.slane %v2038, %v2112
    %v2114 = vlaneseq
    %v2115 = vshrl.u32 %v2114, 7
    %v2116 = vsub.s32 6, %v2115
    %v2117 = vrot.slane %v2038, %v2116
    %v2118 = vlaneseq
    %v2119 = vshrl.u32 %v2118, 7
    %v2120 = vsub.s32 7, %v2119
    %v2121 = vrot.slane %v2038, %v2120
    %v2130 = vmul.f32 %v2081, %v2093
    %v2131 = vmul.f32 %v2082, %v2097
    %v2132 = vmul.f32 %v2083, %v2101
    %v2133 = vmul.f32 %v2084, %v2105
    %v2134 = vmul.f32 %v2085, %v2109
    %v2135 = vmul.f32 %v2086, %v2113
    %v2136 = vmul.f32 %v2087, %v2117
    %v2137 = vmul.f32 %v2088, %v2121
    %v2139 = vlaneseq
    %v2140 = vshrl.u32 %v2139, 7
    %v2141 = vsub.s32 0, %v2140
    %v2142 = vrot.slane %v2039, %v2141
    %v2143 = vlaneseq
    %v2144 = vshrl.u32 %v2143, 7
    %v2145 = vsub.s32 1, %v2144
    %v2146 = vrot.slane %v2039, %v2145
    %v2147 = vlaneseq
    %v2148 = vshrl.u32 %v2147, 7
    %v2149 = vsub.s32 2, %v2148
    %v2150 = vrot.slane %v2039, %v2149
    %v2151 = vlaneseq
    %v2152 = vshrl.u32 %v2151, 7
    %v2153 = vsub.s32 3, %v2152
    %v2154 = vrot.slane %v2039, %v2153
    %v2155 = vlaneseq
    %v2156 = vshrl.u32 %v2155, 7
    %v2157 = vsub.s32 4, %v2156
    %v2158 = vrot.slane %v2039, %v2157
    %v2159 = vlaneseq
    %v2160 = vshrl.u32 %v2159, 7
    %v2161 = vsub.s32 5, %v2160
    %v2162 = vrot.slane %v2039, %v2161
    %v2163 = vlaneseq
    %v2164 = vshrl.u32 %v2163, 7
    %v2165 = vsub.s32 6, %v2164
    %v2166 = vrot.slane %v2039, %v2165
    %v2167 = vlaneseq
    %v2168 = vshrl.u32 %v2167, 7
    %v2169 = vsub.s32 7, %v2168
    %v2170 = vrot.slane %v2039, %v2169
    %v2179 = vadd.f32 %v2130, %v2142
    %v2180 = vadd.f32 %v2131, %v2146
    %v2181 = vadd.f32 %v2132, %v2150
    %v2182 = vadd.f32 %v2133, %v2154
    %v2183 = vadd.f32 %v2134, %v2158
    %v2184 = vadd.f32 %v2135, %v2162
    %v2185 = vadd.f32 %v2136, %v2166
    %v2186 = vadd.f32 %v2137, %v2170
    %v2187 = vmax.f32 %v2179, 0.0
    %v2188 = vmax.f32 %v2180, 0.0
    %v2189 = vmax.f32 %v2181, 0.0
    %v2190 = vmax.f32 %v2182, 0.0
    %v2191 = vmax.f32 %v2183, 0.0
    %v2192 = vmax.f32 %v2184, 0.0
    %v2193 = vmax.f32 %v2185, 0.0
    %v2194 = vmax.f32 %v2186, 0.0
    %v2195 = vpack.c.bf16 %v2187, %v2187
    %v2196 = vpack.c.bf16 %v2188, %v2188
    %v2197 = vpack.c.bf16 %v2189, %v2189
    %v2198 = vpack.c.bf16 %v2190, %v2190
    %v2199 = vpack.c.bf16 %v2191, %v2191
    %v2200 = vpack.c.bf16 %v2192, %v2192
    %v2201 = vpack.c.bf16 %v2193, %v2193
    %v2202 = vpack.c.bf16 %v2194, %v2194
    %v2203 = vld [vmem:[#allocation10] sm:$0xff]
    %v2204 = vld [vmem:[#allocation10 + $0x8] sm:$0xff]
    %v2205 = vld [vmem:[#allocation10 + $0x10] sm:$0xff]
    %v2206 = vld [vmem:[#allocation10 + $0x18] sm:$0xff]
    %v2207 = vld [vmem:[#allocation10 + $0x20] sm:$0xff]
    %v2208 = vld [vmem:[#allocation10 + $0x28] sm:$0xff]
    %v2209 = vld [vmem:[#allocation10 + $0x30] sm:$0xff]
    %v2210 = vld [vmem:[#allocation10 + $0x38] sm:$0xff]
    %v2211 = vld [vmem:[#allocation10 + $0x40] sm:$0xff]
    %v2212 = vld [vmem:[#allocation10 + $0x48] sm:$0xff]
    %v2213 = vld [vmem:[#allocation10 + $0x50] sm:$0xff]
    %v2214 = vld [vmem:[#allocation10 + $0x58] sm:$0xff]
    %v2215 = vld [vmem:[#allocation10 + $0x60] sm:$0xff]
    %v2216 = vld [vmem:[#allocation10 + $0x68] sm:$0xff]
    %v2217 = vld [vmem:[#allocation10 + $0x70] sm:$0xff]
    %v2218 = vld [vmem:[#allocation10 + $0x78] sm:$0xff]
    %v2219 = vld [vmem:[#allocation10 + $0x80] sm:$0xff]
    %v2220 = vld [vmem:[#allocation10 + $0x88] sm:$0xff]
    %v2221 = vld [vmem:[#allocation10 + $0x90] sm:$0xff]
    %v2222 = vld [vmem:[#allocation10 + $0x98] sm:$0xff]
    %v2223 = vld [vmem:[#allocation10 + $0xa0] sm:$0xff]
    %v2224 = vld [vmem:[#allocation10 + $0xa8] sm:$0xff]
    %v2225 = vld [vmem:[#allocation10 + $0xb0] sm:$0xff]
    %v2226 = vld [vmem:[#allocation10 + $0xb8] sm:$0xff]
    %v2227 = vld [vmem:[#allocation10 + $0xc0] sm:$0xff]
    %v2228 = vld [vmem:[#allocation10 + $0xc8] sm:$0xff]
    %v2229 = vld [vmem:[#allocation10 + $0xd0] sm:$0xff]
    %v2230 = vld [vmem:[#allocation10 + $0xd8] sm:$0xff]
    %v2231 = vld [vmem:[#allocation10 + $0xe0] sm:$0xff]
    %v2232 = vld [vmem:[#allocation10 + $0xe8] sm:$0xff]
    %v2233 = vld [vmem:[#allocation10 + $0xf0] sm:$0xff]
    %v2234 = vld [vmem:[#allocation10 + $0xf8] sm:$0xff]
    %v2235 = vld [vmem:[#allocation10 + $0x100] sm:$0xff]
    %v2236 = vld [vmem:[#allocation10 + $0x108] sm:$0xff]
    %v2237 = vld [vmem:[#allocation10 + $0x110] sm:$0xff]
    %v2238 = vld [vmem:[#allocation10 + $0x118] sm:$0xff]
    %v2239 = vld [vmem:[#allocation10 + $0x120] sm:$0xff]
    %v2240 = vld [vmem:[#allocation10 + $0x128] sm:$0xff]
    %v2241 = vld [vmem:[#allocation10 + $0x130] sm:$0xff]
    %v2242 = vld [vmem:[#allocation10 + $0x138] sm:$0xff]
    %v2243 = vld [vmem:[#allocation10 + $0x140] sm:$0xff]
    %v2244 = vld [vmem:[#allocation10 + $0x148] sm:$0xff]
    %v2245 = vld [vmem:[#allocation10 + $0x150] sm:$0xff]
    %v2246 = vld [vmem:[#allocation10 + $0x158] sm:$0xff]
    %v2247 = vld [vmem:[#allocation10 + $0x160] sm:$0xff]
    %v2248 = vld [vmem:[#allocation10 + $0x168] sm:$0xff]
    %v2249 = vld [vmem:[#allocation10 + $0x170] sm:$0xff]
    %v2250 = vld [vmem:[#allocation10 + $0x178] sm:$0xff]
    %v2251 = vld [vmem:[#allocation10 + $0x180] sm:$0xff]
    %v2252 = vld [vmem:[#allocation10 + $0x188] sm:$0xff]
    %v2253 = vld [vmem:[#allocation10 + $0x190] sm:$0xff]
    %v2254 = vld [vmem:[#allocation10 + $0x198] sm:$0xff]
    %v2255 = vld [vmem:[#allocation10 + $0x1a0] sm:$0xff]
    %v2256 = vld [vmem:[#allocation10 + $0x1a8] sm:$0xff]
    %v2257 = vld [vmem:[#allocation10 + $0x1b0] sm:$0xff]
    %v2258 = vld [vmem:[#allocation10 + $0x1b8] sm:$0xff]
    %v2259 = vld [vmem:[#allocation10 + $0x1c0] sm:$0xff]
    %v2260 = vld [vmem:[#allocation10 + $0x1c8] sm:$0xff]
    %v2261 = vld [vmem:[#allocation10 + $0x1d0] sm:$0xff]
    %v2262 = vld [vmem:[#allocation10 + $0x1d8] sm:$0xff]
    %v2263 = vld [vmem:[#allocation10 + $0x1e0] sm:$0xff]
    %v2264 = vld [vmem:[#allocation10 + $0x1e8] sm:$0xff]
    %v2265 = vld [vmem:[#allocation10 + $0x1f0] sm:$0xff]
    %v2266 = vld [vmem:[#allocation10 + $0x1f8] sm:$0xff]
    %v2267 = vld [vmem:[#allocation10 + $0x200] sm:$0xff]
    %v2268 = vld [vmem:[#allocation10 + $0x208] sm:$0xff]
    %v2269 = vld [vmem:[#allocation10 + $0x210] sm:$0xff]
    %v2270 = vld [vmem:[#allocation10 + $0x218] sm:$0xff]
    %v2271 = vld [vmem:[#allocation10 + $0x220] sm:$0xff]
    %v2272 = vld [vmem:[#allocation10 + $0x228] sm:$0xff]
    %v2273 = vld [vmem:[#allocation10 + $0x230] sm:$0xff]
    %v2274 = vld [vmem:[#allocation10 + $0x238] sm:$0xff]
    %v2275 = vld [vmem:[#allocation10 + $0x240] sm:$0xff]
    %v2276 = vld [vmem:[#allocation10 + $0x248] sm:$0xff]
    %v2277 = vld [vmem:[#allocation10 + $0x250] sm:$0xff]
    %v2278 = vld [vmem:[#allocation10 + $0x258] sm:$0xff]
    %v2279 = vld [vmem:[#allocation10 + $0x260] sm:$0xff]
    %v2280 = vld [vmem:[#allocation10 + $0x268] sm:$0xff]
    %v2281 = vld [vmem:[#allocation10 + $0x270] sm:$0xff]
    %v2282 = vld [vmem:[#allocation10 + $0x278] sm:$0xff]
    %v2283 = vld [vmem:[#allocation10 + $0x280] sm:$0xff]
    %v2284 = vld [vmem:[#allocation10 + $0x288] sm:$0xff]
    %v2285 = vld [vmem:[#allocation10 + $0x290] sm:$0xff]
    %v2286 = vld [vmem:[#allocation10 + $0x298] sm:$0xff]
    %v2287 = vld [vmem:[#allocation10 + $0x2a0] sm:$0xff]
    %v2288 = vld [vmem:[#allocation10 + $0x2a8] sm:$0xff]
    %v2289 = vld [vmem:[#allocation10 + $0x2b0] sm:$0xff]
    %v2290 = vld [vmem:[#allocation10 + $0x2b8] sm:$0xff]
    %v2291 = vld [vmem:[#allocation10 + $0x2c0] sm:$0xff]
    %v2292 = vld [vmem:[#allocation10 + $0x2c8] sm:$0xff]
    %v2293 = vld [vmem:[#allocation10 + $0x2d0] sm:$0xff]
    %v2294 = vld [vmem:[#allocation10 + $0x2d8] sm:$0xff]
    %v2295 = vld [vmem:[#allocation10 + $0x2e0] sm:$0xff]
    %v2296 = vld [vmem:[#allocation10 + $0x2e8] sm:$0xff]
    %v2297 = vld [vmem:[#allocation10 + $0x2f0] sm:$0xff]
    %v2298 = vld [vmem:[#allocation10 + $0x2f8] sm:$0xff]
    %v2299 = vld [vmem:[#allocation10 + $0x300] sm:$0xff]
    %v2300 = vld [vmem:[#allocation10 + $0x308] sm:$0xff]
    %v2301 = vld [vmem:[#allocation10 + $0x310] sm:$0xff]
    %v2302 = vld [vmem:[#allocation10 + $0x318] sm:$0xff]
    %v2303 = vld [vmem:[#allocation10 + $0x320] sm:$0xff]
    %v2304 = vld [vmem:[#allocation10 + $0x328] sm:$0xff]
    %v2305 = vld [vmem:[#allocation10 + $0x330] sm:$0xff]
    %v2306 = vld [vmem:[#allocation10 + $0x338] sm:$0xff]
    %v2307 = vld [vmem:[#allocation10 + $0x340] sm:$0xff]
    %v2308 = vld [vmem:[#allocation10 + $0x348] sm:$0xff]
    %v2309 = vld [vmem:[#allocation10 + $0x350] sm:$0xff]
    %v2310 = vld [vmem:[#allocation10 + $0x358] sm:$0xff]
    %v2311 = vld [vmem:[#allocation10 + $0x360] sm:$0xff]
    %v2312 = vld [vmem:[#allocation10 + $0x368] sm:$0xff]
    %v2313 = vld [vmem:[#allocation10 + $0x370] sm:$0xff]
    %v2314 = vld [vmem:[#allocation10 + $0x378] sm:$0xff]
    %v2315 = vld [vmem:[#allocation10 + $0x380] sm:$0xff]
    %v2316 = vld [vmem:[#allocation10 + $0x388] sm:$0xff]
    %v2317 = vld [vmem:[#allocation10 + $0x390] sm:$0xff]
    %v2318 = vld [vmem:[#allocation10 + $0x398] sm:$0xff]
    %v2319 = vld [vmem:[#allocation10 + $0x3a0] sm:$0xff]
    %v2320 = vld [vmem:[#allocation10 + $0x3a8] sm:$0xff]
    %v2321 = vld [vmem:[#allocation10 + $0x3b0] sm:$0xff]
    %v2322 = vld [vmem:[#allocation10 + $0x3b8] sm:$0xff]
    %v2323 = vld [vmem:[#allocation10 + $0x3c0] sm:$0xff]
    %v2324 = vld [vmem:[#allocation10 + $0x3c8] sm:$0xff]
    %v2325 = vld [vmem:[#allocation10 + $0x3d0] sm:$0xff]
    %v2326 = vld [vmem:[#allocation10 + $0x3d8] sm:$0xff]
    %v2327 = vld [vmem:[#allocation10 + $0x3e0] sm:$0xff]
    %v2328 = vld [vmem:[#allocation10 + $0x3e8] sm:$0xff]
    %v2329 = vld [vmem:[#allocation10 + $0x3f0] sm:$0xff]
    %v2330 = vld [vmem:[#allocation10 + $0x3f8] sm:$0xff]
    %v2331 = vld [vmem:[#allocation10 + $0x400] sm:$0xff]
    %v2332 = vld [vmem:[#allocation10 + $0x408] sm:$0xff]
    %v2333 = vld [vmem:[#allocation10 + $0x410] sm:$0xff]
    %v2334 = vld [vmem:[#allocation10 + $0x418] sm:$0xff]
    %v2335 = vld [vmem:[#allocation10 + $0x420] sm:$0xff]
    %v2336 = vld [vmem:[#allocation10 + $0x428] sm:$0xff]
    %v2337 = vld [vmem:[#allocation10 + $0x430] sm:$0xff]
    %v2338 = vld [vmem:[#allocation10 + $0x438] sm:$0xff]
    %v2339 = vld [vmem:[#allocation10 + $0x440] sm:$0xff]
    %v2340 = vld [vmem:[#allocation10 + $0x448] sm:$0xff]
    %v2341 = vld [vmem:[#allocation10 + $0x450] sm:$0xff]
    %v2342 = vld [vmem:[#allocation10 + $0x458] sm:$0xff]
    %v2343 = vld [vmem:[#allocation10 + $0x460] sm:$0xff]
    %v2344 = vld [vmem:[#allocation10 + $0x468] sm:$0xff]
    %v2345 = vld [vmem:[#allocation10 + $0x470] sm:$0xff]
    %v2346 = vld [vmem:[#allocation10 + $0x478] sm:$0xff]
    %v2347 = vld [vmem:[#allocation10 + $0x480] sm:$0xff]
    %v2348 = vld [vmem:[#allocation10 + $0x488] sm:$0xff]
    %v2349 = vld [vmem:[#allocation10 + $0x490] sm:$0xff]
    %v2350 = vld [vmem:[#allocation10 + $0x498] sm:$0xff]
    %v2351 = vld [vmem:[#allocation10 + $0x4a0] sm:$0xff]
    %v2352 = vld [vmem:[#allocation10 + $0x4a8] sm:$0xff]
    %v2353 = vld [vmem:[#allocation10 + $0x4b0] sm:$0xff]
    %v2354 = vld [vmem:[#allocation10 + $0x4b8] sm:$0xff]
    %v2355 = vld [vmem:[#allocation10 + $0x4c0] sm:$0xff]
    %v2356 = vld [vmem:[#allocation10 + $0x4c8] sm:$0xff]
    %v2357 = vld [vmem:[#allocation10 + $0x4d0] sm:$0xff]
    %v2358 = vld [vmem:[#allocation10 + $0x4d8] sm:$0xff]
    %v2359 = vld [vmem:[#allocation10 + $0x4e0] sm:$0xff]
    %v2360 = vld [vmem:[#allocation10 + $0x4e8] sm:$0xff]
    %v2361 = vld [vmem:[#allocation10 + $0x4f0] sm:$0xff]
    %v2362 = vld [vmem:[#allocation10 + $0x4f8] sm:$0xff]
    %v2363 = vld [vmem:[#allocation10 + $0x500] sm:$0xff]
    %v2364 = vld [vmem:[#allocation10 + $0x508] sm:$0xff]
    %v2365 = vld [vmem:[#allocation10 + $0x510] sm:$0xff]
    %v2366 = vld [vmem:[#allocation10 + $0x518] sm:$0xff]
    %v2367 = vld [vmem:[#allocation10 + $0x520] sm:$0xff]
    %v2368 = vld [vmem:[#allocation10 + $0x528] sm:$0xff]
    %v2369 = vld [vmem:[#allocation10 + $0x530] sm:$0xff]
    %v2370 = vld [vmem:[#allocation10 + $0x538] sm:$0xff]
    %v2371 = vld [vmem:[#allocation10 + $0x540] sm:$0xff]
    %v2372 = vld [vmem:[#allocation10 + $0x548] sm:$0xff]
    %v2373 = vld [vmem:[#allocation10 + $0x550] sm:$0xff]
    %v2374 = vld [vmem:[#allocation10 + $0x558] sm:$0xff]
    %v2375 = vld [vmem:[#allocation10 + $0x560] sm:$0xff]
    %v2376 = vld [vmem:[#allocation10 + $0x568] sm:$0xff]
    %v2377 = vld [vmem:[#allocation10 + $0x570] sm:$0xff]
    %v2378 = vld [vmem:[#allocation10 + $0x578] sm:$0xff]
    %v2379 = vld [vmem:[#allocation10 + $0x580] sm:$0xff]
    %v2380 = vld [vmem:[#allocation10 + $0x588] sm:$0xff]
    %v2381 = vld [vmem:[#allocation10 + $0x590] sm:$0xff]
    %v2382 = vld [vmem:[#allocation10 + $0x598] sm:$0xff]
    %v2383 = vld [vmem:[#allocation10 + $0x5a0] sm:$0xff]
    %v2384 = vld [vmem:[#allocation10 + $0x5a8] sm:$0xff]
    %v2385 = vld [vmem:[#allocation10 + $0x5b0] sm:$0xff]
    %v2386 = vld [vmem:[#allocation10 + $0x5b8] sm:$0xff]
    %v2387 = vld [vmem:[#allocation10 + $0x5c0] sm:$0xff]
    %v2388 = vld [vmem:[#allocation10 + $0x5c8] sm:$0xff]
    %v2389 = vld [vmem:[#allocation10 + $0x5d0] sm:$0xff]
    %v2390 = vld [vmem:[#allocation10 + $0x5d8] sm:$0xff]
    %v2391 = vld [vmem:[#allocation10 + $0x5e0] sm:$0xff]
    %v2392 = vld [vmem:[#allocation10 + $0x5e8] sm:$0xff]
    %v2393 = vld [vmem:[#allocation10 + $0x5f0] sm:$0xff]
    %v2394 = vld [vmem:[#allocation10 + $0x5f8] sm:$0xff]
    %v2395 = vld [vmem:[#allocation10 + $0x600] sm:$0xff]
    %v2396 = vld [vmem:[#allocation10 + $0x608] sm:$0xff]
    %v2397 = vld [vmem:[#allocation10 + $0x610] sm:$0xff]
    %v2398 = vld [vmem:[#allocation10 + $0x618] sm:$0xff]
    %v2399 = vld [vmem:[#allocation10 + $0x620] sm:$0xff]
    %v2400 = vld [vmem:[#allocation10 + $0x628] sm:$0xff]
    %v2401 = vld [vmem:[#allocation10 + $0x630] sm:$0xff]
    %v2402 = vld [vmem:[#allocation10 + $0x638] sm:$0xff]
    %v2403 = vld [vmem:[#allocation10 + $0x640] sm:$0xff]
    %v2404 = vld [vmem:[#allocation10 + $0x648] sm:$0xff]
    %v2405 = vld [vmem:[#allocation10 + $0x650] sm:$0xff]
    %v2406 = vld [vmem:[#allocation10 + $0x658] sm:$0xff]
    %v2407 = vld [vmem:[#allocation10 + $0x660] sm:$0xff]
    %v2408 = vld [vmem:[#allocation10 + $0x668] sm:$0xff]
    %v2409 = vld [vmem:[#allocation10 + $0x670] sm:$0xff]
    %v2410 = vld [vmem:[#allocation10 + $0x678] sm:$0xff]
    %v2411 = vld [vmem:[#allocation10 + $0x680] sm:$0xff]
    %v2412 = vld [vmem:[#allocation10 + $0x688] sm:$0xff]
    %v2413 = vld [vmem:[#allocation10 + $0x690] sm:$0xff]
    %v2414 = vld [vmem:[#allocation10 + $0x698] sm:$0xff]
    %v2415 = vld [vmem:[#allocation10 + $0x6a0] sm:$0xff]
    %v2416 = vld [vmem:[#allocation10 + $0x6a8] sm:$0xff]
    %v2417 = vld [vmem:[#allocation10 + $0x6b0] sm:$0xff]
    %v2418 = vld [vmem:[#allocation10 + $0x6b8] sm:$0xff]
    %v2419 = vld [vmem:[#allocation10 + $0x6c0] sm:$0xff]
    %v2420 = vld [vmem:[#allocation10 + $0x6c8] sm:$0xff]
    %v2421 = vld [vmem:[#allocation10 + $0x6d0] sm:$0xff]
    %v2422 = vld [vmem:[#allocation10 + $0x6d8] sm:$0xff]
    %v2423 = vld [vmem:[#allocation10 + $0x6e0] sm:$0xff]
    %v2424 = vld [vmem:[#allocation10 + $0x6e8] sm:$0xff]
    %v2425 = vld [vmem:[#allocation10 + $0x6f0] sm:$0xff]
    %v2426 = vld [vmem:[#allocation10 + $0x6f8] sm:$0xff]
    %v2427 = vld [vmem:[#allocation10 + $0x700] sm:$0xff]
    %v2428 = vld [vmem:[#allocation10 + $0x708] sm:$0xff]
    %v2429 = vld [vmem:[#allocation10 + $0x710] sm:$0xff]
    %v2430 = vld [vmem:[#allocation10 + $0x718] sm:$0xff]
    %v2431 = vld [vmem:[#allocation10 + $0x720] sm:$0xff]
    %v2432 = vld [vmem:[#allocation10 + $0x728] sm:$0xff]
    %v2433 = vld [vmem:[#allocation10 + $0x730] sm:$0xff]
    %v2434 = vld [vmem:[#allocation10 + $0x738] sm:$0xff]
    %v2435 = vld [vmem:[#allocation10 + $0x740] sm:$0xff]
    %v2436 = vld [vmem:[#allocation10 + $0x748] sm:$0xff]
    %v2437 = vld [vmem:[#allocation10 + $0x750] sm:$0xff]
    %v2438 = vld [vmem:[#allocation10 + $0x758] sm:$0xff]
    %v2439 = vld [vmem:[#allocation10 + $0x760] sm:$0xff]
    %v2440 = vld [vmem:[#allocation10 + $0x768] sm:$0xff]
    %v2441 = vld [vmem:[#allocation10 + $0x770] sm:$0xff]
    %v2442 = vld [vmem:[#allocation10 + $0x778] sm:$0xff]
    %v2443 = vld [vmem:[#allocation10 + $0x780] sm:$0xff]
    %v2444 = vld [vmem:[#allocation10 + $0x788] sm:$0xff]
    %v2445 = vld [vmem:[#allocation10 + $0x790] sm:$0xff]
    %v2446 = vld [vmem:[#allocation10 + $0x798] sm:$0xff]
    %v2447 = vld [vmem:[#allocation10 + $0x7a0] sm:$0xff]
    %v2448 = vld [vmem:[#allocation10 + $0x7a8] sm:$0xff]
    %v2449 = vld [vmem:[#allocation10 + $0x7b0] sm:$0xff]
    %v2450 = vld [vmem:[#allocation10 + $0x7b8] sm:$0xff]
    %v2451 = vld [vmem:[#allocation10 + $0x7c0] sm:$0xff]
    %v2452 = vld [vmem:[#allocation10 + $0x7c8] sm:$0xff]
    %v2453 = vld [vmem:[#allocation10 + $0x7d0] sm:$0xff]
    %v2454 = vld [vmem:[#allocation10 + $0x7d8] sm:$0xff]
    %v2455 = vld [vmem:[#allocation10 + $0x7e0] sm:$0xff]
    %v2456 = vld [vmem:[#allocation10 + $0x7e8] sm:$0xff]
    %v2457 = vld [vmem:[#allocation10 + $0x7f0] sm:$0xff]
    %v2458 = vld [vmem:[#allocation10 + $0x7f8] sm:$0xff]
    %v2459 = vld [vmem:[%s6] sm:$0xf]
    %v2461 = vlaneseq
    %v2462 = vshrl.u32 %v2461, 7
    %v2463 = vsub.s32 0, %v2462
    %v2464 = vrot.slane %v2459, %v2463
    %v2465 = vlaneseq
    %v2466 = vshrl.u32 %v2465, 7
    %v2467 = vsub.s32 1, %v2466
    %v2468 = vrot.slane %v2459, %v2467
    %v2469 = vlaneseq
    %v2470 = vshrl.u32 %v2469, 7
    %v2471 = vsub.s32 2, %v2470
    %v2472 = vrot.slane %v2459, %v2471
    %v2473 = vlaneseq
    %v2474 = vshrl.u32 %v2473, 7
    %v2475 = vsub.s32 3, %v2474
    %v2476 = vrot.slane %v2459, %v2475
    %v2737 = vunpack.c.l.b16 %v2203
    %v2738 = vunpack.c.h.b16 %v2203
    %v2739 = vunpack.c.l.b16 %v2204
    %v2740 = vunpack.c.h.b16 %v2204
    %v2741 = vunpack.c.l.b16 %v2205
    %v2742 = vunpack.c.h.b16 %v2205
    %v2743 = vunpack.c.l.b16 %v2206
    %v2744 = vunpack.c.h.b16 %v2206
    %v2745 = vunpack.c.l.b16 %v2207
    %v2746 = vunpack.c.h.b16 %v2207
    %v2747 = vunpack.c.l.b16 %v2208
    %v2748 = vunpack.c.h.b16 %v2208
    %v2749 = vunpack.c.l.b16 %v2209
    %v2750 = vunpack.c.h.b16 %v2209
    %v2751 = vunpack.c.l.b16 %v2210
    %v2752 = vunpack.c.h.b16 %v2210
    %v2753 = vunpack.c.l.b16 %v2211
    %v2754 = vunpack.c.h.b16 %v2211
    %v2755 = vunpack.c.l.b16 %v2212
    %v2756 = vunpack.c.h.b16 %v2212
    %v2757 = vunpack.c.l.b16 %v2213
    %v2758 = vunpack.c.h.b16 %v2213
    %v2759 = vunpack.c.l.b16 %v2214
    %v2760 = vunpack.c.h.b16 %v2214
    %v2761 = vunpack.c.l.b16 %v2215
    %v2762 = vunpack.c.h.b16 %v2215
    %v2763 = vunpack.c.l.b16 %v2216
    %v2764 = vunpack.c.h.b16 %v2216
    %v2765 = vunpack.c.l.b16 %v2217
    %v2766 = vunpack.c.h.b16 %v2217
    %v2767 = vunpack.c.l.b16 %v2218
    %v2768 = vunpack.c.h.b16 %v2218
    %v2769 = vunpack.c.l.b16 %v2219
    %v2770 = vunpack.c.h.b16 %v2219
    %v2771 = vunpack.c.l.b16 %v2220
    %v2772 = vunpack.c.h.b16 %v2220
    %v2773 = vunpack.c.l.b16 %v2221
    %v2774 = vunpack.c.h.b16 %v2221
    %v2775 = vunpack.c.l.b16 %v2222
    %v2776 = vunpack.c.h.b16 %v2222
    %v2777 = vunpack.c.l.b16 %v2223
    %v2778 = vunpack.c.h.b16 %v2223
    %v2779 = vunpack.c.l.b16 %v2224
    %v2780 = vunpack.c.h.b16 %v2224
    %v2781 = vunpack.c.l.b16 %v2225
    %v2782 = vunpack.c.h.b16 %v2225
    %v2783 = vunpack.c.l.b16 %v2226
    %v2784 = vunpack.c.h.b16 %v2226
    %v2785 = vunpack.c.l.b16 %v2227
    %v2786 = vunpack.c.h.b16 %v2227
    %v2787 = vunpack.c.l.b16 %v2228
    %v2788 = vunpack.c.h.b16 %v2228
    %v2789 = vunpack.c.l.b16 %v2229
    %v2790 = vunpack.c.h.b16 %v2229
    %v2791 = vunpack.c.l.b16 %v2230
    %v2792 = vunpack.c.h.b16 %v2230
    %v2793 = vunpack.c.l.b16 %v2231
    %v2794 = vunpack.c.h.b16 %v2231
    %v2795 = vunpack.c.l.b16 %v2232
    %v2796 = vunpack.c.h.b16 %v2232
    %v2797 = vunpack.c.l.b16 %v2233
    %v2798 = vunpack.c.h.b16 %v2233
    %v2799 = vunpack.c.l.b16 %v2234
    %v2800 = vunpack.c.h.b16 %v2234
    %v2801 = vunpack.c.l.b16 %v2235
    %v2802 = vunpack.c.h.b16 %v2235
    %v2803 = vunpack.c.l.b16 %v2236
    %v2804 = vunpack.c.h.b16 %v2236
    %v2805 = vunpack.c.l.b16 %v2237
    %v2806 = vunpack.c.h.b16 %v2237
    %v2807 = vunpack.c.l.b16 %v2238
    %v2808 = vunpack.c.h.b16 %v2238
    %v2809 = vunpack.c.l.b16 %v2239
    %v2810 = vunpack.c.h.b16 %v2239
    %v2811 = vunpack.c.l.b16 %v2240
    %v2812 = vunpack.c.h.b16 %v2240
    %v2813 = vunpack.c.l.b16 %v2241
    %v2814 = vunpack.c.h.b16 %v2241
    %v2815 = vunpack.c.l.b16 %v2242
    %v2816 = vunpack.c.h.b16 %v2242
    %v2817 = vunpack.c.l.b16 %v2243
    %v2818 = vunpack.c.h.b16 %v2243
    %v2819 = vunpack.c.l.b16 %v2244
    %v2820 = vunpack.c.h.b16 %v2244
    %v2821 = vunpack.c.l.b16 %v2245
    %v2822 = vunpack.c.h.b16 %v2245
    %v2823 = vunpack.c.l.b16 %v2246
    %v2824 = vunpack.c.h.b16 %v2246
    %v2825 = vunpack.c.l.b16 %v2247
    %v2826 = vunpack.c.h.b16 %v2247
    %v2827 = vunpack.c.l.b16 %v2248
    %v2828 = vunpack.c.h.b16 %v2248
    %v2829 = vunpack.c.l.b16 %v2249
    %v2830 = vunpack.c.h.b16 %v2249
    %v2831 = vunpack.c.l.b16 %v2250
    %v2832 = vunpack.c.h.b16 %v2250
    %v2833 = vunpack.c.l.b16 %v2251
    %v2834 = vunpack.c.h.b16 %v2251
    %v2835 = vunpack.c.l.b16 %v2252
    %v2836 = vunpack.c.h.b16 %v2252
    %v2837 = vunpack.c.l.b16 %v2253
    %v2838 = vunpack.c.h.b16 %v2253
    %v2839 = vunpack.c.l.b16 %v2254
    %v2840 = vunpack.c.h.b16 %v2254
    %v2841 = vunpack.c.l.b16 %v2255
    %v2842 = vunpack.c.h.b16 %v2255
    %v2843 = vunpack.c.l.b16 %v2256
    %v2844 = vunpack.c.h.b16 %v2256
    %v2845 = vunpack.c.l.b16 %v2257
    %v2846 = vunpack.c.h.b16 %v2257
    %v2847 = vunpack.c.l.b16 %v2258
    %v2848 = vunpack.c.h.b16 %v2258
    %v2849 = vunpack.c.l.b16 %v2259
    %v2850 = vunpack.c.h.b16 %v2259
    %v2851 = vunpack.c.l.b16 %v2260
    %v2852 = vunpack.c.h.b16 %v2260
    %v2853 = vunpack.c.l.b16 %v2261
    %v2854 = vunpack.c.h.b16 %v2261
    %v2855 = vunpack.c.l.b16 %v2262
    %v2856 = vunpack.c.h.b16 %v2262
    %v2857 = vunpack.c.l.b16 %v2263
    %v2858 = vunpack.c.h.b16 %v2263
    %v2859 = vunpack.c.l.b16 %v2264
    %v2860 = vunpack.c.h.b16 %v2264
    %v2861 = vunpack.c.l.b16 %v2265
    %v2862 = vunpack.c.h.b16 %v2265
    %v2863 = vunpack.c.l.b16 %v2266
    %v2864 = vunpack.c.h.b16 %v2266
    %v2865 = vunpack.c.l.b16 %v2267
    %v2866 = vunpack.c.h.b16 %v2267
    %v2867 = vunpack.c.l.b16 %v2268
    %v2868 = vunpack.c.h.b16 %v2268
    %v2869 = vunpack.c.l.b16 %v2269
    %v2870 = vunpack.c.h.b16 %v2269
    %v2871 = vunpack.c.l.b16 %v2270
    %v2872 = vunpack.c.h.b16 %v2270
    %v2873 = vunpack.c.l.b16 %v2271
    %v2874 = vunpack.c.h.b16 %v2271
    %v2875 = vunpack.c.l.b16 %v2272
    %v2876 = vunpack.c.h.b16 %v2272
    %v2877 = vunpack.c.l.b16 %v2273
    %v2878 = vunpack.c.h.b16 %v2273
    %v2879 = vunpack.c.l.b16 %v2274
    %v2880 = vunpack.c.h.b16 %v2274
    %v2881 = vunpack.c.l.b16 %v2275
    %v2882 = vunpack.c.h.b16 %v2275
    %v2883 = vunpack.c.l.b16 %v2276
    %v2884 = vunpack.c.h.b16 %v2276
    %v2885 = vunpack.c.l.b16 %v2277
    %v2886 = vunpack.c.h.b16 %v2277
    %v2887 = vunpack.c.l.b16 %v2278
    %v2888 = vunpack.c.h.b16 %v2278
    %v2889 = vunpack.c.l.b16 %v2279
    %v2890 = vunpack.c.h.b16 %v2279
    %v2891 = vunpack.c.l.b16 %v2280
    %v2892 = vunpack.c.h.b16 %v2280
    %v2893 = vunpack.c.l.b16 %v2281
    %v2894 = vunpack.c.h.b16 %v2281
    %v2895 = vunpack.c.l.b16 %v2282
    %v2896 = vunpack.c.h.b16 %v2282
    %v2897 = vunpack.c.l.b16 %v2283
    %v2898 = vunpack.c.h.b16 %v2283
    %v2899 = vunpack.c.l.b16 %v2284
    %v2900 = vunpack.c.h.b16 %v2284
    %v2901 = vunpack.c.l.b16 %v2285
    %v2902 = vunpack.c.h.b16 %v2285
    %v2903 = vunpack.c.l.b16 %v2286
    %v2904 = vunpack.c.h.b16 %v2286
    %v2905 = vunpack.c.l.b16 %v2287
    %v2906 = vunpack.c.h.b16 %v2287
    %v2907 = vunpack.c.l.b16 %v2288
    %v2908 = vunpack.c.h.b16 %v2288
    %v2909 = vunpack.c.l.b16 %v2289
    %v2910 = vunpack.c.h.b16 %v2289
    %v2911 = vunpack.c.l.b16 %v2290
    %v2912 = vunpack.c.h.b16 %v2290
    %v2913 = vunpack.c.l.b16 %v2291
    %v2914 = vunpack.c.h.b16 %v2291
    %v2915 = vunpack.c.l.b16 %v2292
    %v2916 = vunpack.c.h.b16 %v2292
    %v2917 = vunpack.c.l.b16 %v2293
    %v2918 = vunpack.c.h.b16 %v2293
    %v2919 = vunpack.c.l.b16 %v2294
    %v2920 = vunpack.c.h.b16 %v2294
    %v2921 = vunpack.c.l.b16 %v2295
    %v2922 = vunpack.c.h.b16 %v2295
    %v2923 = vunpack.c.l.b16 %v2296
    %v2924 = vunpack.c.h.b16 %v2296
    %v2925 = vunpack.c.l.b16 %v2297
    %v2926 = vunpack.c.h.b16 %v2297
    %v2927 = vunpack.c.l.b16 %v2298
    %v2928 = vunpack.c.h.b16 %v2298
    %v2929 = vunpack.c.l.b16 %v2299
    %v2930 = vunpack.c.h.b16 %v2299
    %v2931 = vunpack.c.l.b16 %v2300
    %v2932 = vunpack.c.h.b16 %v2300
    %v2933 = vunpack.c.l.b16 %v2301
    %v2934 = vunpack.c.h.b16 %v2301
    %v2935 = vunpack.c.l.b16 %v2302
    %v2936 = vunpack.c.h.b16 %v2302
    %v2937 = vunpack.c.l.b16 %v2303
    %v2938 = vunpack.c.h.b16 %v2303
    %v2939 = vunpack.c.l.b16 %v2304
    %v2940 = vunpack.c.h.b16 %v2304
    %v2941 = vunpack.c.l.b16 %v2305
    %v2942 = vunpack.c.h.b16 %v2305
    %v2943 = vunpack.c.l.b16 %v2306
    %v2944 = vunpack.c.h.b16 %v2306
    %v2945 = vunpack.c.l.b16 %v2307
    %v2946 = vunpack.c.h.b16 %v2307
    %v2947 = vunpack.c.l.b16 %v2308
    %v2948 = vunpack.c.h.b16 %v2308
    %v2949 = vunpack.c.l.b16 %v2309
    %v2950 = vunpack.c.h.b16 %v2309
    %v2951 = vunpack.c.l.b16 %v2310
    %v2952 = vunpack.c.h.b16 %v2310
    %v2953 = vunpack.c.l.b16 %v2311
    %v2954 = vunpack.c.h.b16 %v2311
    %v2955 = vunpack.c.l.b16 %v2312
    %v2956 = vunpack.c.h.b16 %v2312
    %v2957 = vunpack.c.l.b16 %v2313
    %v2958 = vunpack.c.h.b16 %v2313
    %v2959 = vunpack.c.l.b16 %v2314
    %v2960 = vunpack.c.h.b16 %v2314
    %v2961 = vunpack.c.l.b16 %v2315
    %v2962 = vunpack.c.h.b16 %v2315
    %v2963 = vunpack.c.l.b16 %v2316
    %v2964 = vunpack.c.h.b16 %v2316
    %v2965 = vunpack.c.l.b16 %v2317
    %v2966 = vunpack.c.h.b16 %v2317
    %v2967 = vunpack.c.l.b16 %v2318
    %v2968 = vunpack.c.h.b16 %v2318
    %v2969 = vunpack.c.l.b16 %v2319
    %v2970 = vunpack.c.h.b16 %v2319
    %v2971 = vunpack.c.l.b16 %v2320
    %v2972 = vunpack.c.h.b16 %v2320
    %v2973 = vunpack.c.l.b16 %v2321
    %v2974 = vunpack.c.h.b16 %v2321
    %v2975 = vunpack.c.l.b16 %v2322
    %v2976 = vunpack.c.h.b16 %v2322
    %v2977 = vunpack.c.l.b16 %v2323
    %v2978 = vunpack.c.h.b16 %v2323
    %v2979 = vunpack.c.l.b16 %v2324
    %v2980 = vunpack.c.h.b16 %v2324
    %v2981 = vunpack.c.l.b16 %v2325
    %v2982 = vunpack.c.h.b16 %v2325
    %v2983 = vunpack.c.l.b16 %v2326
    %v2984 = vunpack.c.h.b16 %v2326
    %v2985 = vunpack.c.l.b16 %v2327
    %v2986 = vunpack.c.h.b16 %v2327
    %v2987 = vunpack.c.l.b16 %v2328
    %v2988 = vunpack.c.h.b16 %v2328
    %v2989 = vunpack.c.l.b16 %v2329
    %v2990 = vunpack.c.h.b16 %v2329
    %v2991 = vunpack.c.l.b16 %v2330
    %v2992 = vunpack.c.h.b16 %v2330
    %v2993 = vunpack.c.l.b16 %v2331
    %v2994 = vunpack.c.h.b16 %v2331
    %v2995 = vunpack.c.l.b16 %v2332
    %v2996 = vunpack.c.h.b16 %v2332
    %v2997 = vunpack.c.l.b16 %v2333
    %v2998 = vunpack.c.h.b16 %v2333
    %v2999 = vunpack.c.l.b16 %v2334
    %v3000 = vunpack.c.h.b16 %v2334
    %v3001 = vunpack.c.l.b16 %v2335
    %v3002 = vunpack.c.h.b16 %v2335
    %v3003 = vunpack.c.l.b16 %v2336
    %v3004 = vunpack.c.h.b16 %v2336
    %v3005 = vunpack.c.l.b16 %v2337
    %v3006 = vunpack.c.h.b16 %v2337
    %v3007 = vunpack.c.l.b16 %v2338
    %v3008 = vunpack.c.h.b16 %v2338
    %v3009 = vunpack.c.l.b16 %v2339
    %v3010 = vunpack.c.h.b16 %v2339
    %v3011 = vunpack.c.l.b16 %v2340
    %v3012 = vunpack.c.h.b16 %v2340
    %v3013 = vunpack.c.l.b16 %v2341
    %v3014 = vunpack.c.h.b16 %v2341
    %v3015 = vunpack.c.l.b16 %v2342
    %v3016 = vunpack.c.h.b16 %v2342
    %v3017 = vunpack.c.l.b16 %v2343
    %v3018 = vunpack.c.h.b16 %v2343
    %v3019 = vunpack.c.l.b16 %v2344
    %v3020 = vunpack.c.h.b16 %v2344
    %v3021 = vunpack.c.l.b16 %v2345
    %v3022 = vunpack.c.h.b16 %v2345
    %v3023 = vunpack.c.l.b16 %v2346
    %v3024 = vunpack.c.h.b16 %v2346
    %v3025 = vunpack.c.l.b16 %v2347
    %v3026 = vunpack.c.h.b16 %v2347
    %v3027 = vunpack.c.l.b16 %v2348
    %v3028 = vunpack.c.h.b16 %v2348
    %v3029 = vunpack.c.l.b16 %v2349
    %v3030 = vunpack.c.h.b16 %v2349
    %v3031 = vunpack.c.l.b16 %v2350
    %v3032 = vunpack.c.h.b16 %v2350
    %v3033 = vunpack.c.l.b16 %v2351
    %v3034 = vunpack.c.h.b16 %v2351
    %v3035 = vunpack.c.l.b16 %v2352
    %v3036 = vunpack.c.h.b16 %v2352
    %v3037 = vunpack.c.l.b16 %v2353
    %v3038 = vunpack.c.h.b16 %v2353
    %v3039 = vunpack.c.l.b16 %v2354
    %v3040 = vunpack.c.h.b16 %v2354
    %v3041 = vunpack.c.l.b16 %v2355
    %v3042 = vunpack.c.h.b16 %v2355
    %v3043 = vunpack.c.l.b16 %v2356
    %v3044 = vunpack.c.h.b16 %v2356
    %v3045 = vunpack.c.l.b16 %v2357
    %v3046 = vunpack.c.h.b16 %v2357
    %v3047 = vunpack.c.l.b16 %v2358
    %v3048 = vunpack.c.h.b16 %v2358
    %v3049 = vunpack.c.l.b16 %v2359
    %v3050 = vunpack.c.h.b16 %v2359
    %v3051 = vunpack.c.l.b16 %v2360
    %v3052 = vunpack.c.h.b16 %v2360
    %v3053 = vunpack.c.l.b16 %v2361
    %v3054 = vunpack.c.h.b16 %v2361
    %v3055 = vunpack.c.l.b16 %v2362
    %v3056 = vunpack.c.h.b16 %v2362
    %v3057 = vunpack.c.l.b16 %v2363
    %v3058 = vunpack.c.h.b16 %v2363
    %v3059 = vunpack.c.l.b16 %v2364
    %v3060 = vunpack.c.h.b16 %v2364
    %v3061 = vunpack.c.l.b16 %v2365
    %v3062 = vunpack.c.h.b16 %v2365
    %v3063 = vunpack.c.l.b16 %v2366
    %v3064 = vunpack.c.h.b16 %v2366
    %v3065 = vunpack.c.l.b16 %v2367
    %v3066 = vunpack.c.h.b16 %v2367
    %v3067 = vunpack.c.l.b16 %v2368
    %v3068 = vunpack.c.h.b16 %v2368
    %v3069 = vunpack.c.l.b16 %v2369
    %v3070 = vunpack.c.h.b16 %v2369
    %v3071 = vunpack.c.l.b16 %v2370
    %v3072 = vunpack.c.h.b16 %v2370
    %v3073 = vunpack.c.l.b16 %v2371
    %v3074 = vunpack.c.h.b16 %v2371
    %v3075 = vunpack.c.l.b16 %v2372
    %v3076 = vunpack.c.h.b16 %v2372
    %v3077 = vunpack.c.l.b16 %v2373
    %v3078 = vunpack.c.h.b16 %v2373
    %v3079 = vunpack.c.l.b16 %v2374
    %v3080 = vunpack.c.h.b16 %v2374
    %v3081 = vunpack.c.l.b16 %v2375
    %v3082 = vunpack.c.h.b16 %v2375
    %v3083 = vunpack.c.l.b16 %v2376
    %v3084 = vunpack.c.h.b16 %v2376
    %v3085 = vunpack.c.l.b16 %v2377
    %v3086 = vunpack.c.h.b16 %v2377
    %v3087 = vunpack.c.l.b16 %v2378
    %v3088 = vunpack.c.h.b16 %v2378
    %v3089 = vunpack.c.l.b16 %v2379
    %v3090 = vunpack.c.h.b16 %v2379
    %v3091 = vunpack.c.l.b16 %v2380
    %v3092 = vunpack.c.h.b16 %v2380
    %v3093 = vunpack.c.l.b16 %v2381
    %v3094 = vunpack.c.h.b16 %v2381
    %v3095 = vunpack.c.l.b16 %v2382
    %v3096 = vunpack.c.h.b16 %v2382
    %v3097 = vunpack.c.l.b16 %v2383
    %v3098 = vunpack.c.h.b16 %v2383
    %v3099 = vunpack.c.l.b16 %v2384
    %v3100 = vunpack.c.h.b16 %v2384
    %v3101 = vunpack.c.l.b16 %v2385
    %v3102 = vunpack.c.h.b16 %v2385
    %v3103 = vunpack.c.l.b16 %v2386
    %v3104 = vunpack.c.h.b16 %v2386
    %v3105 = vunpack.c.l.b16 %v2387
    %v3106 = vunpack.c.h.b16 %v2387
    %v3107 = vunpack.c.l.b16 %v2388
    %v3108 = vunpack.c.h.b16 %v2388
    %v3109 = vunpack.c.l.b16 %v2389
    %v3110 = vunpack.c.h.b16 %v2389
    %v3111 = vunpack.c.l.b16 %v2390
    %v3112 = vunpack.c.h.b16 %v2390
    %v3113 = vunpack.c.l.b16 %v2391
    %v3114 = vunpack.c.h.b16 %v2391
    %v3115 = vunpack.c.l.b16 %v2392
    %v3116 = vunpack.c.h.b16 %v2392
    %v3117 = vunpack.c.l.b16 %v2393
    %v3118 = vunpack.c.h.b16 %v2393
    %v3119 = vunpack.c.l.b16 %v2394
    %v3120 = vunpack.c.h.b16 %v2394
    %v3121 = vunpack.c.l.b16 %v2395
    %v3122 = vunpack.c.h.b16 %v2395
    %v3123 = vunpack.c.l.b16 %v2396
    %v3124 = vunpack.c.h.b16 %v2396
    %v3125 = vunpack.c.l.b16 %v2397
    %v3126 = vunpack.c.h.b16 %v2397
    %v3127 = vunpack.c.l.b16 %v2398
    %v3128 = vunpack.c.h.b16 %v2398
    %v3129 = vunpack.c.l.b16 %v2399
    %v3130 = vunpack.c.h.b16 %v2399
    %v3131 = vunpack.c.l.b16 %v2400
    %v3132 = vunpack.c.h.b16 %v2400
    %v3133 = vunpack.c.l.b16 %v2401
    %v3134 = vunpack.c.h.b16 %v2401
    %v3135 = vunpack.c.l.b16 %v2402
    %v3136 = vunpack.c.h.b16 %v2402
    %v3137 = vunpack.c.l.b16 %v2403
    %v3138 = vunpack.c.h.b16 %v2403
    %v3139 = vunpack.c.l.b16 %v2404
    %v3140 = vunpack.c.h.b16 %v2404
    %v3141 = vunpack.c.l.b16 %v2405
    %v3142 = vunpack.c.h.b16 %v2405
    %v3143 = vunpack.c.l.b16 %v2406
    %v3144 = vunpack.c.h.b16 %v2406
    %v3145 = vunpack.c.l.b16 %v2407
    %v3146 = vunpack.c.h.b16 %v2407
    %v3147 = vunpack.c.l.b16 %v2408
    %v3148 = vunpack.c.h.b16 %v2408
    %v3149 = vunpack.c.l.b16 %v2409
    %v3150 = vunpack.c.h.b16 %v2409
    %v3151 = vunpack.c.l.b16 %v2410
    %v3152 = vunpack.c.h.b16 %v2410
    %v3153 = vunpack.c.l.b16 %v2411
    %v3154 = vunpack.c.h.b16 %v2411
    %v3155 = vunpack.c.l.b16 %v2412
    %v3156 = vunpack.c.h.b16 %v2412
    %v3157 = vunpack.c.l.b16 %v2413
    %v3158 = vunpack.c.h.b16 %v2413
    %v3159 = vunpack.c.l.b16 %v2414
    %v3160 = vunpack.c.h.b16 %v2414
    %v3161 = vunpack.c.l.b16 %v2415
    %v3162 = vunpack.c.h.b16 %v2415
    %v3163 = vunpack.c.l.b16 %v2416
    %v3164 = vunpack.c.h.b16 %v2416
    %v3165 = vunpack.c.l.b16 %v2417
    %v3166 = vunpack.c.h.b16 %v2417
    %v3167 = vunpack.c.l.b16 %v2418
    %v3168 = vunpack.c.h.b16 %v2418
    %v3169 = vunpack.c.l.b16 %v2419
    %v3170 = vunpack.c.h.b16 %v2419
    %v3171 = vunpack.c.l.b16 %v2420
    %v3172 = vunpack.c.h.b16 %v2420
    %v3173 = vunpack.c.l.b16 %v2421
    %v3174 = vunpack.c.h.b16 %v2421
    %v3175 = vunpack.c.l.b16 %v2422
    %v3176 = vunpack.c.h.b16 %v2422
    %v3177 = vunpack.c.l.b16 %v2423
    %v3178 = vunpack.c.h.b16 %v2423
    %v3179 = vunpack.c.l.b16 %v2424
    %v3180 = vunpack.c.h.b16 %v2424
    %v3181 = vunpack.c.l.b16 %v2425
    %v3182 = vunpack.c.h.b16 %v2425
    %v3183 = vunpack.c.l.b16 %v2426
    %v3184 = vunpack.c.h.b16 %v2426
    %v3185 = vunpack.c.l.b16 %v2427
    %v3186 = vunpack.c.h.b16 %v2427
    %v3187 = vunpack.c.l.b16 %v2428
    %v3188 = vunpack.c.h.b16 %v2428
    %v3189 = vunpack.c.l.b16 %v2429
    %v3190 = vunpack.c.h.b16 %v2429
    %v3191 = vunpack.c.l.b16 %v2430
    %v3192 = vunpack.c.h.b16 %v2430
    %v3193 = vunpack.c.l.b16 %v2431
    %v3194 = vunpack.c.h.b16 %v2431
    %v3195 = vunpack.c.l.b16 %v2432
    %v3196 = vunpack.c.h.b16 %v2432
    %v3197 = vunpack.c.l.b16 %v2433
    %v3198 = vunpack.c.h.b16 %v2433
    %v3199 = vunpack.c.l.b16 %v2434
    %v3200 = vunpack.c.h.b16 %v2434
    %v3201 = vunpack.c.l.b16 %v2435
    %v3202 = vunpack.c.h.b16 %v2435
    %v3203 = vunpack.c.l.b16 %v2436
    %v3204 = vunpack.c.h.b16 %v2436
    %v3205 = vunpack.c.l.b16 %v2437
    %v3206 = vunpack.c.h.b16 %v2437
    %v3207 = vunpack.c.l.b16 %v2438
    %v3208 = vunpack.c.h.b16 %v2438
    %v3209 = vunpack.c.l.b16 %v2439
    %v3210 = vunpack.c.h.b16 %v2439
    %v3211 = vunpack.c.l.b16 %v2440
    %v3212 = vunpack.c.h.b16 %v2440
    %v3213 = vunpack.c.l.b16 %v2441
    %v3214 = vunpack.c.h.b16 %v2441
    %v3215 = vunpack.c.l.b16 %v2442
    %v3216 = vunpack.c.h.b16 %v2442
    %v3217 = vunpack.c.l.b16 %v2443
    %v3218 = vunpack.c.h.b16 %v2443
    %v3219 = vunpack.c.l.b16 %v2444
    %v3220 = vunpack.c.h.b16 %v2444
    %v3221 = vunpack.c.l.b16 %v2445
    %v3222 = vunpack.c.h.b16 %v2445
    %v3223 = vunpack.c.l.b16 %v2446
    %v3224 = vunpack.c.h.b16 %v2446
    %v3225 = vunpack.c.l.b16 %v2447
    %v3226 = vunpack.c.h.b16 %v2447
    %v3227 = vunpack.c.l.b16 %v2448
    %v3228 = vunpack.c.h.b16 %v2448
    %v3229 = vunpack.c.l.b16 %v2449
    %v3230 = vunpack.c.h.b16 %v2449
    %v3231 = vunpack.c.l.b16 %v2450
    %v3232 = vunpack.c.h.b16 %v2450
    %v3233 = vunpack.c.l.b16 %v2451
    %v3234 = vunpack.c.h.b16 %v2451
    %v3235 = vunpack.c.l.b16 %v2452
    %v3236 = vunpack.c.h.b16 %v2452
    %v3237 = vunpack.c.l.b16 %v2453
    %v3238 = vunpack.c.h.b16 %v2453
    %v3239 = vunpack.c.l.b16 %v2454
    %v3240 = vunpack.c.h.b16 %v2454
    %v3241 = vunpack.c.l.b16 %v2455
    %v3242 = vunpack.c.h.b16 %v2455
    %v3243 = vunpack.c.l.b16 %v2456
    %v3244 = vunpack.c.h.b16 %v2456
    %v3245 = vunpack.c.l.b16 %v2457
    %v3246 = vunpack.c.h.b16 %v2457
    %v3247 = vunpack.c.l.b16 %v2458
    %v3248 = vunpack.c.h.b16 %v2458
    %v3249 = vpack.c.b16 %v2741, %v2737
    %v3250 = vpack.c.b16 %v2742, %v2738
    %v3251 = vpack.c.b16 %v2743, %v2739
    %v3252 = vpack.c.b16 %v2744, %v2740
    %v3253 = vpack.c.b16 %v2749, %v2745
    %v3254 = vpack.c.b16 %v2750, %v2746
    %v3255 = vpack.c.b16 %v2751, %v2747
    %v3256 = vpack.c.b16 %v2752, %v2748
    %v3257 = vpack.c.b16 %v2757, %v2753
    %v3258 = vpack.c.b16 %v2758, %v2754
    %v3259 = vpack.c.b16 %v2759, %v2755
    %v3260 = vpack.c.b16 %v2760, %v2756
    %v3261 = vpack.c.b16 %v2765, %v2761
    %v3262 = vpack.c.b16 %v2766, %v2762
    %v3263 = vpack.c.b16 %v2767, %v2763
    %v3264 = vpack.c.b16 %v2768, %v2764
    %v3265 = vpack.c.b16 %v2773, %v2769
    %v3266 = vpack.c.b16 %v2774, %v2770
    %v3267 = vpack.c.b16 %v2775, %v2771
    %v3268 = vpack.c.b16 %v2776, %v2772
    %v3269 = vpack.c.b16 %v2781, %v2777
    %v3270 = vpack.c.b16 %v2782, %v2778
    %v3271 = vpack.c.b16 %v2783, %v2779
    %v3272 = vpack.c.b16 %v2784, %v2780
    %v3273 = vpack.c.b16 %v2789, %v2785
    %v3274 = vpack.c.b16 %v2790, %v2786
    %v3275 = vpack.c.b16 %v2791, %v2787
    %v3276 = vpack.c.b16 %v2792, %v2788
    %v3277 = vpack.c.b16 %v2797, %v2793
    %v3278 = vpack.c.b16 %v2798, %v2794
    %v3279 = vpack.c.b16 %v2799, %v2795
    %v3280 = vpack.c.b16 %v2800, %v2796
    %v3281 = vpack.c.b16 %v2805, %v2801
    %v3282 = vpack.c.b16 %v2806, %v2802
    %v3283 = vpack.c.b16 %v2807, %v2803
    %v3284 = vpack.c.b16 %v2808, %v2804
    %v3285 = vpack.c.b16 %v2813, %v2809
    %v3286 = vpack.c.b16 %v2814, %v2810
    %v3287 = vpack.c.b16 %v2815, %v2811
    %v3288 = vpack.c.b16 %v2816, %v2812
    %v3289 = vpack.c.b16 %v2821, %v2817
    %v3290 = vpack.c.b16 %v2822, %v2818
    %v3291 = vpack.c.b16 %v2823, %v2819
    %v3292 = vpack.c.b16 %v2824, %v2820
    %v3293 = vpack.c.b16 %v2829, %v2825
    %v3294 = vpack.c.b16 %v2830, %v2826
    %v3295 = vpack.c.b16 %v2831, %v2827
    %v3296 = vpack.c.b16 %v2832, %v2828
    %v3297 = vpack.c.b16 %v2837, %v2833
    %v3298 = vpack.c.b16 %v2838, %v2834
    %v3299 = vpack.c.b16 %v2839, %v2835
    %v3300 = vpack.c.b16 %v2840, %v2836
    %v3301 = vpack.c.b16 %v2845, %v2841
    %v3302 = vpack.c.b16 %v2846, %v2842
    %v3303 = vpack.c.b16 %v2847, %v2843
    %v3304 = vpack.c.b16 %v2848, %v2844
    %v3305 = vpack.c.b16 %v2853, %v2849
    %v3306 = vpack.c.b16 %v2854, %v2850
    %v3307 = vpack.c.b16 %v2855, %v2851
    %v3308 = vpack.c.b16 %v2856, %v2852
    %v3309 = vpack.c.b16 %v2861, %v2857
    %v3310 = vpack.c.b16 %v2862, %v2858
    %v3311 = vpack.c.b16 %v2863, %v2859
    %v3312 = vpack.c.b16 %v2864, %v2860
    %v3313 = vpack.c.b16 %v2869, %v2865
    %v3314 = vpack.c.b16 %v2870, %v2866
    %v3315 = vpack.c.b16 %v2871, %v2867
    %v3316 = vpack.c.b16 %v2872, %v2868
    %v3317 = vpack.c.b16 %v2877, %v2873
    %v3318 = vpack.c.b16 %v2878, %v2874
    %v3319 = vpack.c.b16 %v2879, %v2875
    %v3320 = vpack.c.b16 %v2880, %v2876
    %v3321 = vpack.c.b16 %v2885, %v2881
    %v3322 = vpack.c.b16 %v2886, %v2882
    %v3323 = vpack.c.b16 %v2887, %v2883
    %v3324 = vpack.c.b16 %v2888, %v2884
    %v3325 = vpack.c.b16 %v2893, %v2889
    %v3326 = vpack.c.b16 %v2894, %v2890
    %v3327 = vpack.c.b16 %v2895, %v2891
    %v3328 = vpack.c.b16 %v2896, %v2892
    %v3329 = vpack.c.b16 %v2901, %v2897
    %v3330 = vpack.c.b16 %v2902, %v2898
    %v3331 = vpack.c.b16 %v2903, %v2899
    %v3332 = vpack.c.b16 %v2904, %v2900
    %v3333 = vpack.c.b16 %v2909, %v2905
    %v3334 = vpack.c.b16 %v2910, %v2906
    %v3335 = vpack.c.b16 %v2911, %v2907
    %v3336 = vpack.c.b16 %v2912, %v2908
    %v3337 = vpack.c.b16 %v2917, %v2913
    %v3338 = vpack.c.b16 %v2918, %v2914
    %v3339 = vpack.c.b16 %v2919, %v2915
    %v3340 = vpack.c.b16 %v2920, %v2916
    %v3341 = vpack.c.b16 %v2925, %v2921
    %v3342 = vpack.c.b16 %v2926, %v2922
    %v3343 = vpack.c.b16 %v2927, %v2923
    %v3344 = vpack.c.b16 %v2928, %v2924
    %v3345 = vpack.c.b16 %v2933, %v2929
    %v3346 = vpack.c.b16 %v2934, %v2930
    %v3347 = vpack.c.b16 %v2935, %v2931
    %v3348 = vpack.c.b16 %v2936, %v2932
    %v3349 = vpack.c.b16 %v2941, %v2937
    %v3350 = vpack.c.b16 %v2942, %v2938
    %v3351 = vpack.c.b16 %v2943, %v2939
    %v3352 = vpack.c.b16 %v2944, %v2940
    %v3353 = vpack.c.b16 %v2949, %v2945
    %v3354 = vpack.c.b16 %v2950, %v2946
    %v3355 = vpack.c.b16 %v2951, %v2947
    %v3356 = vpack.c.b16 %v2952, %v2948
    %v3357 = vpack.c.b16 %v2957, %v2953
    %v3358 = vpack.c.b16 %v2958, %v2954
    %v3359 = vpack.c.b16 %v2959, %v2955
    %v3360 = vpack.c.b16 %v2960, %v2956
    %v3361 = vpack.c.b16 %v2965, %v2961
    %v3362 = vpack.c.b16 %v2966, %v2962
    %v3363 = vpack.c.b16 %v2967, %v2963
    %v3364 = vpack.c.b16 %v2968, %v2964
    %v3365 = vpack.c.b16 %v2973, %v2969
    %v3366 = vpack.c.b16 %v2974, %v2970
    %v3367 = vpack.c.b16 %v2975, %v2971
    %v3368 = vpack.c.b16 %v2976, %v2972
    %v3369 = vpack.c.b16 %v2981, %v2977
    %v3370 = vpack.c.b16 %v2982, %v2978
    %v3371 = vpack.c.b16 %v2983, %v2979
    %v3372 = vpack.c.b16 %v2984, %v2980
    %v3373 = vpack.c.b16 %v2989, %v2985
    %v3374 = vpack.c.b16 %v2990, %v2986
    %v3375 = vpack.c.b16 %v2991, %v2987
    %v3376 = vpack.c.b16 %v2992, %v2988
    %v3377 = vpack.c.b16 %v2997, %v2993
    %v3378 = vpack.c.b16 %v2998, %v2994
    %v3379 = vpack.c.b16 %v2999, %v2995
    %v3380 = vpack.c.b16 %v3000, %v2996
    %v3381 = vpack.c.b16 %v3005, %v3001
    %v3382 = vpack.c.b16 %v3006, %v3002
    %v3383 = vpack.c.b16 %v3007, %v3003
    %v3384 = vpack.c.b16 %v3008, %v3004
    %v3385 = vpack.c.b16 %v3013, %v3009
    %v3386 = vpack.c.b16 %v3014, %v3010
    %v3387 = vpack.c.b16 %v3015, %v3011
    %v3388 = vpack.c.b16 %v3016, %v3012
    %v3389 = vpack.c.b16 %v3021, %v3017
    %v3390 = vpack.c.b16 %v3022, %v3018
    %v3391 = vpack.c.b16 %v3023, %v3019
    %v3392 = vpack.c.b16 %v3024, %v3020
    %v3393 = vpack.c.b16 %v3029, %v3025
    %v3394 = vpack.c.b16 %v3030, %v3026
    %v3395 = vpack.c.b16 %v3031, %v3027
    %v3396 = vpack.c.b16 %v3032, %v3028
    %v3397 = vpack.c.b16 %v3037, %v3033
    %v3398 = vpack.c.b16 %v3038, %v3034
    %v3399 = vpack.c.b16 %v3039, %v3035
    %v3400 = vpack.c.b16 %v3040, %v3036
    %v3401 = vpack.c.b16 %v3045, %v3041
    %v3402 = vpack.c.b16 %v3046, %v3042
    %v3403 = vpack.c.b16 %v3047, %v3043
    %v3404 = vpack.c.b16 %v3048, %v3044
    %v3405 = vpack.c.b16 %v3053, %v3049
    %v3406 = vpack.c.b16 %v3054, %v3050
    %v3407 = vpack.c.b16 %v3055, %v3051
    %v3408 = vpack.c.b16 %v3056, %v3052
    %v3409 = vpack.c.b16 %v3061, %v3057
    %v3410 = vpack.c.b16 %v3062, %v3058
    %v3411 = vpack.c.b16 %v3063, %v3059
    %v3412 = vpack.c.b16 %v3064, %v3060
    %v3413 = vpack.c.b16 %v3069, %v3065
    %v3414 = vpack.c.b16 %v3070, %v3066
    %v3415 = vpack.c.b16 %v3071, %v3067
    %v3416 = vpack.c.b16 %v3072, %v3068
    %v3417 = vpack.c.b16 %v3077, %v3073
    %v3418 = vpack.c.b16 %v3078, %v3074
    %v3419 = vpack.c.b16 %v3079, %v3075
    %v3420 = vpack.c.b16 %v3080, %v3076
    %v3421 = vpack.c.b16 %v3085, %v3081
    %v3422 = vpack.c.b16 %v3086, %v3082
    %v3423 = vpack.c.b16 %v3087, %v3083
    %v3424 = vpack.c.b16 %v3088, %v3084
    %v3425 = vpack.c.b16 %v3093, %v3089
    %v3426 = vpack.c.b16 %v3094, %v3090
    %v3427 = vpack.c.b16 %v3095, %v3091
    %v3428 = vpack.c.b16 %v3096, %v3092
    %v3429 = vpack.c.b16 %v3101, %v3097
    %v3430 = vpack.c.b16 %v3102, %v3098
    %v3431 = vpack.c.b16 %v3103, %v3099
    %v3432 = vpack.c.b16 %v3104, %v3100
    %v3433 = vpack.c.b16 %v3109, %v3105
    %v3434 = vpack.c.b16 %v3110, %v3106
    %v3435 = vpack.c.b16 %v3111, %v3107
    %v3436 = vpack.c.b16 %v3112, %v3108
    %v3437 = vpack.c.b16 %v3117, %v3113
    %v3438 = vpack.c.b16 %v3118, %v3114
    %v3439 = vpack.c.b16 %v3119, %v3115
    %v3440 = vpack.c.b16 %v3120, %v3116
    %v3441 = vpack.c.b16 %v3125, %v3121
    %v3442 = vpack.c.b16 %v3126, %v3122
    %v3443 = vpack.c.b16 %v3127, %v3123
    %v3444 = vpack.c.b16 %v3128, %v3124
    %v3445 = vpack.c.b16 %v3133, %v3129
    %v3446 = vpack.c.b16 %v3134, %v3130
    %v3447 = vpack.c.b16 %v3135, %v3131
    %v3448 = vpack.c.b16 %v3136, %v3132
    %v3449 = vpack.c.b16 %v3141, %v3137
    %v3450 = vpack.c.b16 %v3142, %v3138
    %v3451 = vpack.c.b16 %v3143, %v3139
    %v3452 = vpack.c.b16 %v3144, %v3140
    %v3453 = vpack.c.b16 %v3149, %v3145
    %v3454 = vpack.c.b16 %v3150, %v3146
    %v3455 = vpack.c.b16 %v3151, %v3147
    %v3456 = vpack.c.b16 %v3152, %v3148
    %v3457 = vpack.c.b16 %v3157, %v3153
    %v3458 = vpack.c.b16 %v3158, %v3154
    %v3459 = vpack.c.b16 %v3159, %v3155
    %v3460 = vpack.c.b16 %v3160, %v3156
    %v3461 = vpack.c.b16 %v3165, %v3161
    %v3462 = vpack.c.b16 %v3166, %v3162
    %v3463 = vpack.c.b16 %v3167, %v3163
    %v3464 = vpack.c.b16 %v3168, %v3164
    %v3465 = vpack.c.b16 %v3173, %v3169
    %v3466 = vpack.c.b16 %v3174, %v3170
    %v3467 = vpack.c.b16 %v3175, %v3171
    %v3468 = vpack.c.b16 %v3176, %v3172
    %v3469 = vpack.c.b16 %v3181, %v3177
    %v3470 = vpack.c.b16 %v3182, %v3178
    %v3471 = vpack.c.b16 %v3183, %v3179
    %v3472 = vpack.c.b16 %v3184, %v3180
    %v3473 = vpack.c.b16 %v3189, %v3185
    %v3474 = vpack.c.b16 %v3190, %v3186
    %v3475 = vpack.c.b16 %v3191, %v3187
    %v3476 = vpack.c.b16 %v3192, %v3188
    %v3477 = vpack.c.b16 %v3197, %v3193
    %v3478 = vpack.c.b16 %v3198, %v3194
    %v3479 = vpack.c.b16 %v3199, %v3195
    %v3480 = vpack.c.b16 %v3200, %v3196
    %v3481 = vpack.c.b16 %v3205, %v3201
    %v3482 = vpack.c.b16 %v3206, %v3202
    %v3483 = vpack.c.b16 %v3207, %v3203
    %v3484 = vpack.c.b16 %v3208, %v3204
    %v3485 = vpack.c.b16 %v3213, %v3209
    %v3486 = vpack.c.b16 %v3214, %v3210
    %v3487 = vpack.c.b16 %v3215, %v3211
    %v3488 = vpack.c.b16 %v3216, %v3212
    %v3489 = vpack.c.b16 %v3221, %v3217
    %v3490 = vpack.c.b16 %v3222, %v3218
    %v3491 = vpack.c.b16 %v3223, %v3219
    %v3492 = vpack.c.b16 %v3224, %v3220
    %v3493 = vpack.c.b16 %v3229, %v3225
    %v3494 = vpack.c.b16 %v3230, %v3226
    %v3495 = vpack.c.b16 %v3231, %v3227
    %v3496 = vpack.c.b16 %v3232, %v3228
    %v3497 = vpack.c.b16 %v3237, %v3233
    %v3498 = vpack.c.b16 %v3238, %v3234
    %v3499 = vpack.c.b16 %v3239, %v3235
    %v3500 = vpack.c.b16 %v3240, %v3236
    %v3501 = vpack.c.b16 %v3245, %v3241
    %v3502 = vpack.c.b16 %v3246, %v3242
    %v3503 = vpack.c.b16 %v3247, %v3243
    %v3504 = vpack.c.b16 %v3248, %v3244
    %3761 = vmatprep.subr.bf16.mxu0 %v3250
    %3762 = vmatpush1.bf16.msra.mxu0 %v3249
    %3763 = vmatprep.subr.bf16.mxu0 %v3254
    %3764 = vmatpush1.bf16.msra.mxu0 %v3253
    %3765 = vmatprep.subr.bf16.mxu0 %v3258
    %3766 = vmatpush1.bf16.msra.mxu0 %v3257
    %3767 = vmatprep.subr.bf16.mxu0 %v3262
    %3768 = vmatpush1.bf16.msra.mxu0 %v3261
    %3769 = vmatprep.subr.bf16.mxu0 %v3266
    %3770 = vmatpush1.bf16.msra.mxu0 %v3265
    %3771 = vmatprep.subr.bf16.mxu0 %v3270
    %3772 = vmatpush1.bf16.msra.mxu0 %v3269
    %3773 = vmatprep.subr.bf16.mxu0 %v3274
    %3774 = vmatpush1.bf16.msra.mxu0 %v3273
    %3775 = vmatprep.subr.bf16.mxu0 %v3278
    %3776 = vmatpush1.bf16.msra.mxu0 %v3277
    %3777 = vmatprep.subr.bf16.mxu0 %v3282
    %3778 = vmatpush1.bf16.msra.mxu0 %v3281
    %3779 = vmatprep.subr.bf16.mxu0 %v3286
    %3780 = vmatpush1.bf16.msra.mxu0 %v3285
    %3781 = vmatprep.subr.bf16.mxu0 %v3290
    %3782 = vmatpush1.bf16.msra.mxu0 %v3289
    %3783 = vmatprep.subr.bf16.mxu0 %v3294
    %3784 = vmatpush1.bf16.msra.mxu0 %v3293
    %3785 = vmatprep.subr.bf16.mxu0 %v3298
    %3786 = vmatpush1.bf16.msra.mxu0 %v3297
    %3787 = vmatprep.subr.bf16.mxu0 %v3302
    %3788 = vmatpush1.bf16.msra.mxu0 %v3301
    %3789 = vmatprep.subr.bf16.mxu0 %v3306
    %3790 = vmatpush1.bf16.msra.mxu0 %v3305
    %3791 = vmatprep.subr.bf16.mxu0 %v3310
    %3792 = vmatpush1.bf16.msra.mxu0 %v3309
    %3793 = vmatprep.mubr.bf16.mxu0 %v2196
    %3794 = vmatmul.mubr.bf16.gmra.mrb[0].mxu0 %v2195
    %v3795 = vpop.f32.mrb[0].mxu0
    %v3796 = vadd.f32 %v2464, %v3795
    %v3797 = vpop.f32.mrb[0].mxu0
    %v3798 = vadd.f32 %v2468, %v3797
    %v3799 = vpop.f32.mrb[0].mxu0
    %v3800 = vpop.f32.mrb[0].mxu0
    %3801 = vdwg.mxu0
    %3802 = vmatprep.subr.bf16.mxu0 %v3314
    %3803 = vmatpush1.bf16.msra.mxu0 %v3313
    %3804 = vmatprep.subr.bf16.mxu0 %v3318
    %3805 = vmatpush1.bf16.msra.mxu0 %v3317
    %3806 = vmatprep.subr.bf16.mxu0 %v3322
    %3807 = vmatpush1.bf16.msra.mxu0 %v3321
    %3808 = vmatprep.subr.bf16.mxu0 %v3326
    %3809 = vmatpush1.bf16.msra.mxu0 %v3325
    %3810 = vmatprep.subr.bf16.mxu0 %v3330
    %3811 = vmatpush1.bf16.msra.mxu0 %v3329
    %3812 = vmatprep.subr.bf16.mxu0 %v3334
    %3813 = vmatpush1.bf16.msra.mxu0 %v3333
    %3814 = vmatprep.subr.bf16.mxu0 %v3338
    %3815 = vmatpush1.bf16.msra.mxu0 %v3337
    %3816 = vmatprep.subr.bf16.mxu0 %v3342
    %3817 = vmatpush1.bf16.msra.mxu0 %v3341
    %3818 = vmatprep.subr.bf16.mxu0 %v3346
    %3819 = vmatpush1.bf16.msra.mxu0 %v3345
    %3820 = vmatprep.subr.bf16.mxu0 %v3350
    %3821 = vmatpush1.bf16.msra.mxu0 %v3349
    %3822 = vmatprep.subr.bf16.mxu0 %v3354
    %3823 = vmatpush1.bf16.msra.mxu0 %v3353
    %3824 = vmatprep.subr.bf16.mxu0 %v3358
    %3825 = vmatpush1.bf16.msra.mxu0 %v3357
    %3826 = vmatprep.subr.bf16.mxu0 %v3362
    %3827 = vmatpush1.bf16.msra.mxu0 %v3361
    %3828 = vmatprep.subr.bf16.mxu0 %v3366
    %3829 = vmatpush1.bf16.msra.mxu0 %v3365
    %3830 = vmatprep.subr.bf16.mxu0 %v3370
    %3831 = vmatpush1.bf16.msra.mxu0 %v3369
    %3832 = vmatprep.subr.bf16.mxu0 %v3374
    %3833 = vmatpush1.bf16.msra.mxu0 %v3373
    %3834 = vmatprep.mubr.bf16.mxu0 %v2198
    %3835 = vmatmul.mubr.bf16.gmra.mrb[0].mxu0 %v2197
    %v3836 = vpop.f32.mrb[0].mxu0
    %v3837 = vadd.f32 %v3796, %v3836
    %v3838 = vpop.f32.mrb[0].mxu0
    %v3839 = vadd.f32 %v3798, %v3838
    %v3840 = vpop.f32.mrb[0].mxu0
    %v3841 = vpop.f32.mrb[0].mxu0
    %3842 = vdwg.mxu0
    %3843 = vmatprep.subr.bf16.mxu0 %v3378
    %3844 = vmatpush1.bf16.msra.mxu0 %v3377
    %3845 = vmatprep.subr.bf16.mxu0 %v3382
    %3846 = vmatpush1.bf16.msra.mxu0 %v3381
    %3847 = vmatprep.subr.bf16.mxu0 %v3386
    %3848 = vmatpush1.bf16.msra.mxu0 %v3385
    %3849 = vmatprep.subr.bf16.mxu0 %v3390
    %3850 = vmatpush1.bf16.msra.mxu0 %v3389
    %3851 = vmatprep.subr.bf16.mxu0 %v3394
    %3852 = vmatpush1.bf16.msra.mxu0 %v3393
    %3853 = vmatprep.subr.bf16.mxu0 %v3398
    %3854 = vmatpush1.bf16.msra.mxu0 %v3397
    %3855 = vmatprep.subr.bf16.mxu0 %v3402
    %3856 = vmatpush1.bf16.msra.mxu0 %v3401
    %3857 = vmatprep.subr.bf16.mxu0 %v3406
    %3858 = vmatpush1.bf16.msra.mxu0 %v3405
    %3859 = vmatprep.subr.bf16.mxu0 %v3410
    %3860 = vmatpush1.bf16.msra.mxu0 %v3409
    %3861 = vmatprep.subr.bf16.mxu0 %v3414
    %3862 = vmatpush1.bf16.msra.mxu0 %v3413
    %3863 = vmatprep.subr.bf16.mxu0 %v3418
    %3864 = vmatpush1.bf16.msra.mxu0 %v3417
    %3865 = vmatprep.subr.bf16.mxu0 %v3422
    %3866 = vmatpush1.bf16.msra.mxu0 %v3421
    %3867 = vmatprep.subr.bf16.mxu0 %v3426
    %3868 = vmatpush1.bf16.msra.mxu0 %v3425
    %3869 = vmatprep.subr.bf16.mxu0 %v3430
    %3870 = vmatpush1.bf16.msra.mxu0 %v3429
    %3871 = vmatprep.subr.bf16.mxu0 %v3434
    %3872 = vmatpush1.bf16.msra.mxu0 %v3433
    %3873 = vmatprep.subr.bf16.mxu0 %v3438
    %3874 = vmatpush1.bf16.msra.mxu0 %v3437
    %3875 = vmatprep.mubr.bf16.mxu0 %v2200
    %3876 = vmatmul.mubr.bf16.gmra.mrb[0].mxu0 %v2199
    %v3877 = vpop.f32.mrb[0].mxu0
    %v3878 = vadd.f32 %v3837, %v3877
    %v3879 = vpop.f32.mrb[0].mxu0
    %v3880 = vadd.f32 %v3839, %v3879
    %v3881 = vpop.f32.mrb[0].mxu0
    %v3882 = vpop.f32.mrb[0].mxu0
    %3883 = vdwg.mxu0
    %3884 = vmatprep.subr.bf16.mxu0 %v3442
    %3885 = vmatpush1.bf16.msra.mxu0 %v3441
    %3886 = vmatprep.subr.bf16.mxu0 %v3446
    %3887 = vmatpush1.bf16.msra.mxu0 %v3445
    %3888 = vmatprep.subr.bf16.mxu0 %v3450
    %3889 = vmatpush1.bf16.msra.mxu0 %v3449
    %3890 = vmatprep.subr.bf16.mxu0 %v3454
    %3891 = vmatpush1.bf16.msra.mxu0 %v3453
    %3892 = vmatprep.subr.bf16.mxu0 %v3458
    %3893 = vmatpush1.bf16.msra.mxu0 %v3457
    %3894 = vmatprep.subr.bf16.mxu0 %v3462
    %3895 = vmatpush1.bf16.msra.mxu0 %v3461
    %3896 = vmatprep.subr.bf16.mxu0 %v3466
    %3897 = vmatpush1.bf16.msra.mxu0 %v3465
    %3898 = vmatprep.subr.bf16.mxu0 %v3470
    %3899 = vmatpush1.bf16.msra.mxu0 %v3469
    %3900 = vmatprep.subr.bf16.mxu0 %v3474
    %3901 = vmatpush1.bf16.msra.mxu0 %v3473
    %3902 = vmatprep.subr.bf16.mxu0 %v3478
    %3903 = vmatpush1.bf16.msra.mxu0 %v3477
    %3904 = vmatprep.subr.bf16.mxu0 %v3482
    %3905 = vmatpush1.bf16.msra.mxu0 %v3481
    %3906 = vmatprep.subr.bf16.mxu0 %v3486
    %3907 = vmatpush1.bf16.msra.mxu0 %v3485
    %3908 = vmatprep.subr.bf16.mxu0 %v3490
    %3909 = vmatpush1.bf16.msra.mxu0 %v3489
    %3910 = vmatprep.subr.bf16.mxu0 %v3494
    %3911 = vmatpush1.bf16.msra.mxu0 %v3493
    %3912 = vmatprep.subr.bf16.mxu0 %v3498
    %3913 = vmatpush1.bf16.msra.mxu0 %v3497
    %3914 = vmatprep.subr.bf16.mxu0 %v3502
    %3915 = vmatpush1.bf16.msra.mxu0 %v3501
    %3916 = vmatprep.mubr.bf16.mxu0 %v2202
    %3917 = vmatmul.mubr.bf16.gmra.mrb[0].mxu0 %v2201
    %v3918 = vpop.f32.mrb[0].mxu0
    %v3919 = vadd.f32 %v3878, %v3918
    %v3920 = vpop.f32.mrb[0].mxu0
    %v3921 = vadd.f32 %v3880, %v3920
    %v3922 = vpop.f32.mrb[0].mxu0
    %v3923 = vpop.f32.mrb[0].mxu0
    %3924 = vdwg.mxu0
    %3925 = vmatprep.subr.bf16.mxu0 %v3252
    %3926 = vmatpush1.bf16.msra.mxu0 %v3251
    %3927 = vmatprep.subr.bf16.mxu0 %v3256
    %3928 = vmatpush1.bf16.msra.mxu0 %v3255
    %3929 = vmatprep.subr.bf16.mxu0 %v3260
    %3930 = vmatpush1.bf16.msra.mxu0 %v3259
    %3931 = vmatprep.subr.bf16.mxu0 %v3264
    %3932 = vmatpush1.bf16.msra.mxu0 %v3263
    %3933 = vmatprep.subr.bf16.mxu0 %v3268
    %3934 = vmatpush1.bf16.msra.mxu0 %v3267
    %3935 = vmatprep.subr.bf16.mxu0 %v3272
    %3936 = vmatpush1.bf16.msra.mxu0 %v3271
    %3937 = vmatprep.subr.bf16.mxu0 %v3276
    %3938 = vmatpush1.bf16.msra.mxu0 %v3275
    %3939 = vmatprep.subr.bf16.mxu0 %v3280
    %3940 = vmatpush1.bf16.msra.mxu0 %v3279
    %3941 = vmatprep.subr.bf16.mxu0 %v3284
    %3942 = vmatpush1.bf16.msra.mxu0 %v3283
    %3943 = vmatprep.subr.bf16.mxu0 %v3288
    %3944 = vmatpush1.bf16.msra.mxu0 %v3287
    %3945 = vmatprep.subr.bf16.mxu0 %v3292
    %3946 = vmatpush1.bf16.msra.mxu0 %v3291
    %3947 = vmatprep.subr.bf16.mxu0 %v3296
    %3948 = vmatpush1.bf16.msra.mxu0 %v3295
    %3949 = vmatprep.subr.bf16.mxu0 %v3300
    %3950 = vmatpush1.bf16.msra.mxu0 %v3299
    %3951 = vmatprep.subr.bf16.mxu0 %v3304
    %3952 = vmatpush1.bf16.msra.mxu0 %v3303
    %3953 = vmatprep.subr.bf16.mxu0 %v3308
    %3954 = vmatpush1.bf16.msra.mxu0 %v3307
    %3955 = vmatprep.subr.bf16.mxu0 %v3312
    %3956 = vmatpush1.bf16.msra.mxu0 %v3311
    %3957 = vmatprep.mubr.bf16.mxu0 %v2196
    %3958 = vmatmul.mubr.bf16.gmra.mrb[0].mxu0 %v2195
    %v3959 = vpop.f32.mrb[0].mxu0
    %v3960 = vadd.f32 %v2472, %v3959
    %v3961 = vpop.f32.mrb[0].mxu0
    %v3962 = vadd.f32 %v2476, %v3961
    %v3963 = vpop.f32.mrb[0].mxu0
    %v3964 = vpop.f32.mrb[0].mxu0
    %3965 = vdwg.mxu0
    %3966 = vmatprep.subr.bf16.mxu0 %v3316
    %3967 = vmatpush1.bf16.msra.mxu0 %v3315
    %3968 = vmatprep.subr.bf16.mxu0 %v3320
    %3969 = vmatpush1.bf16.msra.mxu0 %v3319
    %3970 = vmatprep.subr.bf16.mxu0 %v3324
    %3971 = vmatpush1.bf16.msra.mxu0 %v3323
    %3972 = vmatprep.subr.bf16.mxu0 %v3328
    %3973 = vmatpush1.bf16.msra.mxu0 %v3327
    %3974 = vmatprep.subr.bf16.mxu0 %v3332
    %3975 = vmatpush1.bf16.msra.mxu0 %v3331
    %3976 = vmatprep.subr.bf16.mxu0 %v3336
    %3977 = vmatpush1.bf16.msra.mxu0 %v3335
    %3978 = vmatprep.subr.bf16.mxu0 %v3340
    %3979 = vmatpush1.bf16.msra.mxu0 %v3339
    %3980 = vmatprep.subr.bf16.mxu0 %v3344
    %3981 = vmatpush1.bf16.msra.mxu0 %v3343
    %3982 = vmatprep.subr.bf16.mxu0 %v3348
    %3983 = vmatpush1.bf16.msra.mxu0 %v3347
    %3984 = vmatprep.subr.bf16.mxu0 %v3352
    %3985 = vmatpush1.bf16.msra.mxu0 %v3351
    %3986 = vmatprep.subr.bf16.mxu0 %v3356
    %3987 = vmatpush1.bf16.msra.mxu0 %v3355
    %3988 = vmatprep.subr.bf16.mxu0 %v3360
    %3989 = vmatpush1.bf16.msra.mxu0 %v3359
    %3990 = vmatprep.subr.bf16.mxu0 %v3364
    %3991 = vmatpush1.bf16.msra.mxu0 %v3363
    %3992 = vmatprep.subr.bf16.mxu0 %v3368
    %3993 = vmatpush1.bf16.msra.mxu0 %v3367
    %3994 = vmatprep.subr.bf16.mxu0 %v3372
    %3995 = vmatpush1.bf16.msra.mxu0 %v3371
    %3996 = vmatprep.subr.bf16.mxu0 %v3376
    %3997 = vmatpush1.bf16.msra.mxu0 %v3375
    %3998 = vmatprep.mubr.bf16.mxu0 %v2198
    %3999 = vmatmul.mubr.bf16.gmra.mrb[0].mxu0 %v2197
    %v4000 = vpop.f32.mrb[0].mxu0
    %v4001 = vadd.f32 %v3960, %v4000
    %v4002 = vpop.f32.mrb[0].mxu0
    %v4003 = vadd.f32 %v3962, %v4002
    %v4004 = vpop.f32.mrb[0].mxu0
    %v4005 = vpop.f32.mrb[0].mxu0
    %4006 = vdwg.mxu0
    %4007 = vmatprep.subr.bf16.mxu0 %v3380
    %4008 = vmatpush1.bf16.msra.mxu0 %v3379
    %4009 = vmatprep.subr.bf16.mxu0 %v3384
    %4010 = vmatpush1.bf16.msra.mxu0 %v3383
    %4011 = vmatprep.subr.bf16.mxu0 %v3388
    %4012 = vmatpush1.bf16.msra.mxu0 %v3387
    %4013 = vmatprep.subr.bf16.mxu0 %v3392
    %4014 = vmatpush1.bf16.msra.mxu0 %v3391
    %4015 = vmatprep.subr.bf16.mxu0 %v3396
    %4016 = vmatpush1.bf16.msra.mxu0 %v3395
    %4017 = vmatprep.subr.bf16.mxu0 %v3400
    %4018 = vmatpush1.bf16.msra.mxu0 %v3399
    %4019 = vmatprep.subr.bf16.mxu0 %v3404
    %4020 = vmatpush1.bf16.msra.mxu0 %v3403
    %4021 = vmatprep.subr.bf16.mxu0 %v3408
    %4022 = vmatpush1.bf16.msra.mxu0 %v3407
    %4023 = vmatprep.subr.bf16.mxu0 %v3412
    %4024 = vmatpush1.bf16.msra.mxu0 %v3411
    %4025 = vmatprep.subr.bf16.mxu0 %v3416
    %4026 = vmatpush1.bf16.msra.mxu0 %v3415
    %4027 = vmatprep.subr.bf16.mxu0 %v3420
    %4028 = vmatpush1.bf16.msra.mxu0 %v3419
    %4029 = vmatprep.subr.bf16.mxu0 %v3424
    %4030 = vmatpush1.bf16.msra.mxu0 %v3423
    %4031 = vmatprep.subr.bf16.mxu0 %v3428
    %4032 = vmatpush1.bf16.msra.mxu0 %v3427
    %4033 = vmatprep.subr.bf16.mxu0 %v3432
    %4034 = vmatpush1.bf16.msra.mxu0 %v3431
    %4035 = vmatprep.subr.bf16.mxu0 %v3436
    %4036 = vmatpush1.bf16.msra.mxu0 %v3435
    %4037 = vmatprep.subr.bf16.mxu0 %v3440
    %4038 = vmatpush1.bf16.msra.mxu0 %v3439
    %4039 = vmatprep.mubr.bf16.mxu0 %v2200
    %4040 = vmatmul.mubr.bf16.gmra.mrb[0].mxu0 %v2199
    %v4041 = vpop.f32.mrb[0].mxu0
    %v4042 = vadd.f32 %v4001, %v4041
    %v4043 = vpop.f32.mrb[0].mxu0
    %v4044 = vadd.f32 %v4003, %v4043
    %v4045 = vpop.f32.mrb[0].mxu0
    %v4046 = vpop.f32.mrb[0].mxu0
    %4047 = vdwg.mxu0
    %4048 = vmatprep.subr.bf16.mxu0 %v3444
    %4049 = vmatpush1.bf16.msra.mxu0 %v3443
    %4050 = vmatprep.subr.bf16.mxu0 %v3448
    %4051 = vmatpush1.bf16.msra.mxu0 %v3447
    %4052 = vmatprep.subr.bf16.mxu0 %v3452
    %4053 = vmatpush1.bf16.msra.mxu0 %v3451
    %4054 = vmatprep.subr.bf16.mxu0 %v3456
    %4055 = vmatpush1.bf16.msra.mxu0 %v3455
    %4056 = vmatprep.subr.bf16.mxu0 %v3460
    %4057 = vmatpush1.bf16.msra.mxu0 %v3459
    %4058 = vmatprep.subr.bf16.mxu0 %v3464
    %4059 = vmatpush1.bf16.msra.mxu0 %v3463
    %4060 = vmatprep.subr.bf16.mxu0 %v3468
    %4061 = vmatpush1.bf16.msra.mxu0 %v3467
    %4062 = vmatprep.subr.bf16.mxu0 %v3472
    %4063 = vmatpush1.bf16.msra.mxu0 %v3471
    %4064 = vmatprep.subr.bf16.mxu0 %v3476
    %4065 = vmatpush1.bf16.msra.mxu0 %v3475
    %4066 = vmatprep.subr.bf16.mxu0 %v3480
    %4067 = vmatpush1.bf16.msra.mxu0 %v3479
    %4068 = vmatprep.subr.bf16.mxu0 %v3484
    %4069 = vmatpush1.bf16.msra.mxu0 %v3483
    %4070 = vmatprep.subr.bf16.mxu0 %v3488
    %4071 = vmatpush1.bf16.msra.mxu0 %v3487
    %4072 = vmatprep.subr.bf16.mxu0 %v3492
    %4073 = vmatpush1.bf16.msra.mxu0 %v3491
    %4074 = vmatprep.subr.bf16.mxu0 %v3496
    %4075 = vmatpush1.bf16.msra.mxu0 %v3495
    %4076 = vmatprep.subr.bf16.mxu0 %v3500
    %4077 = vmatpush1.bf16.msra.mxu0 %v3499
    %4078 = vmatprep.subr.bf16.mxu0 %v3504
    %4079 = vmatpush1.bf16.msra.mxu0 %v3503
    %4080 = vmatprep.mubr.bf16.mxu0 %v2202
    %4081 = vmatmul.mubr.bf16.gmra.mrb[0].mxu0 %v2201
    %v4082 = vpop.f32.mrb[0].mxu0
    %v4083 = vadd.f32 %v4042, %v4082
    %v4084 = vpop.f32.mrb[0].mxu0
    %v4085 = vadd.f32 %v4044, %v4084
    %v4086 = vpop.f32.mrb[0].mxu0
    %v4087 = vpop.f32.mrb[0].mxu0
    %4088 = vdwg.mxu0
    %v4089 = vld [vmem:[%s7] sm:$0xf]
    %v4090 = vld [vmem:[%s8] sm:$0xf]
    %v4091 = vadd.f32 %v3919, %v3921
    %v4092 = vadd.f32 %v4091, %v4083
    %v4093 = vadd.f32 %v4092, %v4085
    %4094 = vadd.xlane.f32.xlu0 %v4093
    %v4095 = vpop.xlane.xlu0 %4094
    %v4096 = vmul.f32 %v3919, %v3919
    %v4097 = vmul.f32 %v3921, %v3921
    %v4098 = vmul.f32 %v4083, %v4083
    %v4099 = vmul.f32 %v4085, %v4085
    %v4100 = vadd.f32 %v4096, %v4097
    %v4101 = vadd.f32 %v4100, %v4098
    %v4102 = vadd.f32 %v4101, %v4099
    %4103 = vadd.xlane.f32.xlu0 %v4102
    %v4104 = vpop.xlane.xlu0 %4103
    %v4105 = vmul.f32 %v4095, 0.001953125
    %v4106 = vmul.f32 %v4104, 0.001953125
    %v4107 = vmul.f32 %v4105, %v4105
    %v4108 = vsub.f32 %v4106, %v4107
    %v4109 = vmax.f32 %v4108, 0.0
    %v4110 = vadd.f32 %v4109, 1e-05
    %v4111 = vrsqrt.pop %v4110
    %v4112 = vsub.f32 %v3919, %v4105
    %v4113 = vsub.f32 %v3921, %v4105
    %v4114 = vsub.f32 %v4083, %v4105
    %v4115 = vsub.f32 %v4085, %v4105
    %v4116 = vmul.f32 %v4112, %v4111
    %v4117 = vmul.f32 %v4113, %v4111
    %v4118 = vmul.f32 %v4114, %v4111
    %v4119 = vmul.f32 %v4115, %v4111
    %v4121 = vlaneseq
    %v4122 = vshrl.u32 %v4121, 7
    %v4123 = vsub.s32 0, %v4122
    %v4124 = vrot.slane %v4089, %v4123
    %v4125 = vlaneseq
    %v4126 = vshrl.u32 %v4125, 7
    %v4127 = vsub.s32 1, %v4126
    %v4128 = vrot.slane %v4089, %v4127
    %v4129 = vlaneseq
    %v4130 = vshrl.u32 %v4129, 7
    %v4131 = vsub.s32 2, %v4130
    %v4132 = vrot.slane %v4089, %v4131
    %v4133 = vlaneseq
    %v4134 = vshrl.u32 %v4133, 7
    %v4135 = vsub.s32 3, %v4134
    %v4136 = vrot.slane %v4089, %v4135
    %v4141 = vmul.f32 %v4116, %v4124
    %v4142 = vmul.f32 %v4117, %v4128
    %v4143 = vmul.f32 %v4118, %v4132
    %v4144 = vmul.f32 %v4119, %v4136
    %v4146 = vlaneseq
    %v4147 = vshrl.u32 %v4146, 7
    %v4148 = vsub.s32 0, %v4147
    %v4149 = vrot.slane %v4090, %v4148
    %v4150 = vlaneseq
    %v4151 = vshrl.u32 %v4150, 7
    %v4152 = vsub.s32 1, %v4151
    %v4153 = vrot.slane %v4090, %v4152
    %v4154 = vlaneseq
    %v4155 = vshrl.u32 %v4154, 7
    %v4156 = vsub.s32 2, %v4155
    %v4157 = vrot.slane %v4090, %v4156
    %v4158 = vlaneseq
    %v4159 = vshrl.u32 %v4158, 7
    %v4160 = vsub.s32 3, %v4159
    %v4161 = vrot.slane %v4090, %v4160
    %v4166 = vadd.f32 %v4141, %v4149
    %v4167 = vadd.f32 %v4142, %v4153
    %v4168 = vadd.f32 %v4143, %v4157
    %v4169 = vadd.f32 %v4144, %v4161
    %v4170 = vmax.f32 %v4166, 0.0
    %v4171 = vmax.f32 %v4167, 0.0
    %v4172 = vmax.f32 %v4168, 0.0
    %v4173 = vmax.f32 %v4169, 0.0
    %v4174 = vpack.c.bf16 %v4170, %v4170
    %v4175 = vpack.c.bf16 %v4171, %v4171
    %v4176 = vpack.c.bf16 %v4172, %v4172
    %v4177 = vpack.c.bf16 %v4173, %v4173
    %v4178 = vld [vmem:[#allocation11] sm:$0xf]
    %v4179 = vld [vmem:[#allocation11 + $0x4] sm:$0xf]
    %v4180 = vld [vmem:[#allocation11 + $0x8] sm:$0xf]
    %v4181 = vld [vmem:[#allocation11 + $0xc] sm:$0xf]
    %v4182 = vld [vmem:[#allocation11 + $0x10] sm:$0xf]
    %v4183 = vld [vmem:[#allocation11 + $0x14] sm:$0xf]
    %v4184 = vld [vmem:[#allocation11 + $0x18] sm:$0xf]
    %v4185 = vld [vmem:[#allocation11 + $0x1c] sm:$0xf]
    %v4186 = vld [vmem:[#allocation11 + $0x20] sm:$0xf]
    %v4187 = vld [vmem:[#allocation11 + $0x24] sm:$0xf]
    %v4188 = vld [vmem:[#allocation11 + $0x28] sm:$0xf]
    %v4189 = vld [vmem:[#allocation11 + $0x2c] sm:$0xf]
    %v4190 = vld [vmem:[#allocation11 + $0x30] sm:$0xf]
    %v4191 = vld [vmem:[#allocation11 + $0x34] sm:$0xf]
    %v4192 = vld [vmem:[#allocation11 + $0x38] sm:$0xf]
    %v4193 = vld [vmem:[#allocation11 + $0x3c] sm:$0xf]
    %v4194 = vld [vmem:[#allocation11 + $0x40] sm:$0xf]
    %v4195 = vld [vmem:[#allocation11 + $0x44] sm:$0xf]
    %v4196 = vld [vmem:[#allocation11 + $0x48] sm:$0xf]
    %v4197 = vld [vmem:[#allocation11 + $0x4c] sm:$0xf]
    %v4198 = vld [vmem:[#allocation11 + $0x50] sm:$0xf]
    %v4199 = vld [vmem:[#allocation11 + $0x54] sm:$0xf]
    %v4200 = vld [vmem:[#allocation11 + $0x58] sm:$0xf]
    %v4201 = vld [vmem:[#allocation11 + $0x5c] sm:$0xf]
    %v4202 = vld [vmem:[#allocation11 + $0x60] sm:$0xf]
    %v4203 = vld [vmem:[#allocation11 + $0x64] sm:$0xf]
    %v4204 = vld [vmem:[#allocation11 + $0x68] sm:$0xf]
    %v4205 = vld [vmem:[#allocation11 + $0x6c] sm:$0xf]
    %v4206 = vld [vmem:[#allocation11 + $0x70] sm:$0xf]
    %v4207 = vld [vmem:[#allocation11 + $0x74] sm:$0xf]
    %v4208 = vld [vmem:[#allocation11 + $0x78] sm:$0xf]
    %v4209 = vld [vmem:[#allocation11 + $0x7c] sm:$0xf]
    %v4210 = vld [vmem:[#allocation11 + $0x80] sm:$0xf]
    %v4211 = vld [vmem:[#allocation11 + $0x84] sm:$0xf]
    %v4212 = vld [vmem:[#allocation11 + $0x88] sm:$0xf]
    %v4213 = vld [vmem:[#allocation11 + $0x8c] sm:$0xf]
    %v4214 = vld [vmem:[#allocation11 + $0x90] sm:$0xf]
    %v4215 = vld [vmem:[#allocation11 + $0x94] sm:$0xf]
    %v4216 = vld [vmem:[#allocation11 + $0x98] sm:$0xf]
    %v4217 = vld [vmem:[#allocation11 + $0x9c] sm:$0xf]
    %v4218 = vld [vmem:[#allocation11 + $0xa0] sm:$0xf]
    %v4219 = vld [vmem:[#allocation11 + $0xa4] sm:$0xf]
    %v4220 = vld [vmem:[#allocation11 + $0xa8] sm:$0xf]
    %v4221 = vld [vmem:[#allocation11 + $0xac] sm:$0xf]
    %v4222 = vld [vmem:[#allocation11 + $0xb0] sm:$0xf]
    %v4223 = vld [vmem:[#allocation11 + $0xb4] sm:$0xf]
    %v4224 = vld [vmem:[#allocation11 + $0xb8] sm:$0xf]
    %v4225 = vld [vmem:[#allocation11 + $0xbc] sm:$0xf]
    %v4226 = vld [vmem:[#allocation11 + $0xc0] sm:$0xf]
    %v4227 = vld [vmem:[#allocation11 + $0xc4] sm:$0xf]
    %v4228 = vld [vmem:[#allocation11 + $0xc8] sm:$0xf]
    %v4229 = vld [vmem:[#allocation11 + $0xcc] sm:$0xf]
    %v4230 = vld [vmem:[#allocation11 + $0xd0] sm:$0xf]
    %v4231 = vld [vmem:[#allocation11 + $0xd4] sm:$0xf]
    %v4232 = vld [vmem:[#allocation11 + $0xd8] sm:$0xf]
    %v4233 = vld [vmem:[#allocation11 + $0xdc] sm:$0xf]
    %v4234 = vld [vmem:[#allocation11 + $0xe0] sm:$0xf]
    %v4235 = vld [vmem:[#allocation11 + $0xe4] sm:$0xf]
    %v4236 = vld [vmem:[#allocation11 + $0xe8] sm:$0xf]
    %v4237 = vld [vmem:[#allocation11 + $0xec] sm:$0xf]
    %v4238 = vld [vmem:[#allocation11 + $0xf0] sm:$0xf]
    %v4239 = vld [vmem:[#allocation11 + $0xf4] sm:$0xf]
    %v4240 = vld [vmem:[#allocation11 + $0xf8] sm:$0xf]
    %v4241 = vld [vmem:[#allocation11 + $0xfc] sm:$0xf]
    %v4242 = vld [vmem:[%s10] sm:$0x1]
    %v4244 = vlaneseq
    %v4245 = vshrl.u32 %v4244, 7
    %v4246 = vsub.s32 0, %v4245
    %v4247 = vrot.slane %v4242, %v4246
    %v4313 = vunpack.c.l.b16 %v4178
    %v4314 = vunpack.c.l.b16 %v4179
    %v4315 = vunpack.c.l.b16 %v4180
    %v4316 = vunpack.c.l.b16 %v4181
    %v4317 = vunpack.c.l.b16 %v4182
    %v4318 = vunpack.c.l.b16 %v4183
    %v4319 = vunpack.c.l.b16 %v4184
    %v4320 = vunpack.c.l.b16 %v4185
    %v4321 = vunpack.c.l.b16 %v4186
    %v4322 = vunpack.c.l.b16 %v4187
    %v4323 = vunpack.c.l.b16 %v4188
    %v4324 = vunpack.c.l.b16 %v4189
    %v4325 = vunpack.c.l.b16 %v4190
    %v4326 = vunpack.c.l.b16 %v4191
    %v4327 = vunpack.c.l.b16 %v4192
    %v4328 = vunpack.c.l.b16 %v4193
    %v4329 = vunpack.c.l.b16 %v4194
    %v4330 = vunpack.c.l.b16 %v4195
    %v4331 = vunpack.c.l.b16 %v4196
    %v4332 = vunpack.c.l.b16 %v4197
    %v4333 = vunpack.c.l.b16 %v4198
    %v4334 = vunpack.c.l.b16 %v4199
    %v4335 = vunpack.c.l.b16 %v4200
    %v4336 = vunpack.c.l.b16 %v4201
    %v4337 = vunpack.c.l.b16 %v4202
    %v4338 = vunpack.c.l.b16 %v4203
    %v4339 = vunpack.c.l.b16 %v4204
    %v4340 = vunpack.c.l.b16 %v4205
    %v4341 = vunpack.c.l.b16 %v4206
    %v4342 = vunpack.c.l.b16 %v4207
    %v4343 = vunpack.c.l.b16 %v4208
    %v4344 = vunpack.c.l.b16 %v4209
    %v4345 = vunpack.c.l.b16 %v4210
    %v4346 = vunpack.c.l.b16 %v4211
    %v4347 = vunpack.c.l.b16 %v4212
    %v4348 = vunpack.c.l.b16 %v4213
    %v4349 = vunpack.c.l.b16 %v4214
    %v4350 = vunpack.c.l.b16 %v4215
    %v4351 = vunpack.c.l.b16 %v4216
    %v4352 = vunpack.c.l.b16 %v4217
    %v4353 = vunpack.c.l.b16 %v4218
    %v4354 = vunpack.c.l.b16 %v4219
    %v4355 = vunpack.c.l.b16 %v4220
    %v4356 = vunpack.c.l.b16 %v4221
    %v4357 = vunpack.c.l.b16 %v4222
    %v4358 = vunpack.c.l.b16 %v4223
    %v4359 = vunpack.c.l.b16 %v4224
    %v4360 = vunpack.c.l.b16 %v4225
    %v4361 = vunpack.c.l.b16 %v4226
    %v4362 = vunpack.c.l.b16 %v4227
    %v4363 = vunpack.c.l.b16 %v4228
    %v4364 = vunpack.c.l.b16 %v4229
    %v4365 = vunpack.c.l.b16 %v4230
    %v4366 = vunpack.c.l.b16 %v4231
    %v4367 = vunpack.c.l.b16 %v4232
    %v4368 = vunpack.c.l.b16 %v4233
    %v4369 = vunpack.c.l.b16 %v4234
    %v4370 = vunpack.c.l.b16 %v4235
    %v4371 = vunpack.c.l.b16 %v4236
    %v4372 = vunpack.c.l.b16 %v4237
    %v4373 = vunpack.c.l.b16 %v4238
    %v4374 = vunpack.c.l.b16 %v4239
    %v4375 = vunpack.c.l.b16 %v4240
    %v4376 = vunpack.c.l.b16 %v4241
    %v4377 = vpack.c.b16 %v4314, %v4313
    %v4378 = vpack.c.b16 %v4316, %v4315
    %v4379 = vpack.c.b16 %v4318, %v4317
    %v4380 = vpack.c.b16 %v4320, %v4319
    %v4381 = vpack.c.b16 %v4322, %v4321
    %v4382 = vpack.c.b16 %v4324, %v4323
    %v4383 = vpack.c.b16 %v4326, %v4325
    %v4384 = vpack.c.b16 %v4328, %v4327
    %v4385 = vpack.c.b16 %v4330, %v4329
    %v4386 = vpack.c.b16 %v4332, %v4331
    %v4387 = vpack.c.b16 %v4334, %v4333
    %v4388 = vpack.c.b16 %v4336, %v4335
    %v4389 = vpack.c.b16 %v4338, %v4337
    %v4390 = vpack.c.b16 %v4340, %v4339
    %v4391 = vpack.c.b16 %v4342, %v4341
    %v4392 = vpack.c.b16 %v4344, %v4343
    %v4393 = vpack.c.b16 %v4346, %v4345
    %v4394 = vpack.c.b16 %v4348, %v4347
    %v4395 = vpack.c.b16 %v4350, %v4349
    %v4396 = vpack.c.b16 %v4352, %v4351
    %v4397 = vpack.c.b16 %v4354, %v4353
    %v4398 = vpack.c.b16 %v4356, %v4355
    %v4399 = vpack.c.b16 %v4358, %v4357
    %v4400 = vpack.c.b16 %v4360, %v4359
    %v4401 = vpack.c.b16 %v4362, %v4361
    %v4402 = vpack.c.b16 %v4364, %v4363
    %v4403 = vpack.c.b16 %v4366, %v4365
    %v4404 = vpack.c.b16 %v4368, %v4367
    %v4405 = vpack.c.b16 %v4370, %v4369
    %v4406 = vpack.c.b16 %v4372, %v4371
    %v4407 = vpack.c.b16 %v4374, %v4373
    %v4408 = vpack.c.b16 %v4376, %v4375
    %4441 = vmatprep.subr.bf16.mxu0 0
    %4442 = vmatpush1.bf16.msra.mxu0 %v4377
    %4443 = vmatprep.subr.bf16.mxu0 0
    %4444 = vmatpush1.bf16.msra.mxu0 %v4378
    %4445 = vmatprep.subr.bf16.mxu0 0
    %4446 = vmatpush1.bf16.msra.mxu0 %v4379
    %4447 = vmatprep.subr.bf16.mxu0 0
    %4448 = vmatpush1.bf16.msra.mxu0 %v4380
    %4449 = vmatprep.subr.bf16.mxu0 0
    %4450 = vmatpush1.bf16.msra.mxu0 %v4381
    %4451 = vmatprep.subr.bf16.mxu0 0
    %4452 = vmatpush1.bf16.msra.mxu0 %v4382
    %4453 = vmatprep.subr.bf16.mxu0 0
    %4454 = vmatpush1.bf16.msra.mxu0 %v4383
    %4455 = vmatprep.subr.bf16.mxu0 0
    %4456 = vmatpush1.bf16.msra.mxu0 %v4384
    %4457 = vmatprep.subr.bf16.mxu0 0
    %4458 = vmatpush1.bf16.msra.mxu0 %v4385
    %4459 = vmatprep.subr.bf16.mxu0 0
    %4460 = vmatpush1.bf16.msra.mxu0 %v4386
    %4461 = vmatprep.subr.bf16.mxu0 0
    %4462 = vmatpush1.bf16.msra.mxu0 %v4387
    %4463 = vmatprep.subr.bf16.mxu0 0
    %4464 = vmatpush1.bf16.msra.mxu0 %v4388
    %4465 = vmatprep.subr.bf16.mxu0 0
    %4466 = vmatpush1.bf16.msra.mxu0 %v4389
    %4467 = vmatprep.subr.bf16.mxu0 0
    %4468 = vmatpush1.bf16.msra.mxu0 %v4390
    %4469 = vmatprep.subr.bf16.mxu0 0
    %4470 = vmatpush1.bf16.msra.mxu0 %v4391
    %4471 = vmatprep.subr.bf16.mxu0 0
    %4472 = vmatpush1.bf16.msra.mxu0 %v4392
    %4473 = vmatprep.mubr.bf16.mxu0 %v4175
    %4474 = vmatmul.mubr.bf16.gmra.mrb[0].mxu0 %v4174
    %v4475 = vpop.f32.mrb[0].mxu0
    %v4476 = vadd.f32 %v4247, %v4475
    %v4477 = vpop.f32.mrb[0].mxu0
    %v4478 = vpop.f32.mrb[0].mxu0
    %v4479 = vpop.f32.mrb[0].mxu0
    %4480 = vdwg.mxu0
    %4481 = vmatprep.subr.bf16.mxu0 0
    %4482 = vmatpush1.bf16.msra.mxu0 %v4393
    %4483 = vmatprep.subr.bf16.mxu0 0
    %4484 = vmatpush1.bf16.msra.mxu0 %v4394
    %4485 = vmatprep.subr.bf16.mxu0 0
    %4486 = vmatpush1.bf16.msra.mxu0 %v4395
    %4487 = vmatprep.subr.bf16.mxu0 0
    %4488 = vmatpush1.bf16.msra.mxu0 %v4396
    %4489 = vmatprep.subr.bf16.mxu0 0
    %4490 = vmatpush1.bf16.msra.mxu0 %v4397
    %4491 = vmatprep.subr.bf16.mxu0 0
    %4492 = vmatpush1.bf16.msra.mxu0 %v4398
    %4493 = vmatprep.subr.bf16.mxu0 0
    %4494 = vmatpush1.bf16.msra.mxu0 %v4399
    %4495 = vmatprep.subr.bf16.mxu0 0
    %4496 = vmatpush1.bf16.msra.mxu0 %v4400
    %4497 = vmatprep.subr.bf16.mxu0 0
    %4498 = vmatpush1.bf16.msra.mxu0 %v4401
    %4499 = vmatprep.subr.bf16.mxu0 0
    %4500 = vmatpush1.bf16.msra.mxu0 %v4402
    %4501 = vmatprep.subr.bf16.mxu0 0
    %4502 = vmatpush1.bf16.msra.mxu0 %v4403
    %4503 = vmatprep.subr.bf16.mxu0 0
    %4504 = vmatpush1.bf16.msra.mxu0 %v4404
    %4505 = vmatprep.subr.bf16.mxu0 0
    %4506 = vmatpush1.bf16.msra.mxu0 %v4405
    %4507 = vmatprep.subr.bf16.mxu0 0
    %4508 = vmatpush1.bf16.msra.mxu0 %v4406
    %4509 = vmatprep.subr.bf16.mxu0 0
    %4510 = vmatpush1.bf16.msra.mxu0 %v4407
    %4511 = vmatprep.subr.bf16.mxu0 0
    %4512 = vmatpush1.bf16.msra.mxu0 %v4408
    %4513 = vmatprep.mubr.bf16.mxu0 %v4177
    %4514 = vmatmul.mubr.bf16.gmra.mrb[0].mxu0 %v4176
    %v4515 = vpop.f32.mrb[0].mxu0
    %v4516 = vadd.f32 %v4476, %v4515
    %v4517 = vpop.f32.mrb[0].mxu0
    %v4518 = vpop.f32.mrb[0].mxu0
    %v4519 = vpop.f32.mrb[0].mxu0
    %4520 = vdwg.mxu0
    %4521 = vst [vmem:[#allocation13] sm:$0xff] %v4516
    // Predicated region
    $region70: #{tpu_custom_call.1} parent=1 // pred_check
      _
    $region71: #{tpu_custom_call.1} parent=1 // pred_check_branch
      %4523 = sbr.rel (0) target = $region73
    $region72: #{tpu_custom_call.1} parent=1 // pred_region
      %s4525 = ssub.s32 128, 128
      %4526 = vsyncadd [#allocation4], %s4525
      %s4528 = sshll.u32 [#allocation13], 4
      %s4529 = int_to_ptr.vmem [resolvable:$true] %s4528
      %4531 = dma.vmem_to_hbm [thread:$0]  %s4529, 128, %s11, [#allocation4]
    $region73: #{tpu_custom_call.1} parent=1 // pred_fallthru
      _
    // Predicated region
    $region74: #{tpu_custom_call.1} parent=1 // pred_check
      _
    $region75: #{tpu_custom_call.1} parent=1 // pred_check_branch
      %4533 = sbr.rel (0) target = $region77
    $region76: #{tpu_custom_call.1} parent=1 // pred_region
      %4534 = dma.done [#allocation4], 128
    $region77: #{tpu_custom_call.1} parent=1 // pred_fallthru
      _
    %4535 = vsyncpa [#allocation3], 1
    %4536 = vsyncpa [#allocation6], 1
    %4537 = vsyncpa [#allocation9], 1
    %4538 = vsyncpa [#allocation12], 1
    %4539 = vsyncpa [#allocation4], 1

</llo_original>
